<compile_context>
chip_gen: v6e
topology: v6e:2x2x1
jax: 0.10.0
libtpu: 0.0.40
codegen_flags: <defaults>
</compile_context>

<pallas_src>
import numpy as np
import jax
import jax.numpy as jnp
from jax import lax
from jax.experimental import pallas as pl
from jax.experimental.pallas import tpu as pltpu

NACT = 3
_PAD = 8  # sublane-aligned top pad for the stack-shift scratch buffer


def shift_matrix(n):
    W_up = np.eye(n)
    for i in range(n - 1):
        W_up[i, :] = W_up[i + 1, :]
    W_up[n - 1, :] *= 0
    W_down = np.eye(n)
    for i in range(n - 1, 0, -1):
        W_down[i, :] = W_down[i - 1, :]
    W_down[0, :] *= 0
    return W_up, W_down


def _srnn_kernel(emb_ref, h0_ref, st0_ref, wx_ref, bx_ref, wh_ref, bh_ref,
                 rmat_ref, empty_ref,
                 out_ref, hfin_ref, stfin_ref, pad_ref):
    T = out_ref.shape[0]
    B, H = h0_ref.shape
    BSS, NSSE = st0_ref.shape
    SS = BSS // B

    # Loop-invariant weights / constants loaded once.
    wx = wx_ref[...]
    bx = bx_ref[...]
    wh = wh_ref[...]
    bh = bh_ref[...]
    rmat = rmat_ref[...]

    # Row-position masks built in-kernel (hoisted out of the time loop).
    row = lax.broadcasted_iota(jnp.int32, (BSS, NSSE), 0)
    pos = row % SS
    mask_top = jnp.where(pos == 0, 1.0, 0.0)
    mask_bot = jnp.where(pos == SS - 1, 1.0, 0.0)
    mask_mid = 1.0 - mask_top - mask_bot
    empty_term = mask_bot * empty_ref[...]          # loop-invariant bottom-row term

    # Zero-padded scratch used to materialize the +-1 row shifts with an
    # aligned store and two offset loads; rows outside [_PAD, _PAD+BSS) stay 0.
    pad_ref[...] = jnp.zeros_like(pad_ref)

    def dot(a, b):
        return jnp.dot(a, b, preferred_element_type=jnp.float32)

    def step(t, h, st):
        x = emb_ref[t]                               # (B, H) embedded token
        gx = dot(x, wx) + bx                         # (B, 3H)  x-side GRU gates
        gh = dot(h, wh) + bh                         # (B, 3H + 4*NS*SE)  all h-consumers

        # --- GRUCell (PyTorch gate order r, z, n) ---
        r = 1.0 / (1.0 + jnp.exp(-(gx[:, :H] + gh[:, :H])))
        z = 1.0 / (1.0 + jnp.exp(-(gx[:, H:2 * H] + gh[:, H:2 * H])))
        n = jnp.tanh(gx[:, 2 * H:3 * H] + r * gh[:, 2 * H:3 * H])
        cur_h = (1.0 - z) * n + z * h

        # --- stack controller (uses the OLD hidden, like the torch code) ---
        c = 3 * H
        s_push = gh[:, c:c + NSSE]
        s_pop = gh[:, c + NSSE:c + 2 * NSSE]
        s_noop = gh[:, c + 2 * NSSE:c + 3 * NSSE]
        push_vals = jnp.tanh(gh[:, c + 3 * NSSE:c + 4 * NSSE])

        m = jnp.maximum(jnp.maximum(s_push, s_pop), s_noop)
        e_push = jnp.exp(s_push - m)
        e_pop = jnp.exp(s_pop - m)
        e_noop = jnp.exp(s_noop - m)
        inv = pl.reciprocal(e_push + e_pop + e_noop, approx=True)   # EUP slot
        p_push = e_push * inv
        p_pop = e_pop * inv
        p_noop = e_noop * inv

        # Broadcast per-batch probabilities over the SS stack rows with tiny
        # (B*SS, B) @ (B, NS*SE) matmuls (rmat = kron(I_B, ones(SS,1))).
        pp = dot(rmat, p_push)
        pq = dot(rmat, p_pop)
        pn = dot(rmat, p_noop)
        top = dot(rmat, p_push * push_vals)

        # Stack shift via the zero-padded scratch (canonical W_down/W_up):
        pad_ref[_PAD:_PAD + BSS, :] = st
        down = pad_ref[_PAD - 1:_PAD - 1 + BSS, :]   # down[i] = st[i-1]
        up = pad_ref[_PAD + 1:_PAD + 1 + BSS, :]     # up[i]   = st[i+1]

        combined = pp * down + pq * up + pn * st
        new_st = mask_top * top + empty_term + mask_mid * combined

        out_ref[t] = cur_h            # VMEM write; single bulk HBM DMA at kernel end
        return cur_h, new_st

    h = h0_ref[...]
    st = st0_ref[...]
    if T <= 32:                        # static: fully unroll short sequences
        for t in range(T):
            h, st = step(t, h, st)
    else:                              # long sequences: in-kernel fori_loop
        h, st = lax.fori_loop(0, T, lambda t, c: step(t, *c), (h, st))

    hfin_ref[...] = h
    stfin_ref[...] = st


def encoder_srnn_forward(params, inputs, hidden, stacks):
    T, B = inputs.shape
    H = hidden.shape[1]
    NS, SS, SE = stacks.shape[1], stacks.shape[2], stacks.shape[3]
    NSSE = NS * SE
    assert SS >= 2, "kernel assumes stack_size >= 2 (distinct top/bottom rows)"
    f32 = jnp.float32

    # glue: embedding lookup (data-dependent gather) in plain JAX
    emb = params["embedding"][inputs].astype(f32)                    # (T, B, H)

    W_ih = params["gru_w_ih"].astype(f32)
    W_hh = params["gru_w_hh"].astype(f32)
    b_ih = params["gru_b_ih"].astype(f32)
    b_hh = params["gru_b_hh"].astype(f32)

    # x-side GRU weights fused into one (H, 3H) slab; r/z hidden biases folded
    # into the x-side bias (n-gate hidden bias stays on the h side for r*).
    w_x = W_ih.T                                                     # (H, 3H) [r|z|n]
    b_x = (b_ih + jnp.concatenate([b_hh[:2 * H], jnp.zeros((H,), f32)]))[None]

    # Everything fed by the OLD hidden fused into one (H, 3H + 4*NS*SE) slab:
    #   [ W_hr | W_hz | W_hn | act_push | act_pop | act_noop | hid2stack ]
    W_act = params["hid2act_w"].astype(f32)
    b_act = params["hid2act_b"].astype(f32)

    def rep_action(a):
        return (jnp.repeat(W_act[a::NACT].T, SE, axis=1),            # (H, NS*SE)
                jnp.repeat(b_act[a::NACT], SE))                      # (NS*SE,)

    wp_push, bp_push = rep_action(0)
    wp_pop, bp_pop = rep_action(1)
    wp_noop, bp_noop = rep_action(2)
    wst = params["hid2stack_w"].astype(f32).T                        # (H, NS*SE)
    bst = params["hid2stack_b"].astype(f32)

    w_h = jnp.concatenate([W_hh.T, wp_push, wp_pop, wp_noop, wst], axis=1)
    b_h = jnp.concatenate([jnp.zeros((2 * H,), f32), b_hh[2 * H:],
                           bp_push, bp_pop, bp_noop, bst])[None]

    rmat = jnp.kron(jnp.eye(B, dtype=f32), jnp.ones((SS, 1), f32))   # (B*SS, B)
    empty_rep = jnp.tile(params["empty_elem"].astype(f32), (1, NS))  # (1, NS*SE)

    st0 = jnp.transpose(stacks.astype(f32), (0, 2, 1, 3)).reshape(B * SS, NSSE)

    out_shape = (
        jax.ShapeDtypeStruct((T, B, H), f32),
        jax.ShapeDtypeStruct((B, H), f32),
        jax.ShapeDtypeStruct((B * SS, NSSE), f32),
    )

    outputs, h_fin, st_fin = pl.pallas_call(
        _srnn_kernel,
        out_shape=out_shape,
        scratch_shapes=[pltpu.VMEM((B * SS + 2 * _PAD, NSSE), f32)],
    )(emb, hidden.astype(f32), st0, w_x, b_x, w_h, b_h, rmat, empty_rep)

    stacks_fin = st_fin.reshape(B, SS, NS, SE).transpose(0, 2, 1, 3)
    return outputs, h_fin, stacks_fin


def init_params(key, input_size, hidden_size, nstack, stack_depth, stack_size,
                stack_elem_size):
    del stack_depth  # only used by the (unused-in-forward) read_stack layer
    ks = jax.random.split(key, 10)
    H = hidden_size

    def rn(k, shape, scale=0.1):
        return scale * jax.random.normal(k, shape, dtype=jnp.float32)

    W_up, W_down = shift_matrix(stack_size)
    return dict(
        embedding=rn(ks[0], (input_size, H), 1.0),
        gru_w_ih=rn(ks[1], (3 * H, H)),
        gru_w_hh=rn(ks[2], (3 * H, H)),
        gru_b_ih=rn(ks[3], (3 * H,)),
        gru_b_hh=rn(ks[4], (3 * H,)),
        hid2act_w=rn(ks[5], (nstack * NACT, H)),
        hid2act_b=rn(ks[6], (nstack * NACT,)),
        hid2stack_w=rn(ks[7], (nstack * stack_elem_size, H)),
        hid2stack_b=rn(ks[8], (nstack * stack_elem_size,)),
        empty_elem=rn(ks[9], (1, stack_elem_size), 1.0),
        W_up=jnp.asarray(W_up, jnp.float32),
        W_down=jnp.asarray(W_down, jnp.float32),
    )


def reference_forward(params, inputs, hidden, stacks):
    """Pure-JAX re-implementation of the torch forward (for validation)."""
    T, B = inputs.shape
    H = hidden.shape[1]
    NS, SS, SE = stacks.shape[1], stacks.shape[2], stacks.shape[3]
    emb = params["embedding"][inputs]
    W_ih, W_hh = params["gru_w_ih"], params["gru_w_hh"]
    b_ih, b_hh = params["gru_b_ih"], params["gru_b_hh"]
    h, st, outs = hidden, stacks, []
    for t in range(T):
        x = emb[t]
        gi = x @ W_ih.T + b_ih
        gh = h @ W_hh.T + b_hh
        r = 1.0 / (1.0 + jnp.exp(-(gi[:, :H] + gh[:, :H])))
        z = 1.0 / (1.0 + jnp.exp(-(gi[:, H:2 * H] + gh[:, H:2 * H])))
        n = jnp.tanh(gi[:, 2 * H:] + r * gh[:, 2 * H:])
        cur = (1.0 - z) * n + z * h

        act = (h @ params["hid2act_w"].T + params["hid2act_b"]).reshape(B, NS, NACT)
        act = jax.nn.softmax(act, axis=2)
        p_push, p_pop, p_noop = act[..., 0:1], act[..., 1:2], act[..., 2:3]
        pv = jnp.tanh(h @ params["hid2stack_w"].T + params["hid2stack_b"]).reshape(B, NS, SE)

        pp, pq, pn = p_push[..., None], p_pop[..., None], p_noop[..., None]
        new = (pp * jnp.einsum("ij,bnjk->bnik", params["W_down"], st)
               + pq * jnp.einsum("ij,bnjk->bnik", params["W_up"], st)
               + pn * st)
        new = new.at[:, :, 0, :].set(p_push * pv)
        new = new.at[:, :, SS - 1, :].set(
            jnp.broadcast_to(params["empty_elem"], (B, NS, SE)))
        st = new
        h = cur
        outs.append(h)
    return jnp.stack(outs), h, st


if __name__ == "__main__":
    V, H, NS, SD, SS, SE = 11, 32, 2, 2, 8, 16
    B, T = 2, 8

    key = jax.random.PRNGKey(0)
    kp, ki = jax.random.split(key)
    params = init_params(kp, V, H, NS, SD, SS, SE)

    inputs = jax.random.randint(ki, (T, B), 0, V, dtype=jnp.int32)
    hidden = jnp.zeros((B, H), jnp.float32)                       # init_hidden
    stacks = jnp.broadcast_to(params["empty_elem"],               # init_stack
                              (B, NS, SS, SE)).astype(jnp.float32)

    outs, h_fin, st_fin = encoder_srnn_forward(params, inputs, hidden, stacks)
    jax.block_until_ready((outs, h_fin, st_fin))

    ro, rh, rs = reference_forward(params, inputs, hidden, stacks)
    # hidden path is exact math (no approx ops): tight tolerance;
    # stack path uses the EUP approx reciprocal in the softmax: looser tolerance.
    assert np.allclose(np.asarray(outs), np.asarray(ro), atol=5e-4, rtol=5e-4)
    assert np.allclose(np.asarray(h_fin), np.asarray(rh), atol=5e-4, rtol=5e-4)
    assert np.allclose(np.asarray(st_fin), np.asarray(rs), atol=5e-3, rtol=5e-3)
    print("KERNEL_OK")
</pallas_src>

<mosaic_0001>
module attributes {stable_mosaic.version = 11 : i64} {
  func.func @_srnn_kernel(%arg0: memref<8x2x32xf32, #tpu.memory_space<vmem>>, %arg1: memref<2x32xf32, #tpu.memory_space<vmem>>, %arg2: memref<16x32xf32, #tpu.memory_space<vmem>>, %arg3: memref<32x96xf32, #tpu.memory_space<vmem>>, %arg4: memref<1x96xf32, #tpu.memory_space<vmem>>, %arg5: memref<32x224xf32, #tpu.memory_space<vmem>>, %arg6: memref<1x224xf32, #tpu.memory_space<vmem>>, %arg7: memref<16x2xf32, #tpu.memory_space<vmem>>, %arg8: memref<1x32xf32, #tpu.memory_space<vmem>>, %arg9: memref<8x2x32xf32, #tpu.memory_space<vmem>>, %arg10: memref<2x32xf32, #tpu.memory_space<vmem>>, %arg11: memref<16x32xf32, #tpu.memory_space<vmem>>, %arg12: memref<32x32xf32, #tpu.memory_space<vmem>>) attributes {dimension_semantics = [], scalar_prefetch = 0 : i64, scratch_operands = 1 : i64, tpu.core_type = #tpu.core_type<tc>} {
    %c0 = arith.constant 0 : index
    %c0_0 = arith.constant 0 : index
    %0 = vector.load %arg3[%c0, %c0_0] : memref<32x96xf32, #tpu.memory_space<vmem>>, vector<32x96xf32>
    %c0_1 = arith.constant 0 : index
    %c0_2 = arith.constant 0 : index
    %1 = vector.load %arg4[%c0_1, %c0_2] : memref<1x96xf32, #tpu.memory_space<vmem>>, vector<1x96xf32>
    %c0_3 = arith.constant 0 : index
    %c0_4 = arith.constant 0 : index
    %2 = vector.load %arg5[%c0_3, %c0_4] : memref<32x224xf32, #tpu.memory_space<vmem>>, vector<32x224xf32>
    %c0_5 = arith.constant 0 : index
    %c0_6 = arith.constant 0 : index
    %3 = vector.load %arg6[%c0_5, %c0_6] : memref<1x224xf32, #tpu.memory_space<vmem>>, vector<1x224xf32>
    %c0_7 = arith.constant 0 : index
    %c0_8 = arith.constant 0 : index
    %4 = vector.load %arg7[%c0_7, %c0_8] : memref<16x2xf32, #tpu.memory_space<vmem>>, vector<16x2xf32>
    %5 = tpu.iota {dimensions = array<i32: 0>} : vector<16x32xi32>
    %c8_i32 = arith.constant 8 : i32
    %c0_i32 = arith.constant 0 : i32
    %6 = arith.cmpi eq, %c8_i32, %c0_i32 : i32
    %c1_i32 = arith.constant 1 : i32
    %7 = arith.select %6, %c1_i32, %c8_i32 : i32
    %8 = vector.broadcast %7 : i32 to vector<16x32xi32>
    %9 = arith.remsi %5, %8 : vector<16x32xi32>
    %c0_i32_9 = arith.constant 0 : i32
    %10 = vector.broadcast %c0_i32_9 : i32 to vector<16x32xi32>
    %11 = arith.cmpi ne, %9, %10 : vector<16x32xi32>
    %c0_i32_10 = arith.constant 0 : i32
    %12 = vector.broadcast %c0_i32_10 : i32 to vector<16x32xi32>
    %13 = arith.cmpi slt, %9, %12 : vector<16x32xi32>
    %c0_i32_11 = arith.constant 0 : i32
    %14 = arith.cmpi slt, %7, %c0_i32_11 : i32
    %15 = vector.broadcast %14 : i1 to vector<16x32xi1>
    %16 = vector.broadcast %15 : vector<16x32xi1> to vector<16x32xi1>
    %17 = arith.xori %13, %16 : vector<16x32xi1>
    %18 = arith.andi %17, %11 : vector<16x32xi1>
    %19 = vector.broadcast %7 : i32 to vector<16x32xi32>
    %20 = arith.addi %9, %19 : vector<16x32xi32>
    %21 = arith.select %18, %20, %9 : vector<16x32xi1>, vector<16x32xi32>
    %c0_i32_12 = arith.constant 0 : i32
    %22 = vector.broadcast %c0_i32_12 : i32 to vector<16x32xi32>
    %23 = arith.cmpi eq, %21, %22 : vector<16x32xi32>
    %cst = arith.constant 1.000000e+00 : f32
    %cst_13 = arith.constant 0.000000e+00 : f32
    %24 = vector.broadcast %cst : f32 to vector<16x32xf32>
    %25 = vector.broadcast %cst_13 : f32 to vector<16x32xf32>
    %26 = arith.select %23, %24, %25 : vector<16x32xi1>, vector<16x32xf32>
    %c7_i32 = arith.constant 7 : i32
    %27 = vector.broadcast %c7_i32 : i32 to vector<16x32xi32>
    %28 = arith.cmpi eq, %21, %27 : vector<16x32xi32>
    %cst_14 = arith.constant 1.000000e+00 : f32
    %cst_15 = arith.constant 0.000000e+00 : f32
    %29 = vector.broadcast %cst_14 : f32 to vector<16x32xf32>
    %30 = vector.broadcast %cst_15 : f32 to vector<16x32xf32>
    %31 = arith.select %28, %29, %30 : vector<16x32xi1>, vector<16x32xf32>
    %cst_16 = arith.constant 1.000000e+00 : f32
    %32 = vector.broadcast %cst_16 : f32 to vector<16x32xf32>
    %33 = arith.subf %32, %26 : vector<16x32xf32>
    %34 = arith.subf %33, %31 : vector<16x32xf32>
    %c0_17 = arith.constant 0 : index
    %c0_18 = arith.constant 0 : index
    %35 = vector.load %arg8[%c0_17, %c0_18] : memref<1x32xf32, #tpu.memory_space<vmem>>, vector<1x32xf32>
    %36 = vector.broadcast %35 : vector<1x32xf32> to vector<16x32xf32>
    %37 = arith.mulf %31, %36 : vector<16x32xf32>
    %cst_19 = arith.constant 0.000000e+00 : f32
    %38 = vector.broadcast %cst_19 : f32 to vector<32x32xf32>
    %c0_20 = arith.constant 0 : index
    %c0_21 = arith.constant 0 : index
    %39 = vector.load %arg12[%c0_20, %c0_21] : memref<32x32xf32, #tpu.memory_space<vmem>>, vector<32x32xf32>
    tpu.vector_store %arg12[%c0_20, %c0_21], %38 {strides = array<i32>} : memref<32x32xf32, #tpu.memory_space<vmem>>, vector<32x32xf32>,
    %c0_22 = arith.constant 0 : index
    %c0_23 = arith.constant 0 : index
    %40 = vector.load %arg1[%c0_22, %c0_23] : memref<2x32xf32, #tpu.memory_space<vmem>>, vector<2x32xf32>
    %c0_24 = arith.constant 0 : index
    %c0_25 = arith.constant 0 : index
    %41 = vector.load %arg2[%c0_24, %c0_25] : memref<16x32xf32, #tpu.memory_space<vmem>>, vector<16x32xf32>
    %c0_26 = arith.constant 0 : index
    %c0_27 = arith.constant 0 : index
    %c0_28 = arith.constant 0 : index
    %42 = vector.load %arg0[%c0_26, %c0_27, %c0_28] : memref<8x2x32xf32, #tpu.memory_space<vmem>>, vector<1x2x32xf32>
    %43 = vector.shape_cast %42 : vector<1x2x32xf32> to vector<2x32xf32>
    %cst_29 = arith.constant dense<0.000000e+00> : vector<2x96xf32>
    %44 = tpu.matmul %43, %0, %cst_29 {dimension_numbers = #tpu.dot_dimension_numbers<[1], [0], [0], [1], [0, 0, 1, 1], [], []>} : vector<2x32xf32>, vector<32x96xf32>, vector<2x96xf32> -> vector<2x96xf32>
    %45 = vector.broadcast %1 : vector<1x96xf32> to vector<2x96xf32>
    %46 = arith.addf %44, %45 : vector<2x96xf32>
    %cst_30 = arith.constant dense<0.000000e+00> : vector<2x224xf32>
    %47 = tpu.matmul %40, %2, %cst_30 {dimension_numbers = #tpu.dot_dimension_numbers<[1], [0], [0], [1], [0, 0, 1, 1], [], []>} : vector<2x32xf32>, vector<32x224xf32>, vector<2x224xf32> -> vector<2x224xf32>
    %48 = vector.broadcast %3 : vector<1x224xf32> to vector<2x224xf32>
    %49 = arith.addf %47, %48 : vector<2x224xf32>
    %50 = vector.extract_strided_slice %46 {offsets = [0, 0], sizes = [2, 32], strides = [1, 1]} : vector<2x96xf32> to vector<2x32xf32>
    %51 = vector.extract_strided_slice %49 {offsets = [0, 0], sizes = [2, 32], strides = [1, 1]} : vector<2x224xf32> to vector<2x32xf32>
    %52 = arith.addf %50, %51 : vector<2x32xf32>
    %cst_31 = arith.constant 0.000000e+00 : f32
    %53 = vector.broadcast %cst_31 : f32 to vector<2x32xf32>
    %54 = arith.subf %53, %52 : vector<2x32xf32>
    %55 = math.exp %54 : vector<2x32xf32>
    %cst_32 = arith.constant 1.000000e+00 : f32
    %56 = vector.broadcast %cst_32 : f32 to vector<2x32xf32>
    %57 = arith.addf %56, %55 : vector<2x32xf32>
    %cst_33 = arith.constant 1.000000e+00 : f32
    %58 = vector.broadcast %cst_33 : f32 to vector<2x32xf32>
    %59 = arith.divf %58, %57 : vector<2x32xf32>
    %60 = vector.extract_strided_slice %46 {offsets = [0, 32], sizes = [2, 32], strides = [1, 1]} : vector<2x96xf32> to vector<2x32xf32>
    %61 = vector.extract_strided_slice %49 {offsets = [0, 32], sizes = [2, 32], strides = [1, 1]} : vector<2x224xf32> to vector<2x32xf32>
    %62 = arith.addf %60, %61 : vector<2x32xf32>
    %cst_34 = arith.constant 0.000000e+00 : f32
    %63 = vector.broadcast %cst_34 : f32 to vector<2x32xf32>
    %64 = arith.subf %63, %62 : vector<2x32xf32>
    %65 = math.exp %64 : vector<2x32xf32>
    %cst_35 = arith.constant 1.000000e+00 : f32
    %66 = vector.broadcast %cst_35 : f32 to vector<2x32xf32>
    %67 = arith.addf %66, %65 : vector<2x32xf32>
    %cst_36 = arith.constant 1.000000e+00 : f32
    %68 = vector.broadcast %cst_36 : f32 to vector<2x32xf32>
    %69 = arith.divf %68, %67 : vector<2x32xf32>
    %70 = vector.extract_strided_slice %46 {offsets = [0, 64], sizes = [2, 32], strides = [1, 1]} : vector<2x96xf32> to vector<2x32xf32>
    %71 = vector.extract_strided_slice %49 {offsets = [0, 64], sizes = [2, 32], strides = [1, 1]} : vector<2x224xf32> to vector<2x32xf32>
    %72 = arith.mulf %59, %71 : vector<2x32xf32>
    %73 = arith.addf %70, %72 : vector<2x32xf32>
    %74 = math.tanh %73 : vector<2x32xf32>
    %cst_37 = arith.constant 1.000000e+00 : f32
    %75 = vector.broadcast %cst_37 : f32 to vector<2x32xf32>
    %76 = arith.subf %75, %69 : vector<2x32xf32>
    %77 = arith.mulf %76, %74 : vector<2x32xf32>
    %78 = arith.mulf %69, %40 : vector<2x32xf32>
    %79 = arith.addf %77, %78 : vector<2x32xf32>
    %80 = vector.extract_strided_slice %49 {offsets = [0, 96], sizes = [2, 32], strides = [1, 1]} : vector<2x224xf32> to vector<2x32xf32>
    %81 = vector.extract_strided_slice %49 {offsets = [0, 128], sizes = [2, 32], strides = [1, 1]} : vector<2x224xf32> to vector<2x32xf32>
    %82 = vector.extract_strided_slice %49 {offsets = [0, 160], sizes = [2, 32], strides = [1, 1]} : vector<2x224xf32> to vector<2x32xf32>
    %83 = vector.extract_strided_slice %49 {offsets = [0, 192], sizes = [2, 32], strides = [1, 1]} : vector<2x224xf32> to vector<2x32xf32>
    %84 = math.tanh %83 : vector<2x32xf32>
    %85 = arith.maximumf %80, %81 : vector<2x32xf32>
    %86 = arith.maximumf %85, %82 : vector<2x32xf32>
    %87 = arith.subf %80, %86 : vector<2x32xf32>
    %88 = math.exp %87 : vector<2x32xf32>
    %89 = arith.subf %81, %86 : vector<2x32xf32>
    %90 = math.exp %89 : vector<2x32xf32>
    %91 = arith.subf %82, %86 : vector<2x32xf32>
    %92 = math.exp %91 : vector<2x32xf32>
    %93 = arith.addf %88, %90 : vector<2x32xf32>
    %94 = arith.addf %93, %92 : vector<2x32xf32>
    %95 = tpu.reciprocal %94 {approx = true} : vector<2x32xf32> -> vector<2x32xf32>
    %96 = arith.mulf %88, %95 : vector<2x32xf32>
    %97 = arith.mulf %90, %95 : vector<2x32xf32>
    %98 = arith.mulf %92, %95 : vector<2x32xf32>
    %cst_38 = arith.constant dense<0.000000e+00> : vector<16x32xf32>
    %99 = tpu.matmul %4, %96, %cst_38 {dimension_numbers = #tpu.dot_dimension_numbers<[1], [0], [0], [1], [0, 0, 1, 1], [], []>} : vector<16x2xf32>, vector<2x32xf32>, vector<16x32xf32> -> vector<16x32xf32>
    %cst_39 = arith.constant dense<0.000000e+00> : vector<16x32xf32>
    %100 = tpu.matmul %4, %97, %cst_39 {dimension_numbers = #tpu.dot_dimension_numbers<[1], [0], [0], [1], [0, 0, 1, 1], [], []>} : vector<16x2xf32>, vector<2x32xf32>, vector<16x32xf32> -> vector<16x32xf32>
    %cst_40 = arith.constant dense<0.000000e+00> : vector<16x32xf32>
    %101 = tpu.matmul %4, %98, %cst_40 {dimension_numbers = #tpu.dot_dimension_numbers<[1], [0], [0], [1], [0, 0, 1, 1], [], []>} : vector<16x2xf32>, vector<2x32xf32>, vector<16x32xf32> -> vector<16x32xf32>
    %102 = arith.mulf %96, %84 : vector<2x32xf32>
    %cst_41 = arith.constant dense<0.000000e+00> : vector<16x32xf32>
    %103 = tpu.matmul %4, %102, %cst_41 {dimension_numbers = #tpu.dot_dimension_numbers<[1], [0], [0], [1], [0, 0, 1, 1], [], []>} : vector<16x2xf32>, vector<2x32xf32>, vector<16x32xf32> -> vector<16x32xf32>
    %c8 = arith.constant 8 : index
    %c0_42 = arith.constant 0 : index
    %104 = vector.load %arg12[%c8, %c0_42] : memref<32x32xf32, #tpu.memory_space<vmem>>, vector<16x32xf32>
    tpu.vector_store %arg12[%c8, %c0_42], %41 {strides = array<i32>} : memref<32x32xf32, #tpu.memory_space<vmem>>, vector<16x32xf32>,
    %c7 = arith.constant 7 : index
    %c0_43 = arith.constant 0 : index
    %105 = vector.load %arg12[%c7, %c0_43] : memref<32x32xf32, #tpu.memory_space<vmem>>, vector<16x32xf32>
    %c9 = arith.constant 9 : index
    %c0_44 = arith.constant 0 : index
    %106 = vector.load %arg12[%c9, %c0_44] : memref<32x32xf32, #tpu.memory_space<vmem>>, vector<16x32xf32>
    %107 = arith.mulf %99, %105 : vector<16x32xf32>
    %108 = arith.mulf %100, %106 : vector<16x32xf32>
    %109 = arith.addf %107, %108 : vector<16x32xf32>
    %110 = arith.mulf %101, %41 : vector<16x32xf32>
    %111 = arith.addf %109, %110 : vector<16x32xf32>
    %112 = arith.mulf %26, %103 : vector<16x32xf32>
    %113 = arith.addf %112, %37 : vector<16x32xf32>
    %114 = arith.mulf %34, %111 : vector<16x32xf32>
    %115 = arith.addf %113, %114 : vector<16x32xf32>
    %c0_45 = arith.constant 0 : index
    %c0_46 = arith.constant 0 : index
    %c0_47 = arith.constant 0 : index
    %116 = vector.load %arg9[%c0_45, %c0_46, %c0_47] : memref<8x2x32xf32, #tpu.memory_space<vmem>>, vector<1x2x32xf32>
    %117 = vector.shape_cast %116 : vector<1x2x32xf32> to vector<2x32xf32>
    %118 = vector.shape_cast %79 : vector<2x32xf32> to vector<1x2x32xf32>
    tpu.vector_store %arg9[%c0_45, %c0_46, %c0_47], %118 {strides = array<i32>} : memref<8x2x32xf32, #tpu.memory_space<vmem>>, vector<1x2x32xf32>,
    %c1 = arith.constant 1 : index
    %c0_48 = arith.constant 0 : index
    %c0_49 = arith.constant 0 : index
    %119 = vector.load %arg0[%c1, %c0_48, %c0_49] : memref<8x2x32xf32, #tpu.memory_space<vmem>>, vector<1x2x32xf32>
    %120 = vector.shape_cast %119 : vector<1x2x32xf32> to vector<2x32xf32>
    %cst_50 = arith.constant dense<0.000000e+00> : vector<2x96xf32>
    %121 = tpu.matmul %120, %0, %cst_50 {dimension_numbers = #tpu.dot_dimension_numbers<[1], [0], [0], [1], [0, 0, 1, 1], [], []>} : vector<2x32xf32>, vector<32x96xf32>, vector<2x96xf32> -> vector<2x96xf32>
    %122 = vector.broadcast %1 : vector<1x96xf32> to vector<2x96xf32>
    %123 = arith.addf %121, %122 : vector<2x96xf32>
    %cst_51 = arith.constant dense<0.000000e+00> : vector<2x224xf32>
    %124 = tpu.matmul %79, %2, %cst_51 {dimension_numbers = #tpu.dot_dimension_numbers<[1], [0], [0], [1], [0, 0, 1, 1], [], []>} : vector<2x32xf32>, vector<32x224xf32>, vector<2x224xf32> -> vector<2x224xf32>
    %125 = vector.broadcast %3 : vector<1x224xf32> to vector<2x224xf32>
    %126 = arith.addf %124, %125 : vector<2x224xf32>
    %127 = vector.extract_strided_slice %123 {offsets = [0, 0], sizes = [2, 32], strides = [1, 1]} : vector<2x96xf32> to vector<2x32xf32>
    %128 = vector.extract_strided_slice %126 {offsets = [0, 0], sizes = [2, 32], strides = [1, 1]} : vector<2x224xf32> to vector<2x32xf32>
    %129 = arith.addf %127, %128 : vector<2x32xf32>
    %cst_52 = arith.constant 0.000000e+00 : f32
    %130 = vector.broadcast %cst_52 : f32 to vector<2x32xf32>
    %131 = arith.subf %130, %129 : vector<2x32xf32>
    %132 = math.exp %131 : vector<2x32xf32>
    %cst_53 = arith.constant 1.000000e+00 : f32
    %133 = vector.broadcast %cst_53 : f32 to vector<2x32xf32>
    %134 = arith.addf %133, %132 : vector<2x32xf32>
    %cst_54 = arith.constant 1.000000e+00 : f32
    %135 = vector.broadcast %cst_54 : f32 to vector<2x32xf32>
    %136 = arith.divf %135, %134 : vector<2x32xf32>
    %137 = vector.extract_strided_slice %123 {offsets = [0, 32], sizes = [2, 32], strides = [1, 1]} : vector<2x96xf32> to vector<2x32xf32>
    %138 = vector.extract_strided_slice %126 {offsets = [0, 32], sizes = [2, 32], strides = [1, 1]} : vector<2x224xf32> to vector<2x32xf32>
    %139 = arith.addf %137, %138 : vector<2x32xf32>
    %cst_55 = arith.constant 0.000000e+00 : f32
    %140 = vector.broadcast %cst_55 : f32 to vector<2x32xf32>
    %141 = arith.subf %140, %139 : vector<2x32xf32>
    %142 = math.exp %141 : vector<2x32xf32>
    %cst_56 = arith.constant 1.000000e+00 : f32
    %143 = vector.broadcast %cst_56 : f32 to vector<2x32xf32>
    %144 = arith.addf %143, %142 : vector<2x32xf32>
    %cst_57 = arith.constant 1.000000e+00 : f32
    %145 = vector.broadcast %cst_57 : f32 to vector<2x32xf32>
    %146 = arith.divf %145, %144 : vector<2x32xf32>
    %147 = vector.extract_strided_slice %123 {offsets = [0, 64], sizes = [2, 32], strides = [1, 1]} : vector<2x96xf32> to vector<2x32xf32>
    %148 = vector.extract_strided_slice %126 {offsets = [0, 64], sizes = [2, 32], strides = [1, 1]} : vector<2x224xf32> to vector<2x32xf32>
    %149 = arith.mulf %136, %148 : vector<2x32xf32>
    %150 = arith.addf %147, %149 : vector<2x32xf32>
    %151 = math.tanh %150 : vector<2x32xf32>
    %cst_58 = arith.constant 1.000000e+00 : f32
    %152 = vector.broadcast %cst_58 : f32 to vector<2x32xf32>
    %153 = arith.subf %152, %146 : vector<2x32xf32>
    %154 = arith.mulf %153, %151 : vector<2x32xf32>
    %155 = arith.mulf %146, %79 : vector<2x32xf32>
    %156 = arith.addf %154, %155 : vector<2x32xf32>
    %157 = vector.extract_strided_slice %126 {offsets = [0, 96], sizes = [2, 32], strides = [1, 1]} : vector<2x224xf32> to vector<2x32xf32>
    %158 = vector.extract_strided_slice %126 {offsets = [0, 128], sizes = [2, 32], strides = [1, 1]} : vector<2x224xf32> to vector<2x32xf32>
    %159 = vector.extract_strided_slice %126 {offsets = [0, 160], sizes = [2, 32], strides = [1, 1]} : vector<2x224xf32> to vector<2x32xf32>
    %160 = vector.extract_strided_slice %126 {offsets = [0, 192], sizes = [2, 32], strides = [1, 1]} : vector<2x224xf32> to vector<2x32xf32>
    %161 = math.tanh %160 : vector<2x32xf32>
    %162 = arith.maximumf %157, %158 : vector<2x32xf32>
    %163 = arith.maximumf %162, %159 : vector<2x32xf32>
    %164 = arith.subf %157, %163 : vector<2x32xf32>
    %165 = math.exp %164 : vector<2x32xf32>
    %166 = arith.subf %158, %163 : vector<2x32xf32>
    %167 = math.exp %166 : vector<2x32xf32>
    %168 = arith.subf %159, %163 : vector<2x32xf32>
    %169 = math.exp %168 : vector<2x32xf32>
    %170 = arith.addf %165, %167 : vector<2x32xf32>
    %171 = arith.addf %170, %169 : vector<2x32xf32>
    %172 = tpu.reciprocal %171 {approx = true} : vector<2x32xf32> -> vector<2x32xf32>
    %173 = arith.mulf %165, %172 : vector<2x32xf32>
    %174 = arith.mulf %167, %172 : vector<2x32xf32>
    %175 = arith.mulf %169, %172 : vector<2x32xf32>
    %cst_59 = arith.constant dense<0.000000e+00> : vector<16x32xf32>
    %176 = tpu.matmul %4, %173, %cst_59 {dimension_numbers = #tpu.dot_dimension_numbers<[1], [0], [0], [1], [0, 0, 1, 1], [], []>} : vector<16x2xf32>, vector<2x32xf32>, vector<16x32xf32> -> vector<16x32xf32>
    %cst_60 = arith.constant dense<0.000000e+00> : vector<16x32xf32>
    %177 = tpu.matmul %4, %174, %cst_60 {dimension_numbers = #tpu.dot_dimension_numbers<[1], [0], [0], [1], [0, 0, 1, 1], [], []>} : vector<16x2xf32>, vector<2x32xf32>, vector<16x32xf32> -> vector<16x32xf32>
    %cst_61 = arith.constant dense<0.000000e+00> : vector<16x32xf32>
    %178 = tpu.matmul %4, %175, %cst_61 {dimension_numbers = #tpu.dot_dimension_numbers<[1], [0], [0], [1], [0, 0, 1, 1], [], []>} : vector<16x2xf32>, vector<2x32xf32>, vector<16x32xf32> -> vector<16x32xf32>
    %179 = arith.mulf %173, %161 : vector<2x32xf32>
    %cst_62 = arith.constant dense<0.000000e+00> : vector<16x32xf32>
    %180 = tpu.matmul %4, %179, %cst_62 {dimension_numbers = #tpu.dot_dimension_numbers<[1], [0], [0], [1], [0, 0, 1, 1], [], []>} : vector<16x2xf32>, vector<2x32xf32>, vector<16x32xf32> -> vector<16x32xf32>
    %c8_63 = arith.constant 8 : index
    %c0_64 = arith.constant 0 : index
    %181 = vector.load %arg12[%c8_63, %c0_64] : memref<32x32xf32, #tpu.memory_space<vmem>>, vector<16x32xf32>
    tpu.vector_store %arg12[%c8_63, %c0_64], %115 {strides = array<i32>} : memref<32x32xf32, #tpu.memory_space<vmem>>, vector<16x32xf32>,
    %c7_65 = arith.constant 7 : index
    %c0_66 = arith.constant 0 : index
    %182 = vector.load %arg12[%c7_65, %c0_66] : memref<32x32xf32, #tpu.memory_space<vmem>>, vector<16x32xf32>
    %c9_67 = arith.constant 9 : index
    %c0_68 = arith.constant 0 : index
    %183 = vector.load %arg12[%c9_67, %c0_68] : memref<32x32xf32, #tpu.memory_space<vmem>>, vector<16x32xf32>
    %184 = arith.mulf %176, %182 : vector<16x32xf32>
    %185 = arith.mulf %177, %183 : vector<16x32xf32>
    %186 = arith.addf %184, %185 : vector<16x32xf32>
    %187 = arith.mulf %178, %115 : vector<16x32xf32>
    %188 = arith.addf %186, %187 : vector<16x32xf32>
    %189 = arith.mulf %26, %180 : vector<16x32xf32>
    %190 = arith.addf %189, %37 : vector<16x32xf32>
    %191 = arith.mulf %34, %188 : vector<16x32xf32>
    %192 = arith.addf %190, %191 : vector<16x32xf32>
    %c1_69 = arith.constant 1 : index
    %c0_70 = arith.constant 0 : index
    %c0_71 = arith.constant 0 : index
    %193 = vector.load %arg9[%c1_69, %c0_70, %c0_71] : memref<8x2x32xf32, #tpu.memory_space<vmem>>, vector<1x2x32xf32>
    %194 = vector.shape_cast %193 : vector<1x2x32xf32> to vector<2x32xf32>
    %195 = vector.shape_cast %156 : vector<2x32xf32> to vector<1x2x32xf32>
    tpu.vector_store %arg9[%c1_69, %c0_70, %c0_71], %195 {strides = array<i32>} : memref<8x2x32xf32, #tpu.memory_space<vmem>>, vector<1x2x32xf32>,
    %c2 = arith.constant 2 : index
    %c0_72 = arith.constant 0 : index
    %c0_73 = arith.constant 0 : index
    %196 = vector.load %arg0[%c2, %c0_72, %c0_73] : memref<8x2x32xf32, #tpu.memory_space<vmem>>, vector<1x2x32xf32>
    %197 = vector.shape_cast %196 : vector<1x2x32xf32> to vector<2x32xf32>
    %cst_74 = arith.constant dense<0.000000e+00> : vector<2x96xf32>
    %198 = tpu.matmul %197, %0, %cst_74 {dimension_numbers = #tpu.dot_dimension_numbers<[1], [0], [0], [1], [0, 0, 1, 1], [], []>} : vector<2x32xf32>, vector<32x96xf32>, vector<2x96xf32> -> vector<2x96xf32>
    %199 = vector.broadcast %1 : vector<1x96xf32> to vector<2x96xf32>
    %200 = arith.addf %198, %199 : vector<2x96xf32>
    %cst_75 = arith.constant dense<0.000000e+00> : vector<2x224xf32>
    %201 = tpu.matmul %156, %2, %cst_75 {dimension_numbers = #tpu.dot_dimension_numbers<[1], [0], [0], [1], [0, 0, 1, 1], [], []>} : vector<2x32xf32>, vector<32x224xf32>, vector<2x224xf32> -> vector<2x224xf32>
    %202 = vector.broadcast %3 : vector<1x224xf32> to vector<2x224xf32>
    %203 = arith.addf %201, %202 : vector<2x224xf32>
    %204 = vector.extract_strided_slice %200 {offsets = [0, 0], sizes = [2, 32], strides = [1, 1]} : vector<2x96xf32> to vector<2x32xf32>
    %205 = vector.extract_strided_slice %203 {offsets = [0, 0], sizes = [2, 32], strides = [1, 1]} : vector<2x224xf32> to vector<2x32xf32>
    %206 = arith.addf %204, %205 : vector<2x32xf32>
    %cst_76 = arith.constant 0.000000e+00 : f32
    %207 = vector.broadcast %cst_76 : f32 to vector<2x32xf32>
    %208 = arith.subf %207, %206 : vector<2x32xf32>
    %209 = math.exp %208 : vector<2x32xf32>
    %cst_77 = arith.constant 1.000000e+00 : f32
    %210 = vector.broadcast %cst_77 : f32 to vector<2x32xf32>
    %211 = arith.addf %210, %209 : vector<2x32xf32>
    %cst_78 = arith.constant 1.000000e+00 : f32
    %212 = vector.broadcast %cst_78 : f32 to vector<2x32xf32>
    %213 = arith.divf %212, %211 : vector<2x32xf32>
    %214 = vector.extract_strided_slice %200 {offsets = [0, 32], sizes = [2, 32], strides = [1, 1]} : vector<2x96xf32> to vector<2x32xf32>
    %215 = vector.extract_strided_slice %203 {offsets = [0, 32], sizes = [2, 32], strides = [1, 1]} : vector<2x224xf32> to vector<2x32xf32>
    %216 = arith.addf %214, %215 : vector<2x32xf32>
    %cst_79 = arith.constant 0.000000e+00 : f32
    %217 = vector.broadcast %cst_79 : f32 to vector<2x32xf32>
    %218 = arith.subf %217, %216 : vector<2x32xf32>
    %219 = math.exp %218 : vector<2x32xf32>
    %cst_80 = arith.constant 1.000000e+00 : f32
    %220 = vector.broadcast %cst_80 : f32 to vector<2x32xf32>
    %221 = arith.addf %220, %219 : vector<2x32xf32>
    %cst_81 = arith.constant 1.000000e+00 : f32
    %222 = vector.broadcast %cst_81 : f32 to vector<2x32xf32>
    %223 = arith.divf %222, %221 : vector<2x32xf32>
    %224 = vector.extract_strided_slice %200 {offsets = [0, 64], sizes = [2, 32], strides = [1, 1]} : vector<2x96xf32> to vector<2x32xf32>
    %225 = vector.extract_strided_slice %203 {offsets = [0, 64], sizes = [2, 32], strides = [1, 1]} : vector<2x224xf32> to vector<2x32xf32>
    %226 = arith.mulf %213, %225 : vector<2x32xf32>
    %227 = arith.addf %224, %226 : vector<2x32xf32>
    %228 = math.tanh %227 : vector<2x32xf32>
    %cst_82 = arith.constant 1.000000e+00 : f32
    %229 = vector.broadcast %cst_82 : f32 to vector<2x32xf32>
    %230 = arith.subf %229, %223 : vector<2x32xf32>
    %231 = arith.mulf %230, %228 : vector<2x32xf32>
    %232 = arith.mulf %223, %156 : vector<2x32xf32>
    %233 = arith.addf %231, %232 : vector<2x32xf32>
    %234 = vector.extract_strided_slice %203 {offsets = [0, 96], sizes = [2, 32], strides = [1, 1]} : vector<2x224xf32> to vector<2x32xf32>
    %235 = vector.extract_strided_slice %203 {offsets = [0, 128], sizes = [2, 32], strides = [1, 1]} : vector<2x224xf32> to vector<2x32xf32>
    %236 = vector.extract_strided_slice %203 {offsets = [0, 160], sizes = [2, 32], strides = [1, 1]} : vector<2x224xf32> to vector<2x32xf32>
    %237 = vector.extract_strided_slice %203 {offsets = [0, 192], sizes = [2, 32], strides = [1, 1]} : vector<2x224xf32> to vector<2x32xf32>
    %238 = math.tanh %237 : vector<2x32xf32>
    %239 = arith.maximumf %234, %235 : vector<2x32xf32>
    %240 = arith.maximumf %239, %236 : vector<2x32xf32>
    %241 = arith.subf %234, %240 : vector<2x32xf32>
    %242 = math.exp %241 : vector<2x32xf32>
    %243 = arith.subf %235, %240 : vector<2x32xf32>
    %244 = math.exp %243 : vector<2x32xf32>
    %245 = arith.subf %236, %240 : vector<2x32xf32>
    %246 = math.exp %245 : vector<2x32xf32>
    %247 = arith.addf %242, %244 : vector<2x32xf32>
    %248 = arith.addf %247, %246 : vector<2x32xf32>
    %249 = tpu.reciprocal %248 {approx = true} : vector<2x32xf32> -> vector<2x32xf32>
    %250 = arith.mulf %242, %249 : vector<2x32xf32>
    %251 = arith.mulf %244, %249 : vector<2x32xf32>
    %252 = arith.mulf %246, %249 : vector<2x32xf32>
    %cst_83 = arith.constant dense<0.000000e+00> : vector<16x32xf32>
    %253 = tpu.matmul %4, %250, %cst_83 {dimension_numbers = #tpu.dot_dimension_numbers<[1], [0], [0], [1], [0, 0, 1, 1], [], []>} : vector<16x2xf32>, vector<2x32xf32>, vector<16x32xf32> -> vector<16x32xf32>
    %cst_84 = arith.constant dense<0.000000e+00> : vector<16x32xf32>
    %254 = tpu.matmul %4, %251, %cst_84 {dimension_numbers = #tpu.dot_dimension_numbers<[1], [0], [0], [1], [0, 0, 1, 1], [], []>} : vector<16x2xf32>, vector<2x32xf32>, vector<16x32xf32> -> vector<16x32xf32>
    %cst_85 = arith.constant dense<0.000000e+00> : vector<16x32xf32>
    %255 = tpu.matmul %4, %252, %cst_85 {dimension_numbers = #tpu.dot_dimension_numbers<[1], [0], [0], [1], [0, 0, 1, 1], [], []>} : vector<16x2xf32>, vector<2x32xf32>, vector<16x32xf32> -> vector<16x32xf32>
    %256 = arith.mulf %250, %238 : vector<2x32xf32>
    %cst_86 = arith.constant dense<0.000000e+00> : vector<16x32xf32>
    %257 = tpu.matmul %4, %256, %cst_86 {dimension_numbers = #tpu.dot_dimension_numbers<[1], [0], [0], [1], [0, 0, 1, 1], [], []>} : vector<16x2xf32>, vector<2x32xf32>, vector<16x32xf32> -> vector<16x32xf32>
    %c8_87 = arith.constant 8 : index
    %c0_88 = arith.constant 0 : index
    %258 = vector.load %arg12[%c8_87, %c0_88] : memref<32x32xf32, #tpu.memory_space<vmem>>, vector<16x32xf32>
    tpu.vector_store %arg12[%c8_87, %c0_88], %192 {strides = array<i32>} : memref<32x32xf32, #tpu.memory_space<vmem>>, vector<16x32xf32>,
    %c7_89 = arith.constant 7 : index
    %c0_90 = arith.constant 0 : index
    %259 = vector.load %arg12[%c7_89, %c0_90] : memref<32x32xf32, #tpu.memory_space<vmem>>, vector<16x32xf32>
    %c9_91 = arith.constant 9 : index
    %c0_92 = arith.constant 0 : index
    %260 = vector.load %arg12[%c9_91, %c0_92] : memref<32x32xf32, #tpu.memory_space<vmem>>, vector<16x32xf32>
    %261 = arith.mulf %253, %259 : vector<16x32xf32>
    %262 = arith.mulf %254, %260 : vector<16x32xf32>
    %263 = arith.addf %261, %262 : vector<16x32xf32>
    %264 = arith.mulf %255, %192 : vector<16x32xf32>
    %265 = arith.addf %263, %264 : vector<16x32xf32>
    %266 = arith.mulf %26, %257 : vector<16x32xf32>
    %267 = arith.addf %266, %37 : vector<16x32xf32>
    %268 = arith.mulf %34, %265 : vector<16x32xf32>
    %269 = arith.addf %267, %268 : vector<16x32xf32>
    %c2_93 = arith.constant 2 : index
    %c0_94 = arith.constant 0 : index
    %c0_95 = arith.constant 0 : index
    %270 = vector.load %arg9[%c2_93, %c0_94, %c0_95] : memref<8x2x32xf32, #tpu.memory_space<vmem>>, vector<1x2x32xf32>
    %271 = vector.shape_cast %270 : vector<1x2x32xf32> to vector<2x32xf32>
    %272 = vector.shape_cast %233 : vector<2x32xf32> to vector<1x2x32xf32>
    tpu.vector_store %arg9[%c2_93, %c0_94, %c0_95], %272 {strides = array<i32>} : memref<8x2x32xf32, #tpu.memory_space<vmem>>, vector<1x2x32xf32>,
    %c3 = arith.constant 3 : index
    %c0_96 = arith.constant 0 : index
    %c0_97 = arith.constant 0 : index
    %273 = vector.load %arg0[%c3, %c0_96, %c0_97] : memref<8x2x32xf32, #tpu.memory_space<vmem>>, vector<1x2x32xf32>
    %274 = vector.shape_cast %273 : vector<1x2x32xf32> to vector<2x32xf32>
    %cst_98 = arith.constant dense<0.000000e+00> : vector<2x96xf32>
    %275 = tpu.matmul %274, %0, %cst_98 {dimension_numbers = #tpu.dot_dimension_numbers<[1], [0], [0], [1], [0, 0, 1, 1], [], []>} : vector<2x32xf32>, vector<32x96xf32>, vector<2x96xf32> -> vector<2x96xf32>
    %276 = vector.broadcast %1 : vector<1x96xf32> to vector<2x96xf32>
    %277 = arith.addf %275, %276 : vector<2x96xf32>
    %cst_99 = arith.constant dense<0.000000e+00> : vector<2x224xf32>
    %278 = tpu.matmul %233, %2, %cst_99 {dimension_numbers = #tpu.dot_dimension_numbers<[1], [0], [0], [1], [0, 0, 1, 1], [], []>} : vector<2x32xf32>, vector<32x224xf32>, vector<2x224xf32> -> vector<2x224xf32>
    %279 = vector.broadcast %3 : vector<1x224xf32> to vector<2x224xf32>
    %280 = arith.addf %278, %279 : vector<2x224xf32>
    %281 = vector.extract_strided_slice %277 {offsets = [0, 0], sizes = [2, 32], strides = [1, 1]} : vector<2x96xf32> to vector<2x32xf32>
    %282 = vector.extract_strided_slice %280 {offsets = [0, 0], sizes = [2, 32], strides = [1, 1]} : vector<2x224xf32> to vector<2x32xf32>
    %283 = arith.addf %281, %282 : vector<2x32xf32>
    %cst_100 = arith.constant 0.000000e+00 : f32
    %284 = vector.broadcast %cst_100 : f32 to vector<2x32xf32>
    %285 = arith.subf %284, %283 : vector<2x32xf32>
    %286 = math.exp %285 : vector<2x32xf32>
    %cst_101 = arith.constant 1.000000e+00 : f32
    %287 = vector.broadcast %cst_101 : f32 to vector<2x32xf32>
    %288 = arith.addf %287, %286 : vector<2x32xf32>
    %cst_102 = arith.constant 1.000000e+00 : f32
    %289 = vector.broadcast %cst_102 : f32 to vector<2x32xf32>
    %290 = arith.divf %289, %288 : vector<2x32xf32>
    %291 = vector.extract_strided_slice %277 {offsets = [0, 32], sizes = [2, 32], strides = [1, 1]} : vector<2x96xf32> to vector<2x32xf32>
    %292 = vector.extract_strided_slice %280 {offsets = [0, 32], sizes = [2, 32], strides = [1, 1]} : vector<2x224xf32> to vector<2x32xf32>
    %293 = arith.addf %291, %292 : vector<2x32xf32>
    %cst_103 = arith.constant 0.000000e+00 : f32
    %294 = vector.broadcast %cst_103 : f32 to vector<2x32xf32>
    %295 = arith.subf %294, %293 : vector<2x32xf32>
    %296 = math.exp %295 : vector<2x32xf32>
    %cst_104 = arith.constant 1.000000e+00 : f32
    %297 = vector.broadcast %cst_104 : f32 to vector<2x32xf32>
    %298 = arith.addf %297, %296 : vector<2x32xf32>
    %cst_105 = arith.constant 1.000000e+00 : f32
    %299 = vector.broadcast %cst_105 : f32 to vector<2x32xf32>
    %300 = arith.divf %299, %298 : vector<2x32xf32>
    %301 = vector.extract_strided_slice %277 {offsets = [0, 64], sizes = [2, 32], strides = [1, 1]} : vector<2x96xf32> to vector<2x32xf32>
    %302 = vector.extract_strided_slice %280 {offsets = [0, 64], sizes = [2, 32], strides = [1, 1]} : vector<2x224xf32> to vector<2x32xf32>
    %303 = arith.mulf %290, %302 : vector<2x32xf32>
    %304 = arith.addf %301, %303 : vector<2x32xf32>
    %305 = math.tanh %304 : vector<2x32xf32>
    %cst_106 = arith.constant 1.000000e+00 : f32
    %306 = vector.broadcast %cst_106 : f32 to vector<2x32xf32>
    %307 = arith.subf %306, %300 : vector<2x32xf32>
    %308 = arith.mulf %307, %305 : vector<2x32xf32>
    %309 = arith.mulf %300, %233 : vector<2x32xf32>
    %310 = arith.addf %308, %309 : vector<2x32xf32>
    %311 = vector.extract_strided_slice %280 {offsets = [0, 96], sizes = [2, 32], strides = [1, 1]} : vector<2x224xf32> to vector<2x32xf32>
    %312 = vector.extract_strided_slice %280 {offsets = [0, 128], sizes = [2, 32], strides = [1, 1]} : vector<2x224xf32> to vector<2x32xf32>
    %313 = vector.extract_strided_slice %280 {offsets = [0, 160], sizes = [2, 32], strides = [1, 1]} : vector<2x224xf32> to vector<2x32xf32>
    %314 = vector.extract_strided_slice %280 {offsets = [0, 192], sizes = [2, 32], strides = [1, 1]} : vector<2x224xf32> to vector<2x32xf32>
    %315 = math.tanh %314 : vector<2x32xf32>
    %316 = arith.maximumf %311, %312 : vector<2x32xf32>
    %317 = arith.maximumf %316, %313 : vector<2x32xf32>
    %318 = arith.subf %311, %317 : vector<2x32xf32>
    %319 = math.exp %318 : vector<2x32xf32>
    %320 = arith.subf %312, %317 : vector<2x32xf32>
    %321 = math.exp %320 : vector<2x32xf32>
    %322 = arith.subf %313, %317 : vector<2x32xf32>
    %323 = math.exp %322 : vector<2x32xf32>
    %324 = arith.addf %319, %321 : vector<2x32xf32>
    %325 = arith.addf %324, %323 : vector<2x32xf32>
    %326 = tpu.reciprocal %325 {approx = true} : vector<2x32xf32> -> vector<2x32xf32>
    %327 = arith.mulf %319, %326 : vector<2x32xf32>
    %328 = arith.mulf %321, %326 : vector<2x32xf32>
    %329 = arith.mulf %323, %326 : vector<2x32xf32>
    %cst_107 = arith.constant dense<0.000000e+00> : vector<16x32xf32>
    %330 = tpu.matmul %4, %327, %cst_107 {dimension_numbers = #tpu.dot_dimension_numbers<[1], [0], [0], [1], [0, 0, 1, 1], [], []>} : vector<16x2xf32>, vector<2x32xf32>, vector<16x32xf32> -> vector<16x32xf32>
    %cst_108 = arith.constant dense<0.000000e+00> : vector<16x32xf32>
    %331 = tpu.matmul %4, %328, %cst_108 {dimension_numbers = #tpu.dot_dimension_numbers<[1], [0], [0], [1], [0, 0, 1, 1], [], []>} : vector<16x2xf32>, vector<2x32xf32>, vector<16x32xf32> -> vector<16x32xf32>
    %cst_109 = arith.constant dense<0.000000e+00> : vector<16x32xf32>
    %332 = tpu.matmul %4, %329, %cst_109 {dimension_numbers = #tpu.dot_dimension_numbers<[1], [0], [0], [1], [0, 0, 1, 1], [], []>} : vector<16x2xf32>, vector<2x32xf32>, vector<16x32xf32> -> vector<16x32xf32>
    %333 = arith.mulf %327, %315 : vector<2x32xf32>
    %cst_110 = arith.constant dense<0.000000e+00> : vector<16x32xf32>
    %334 = tpu.matmul %4, %333, %cst_110 {dimension_numbers = #tpu.dot_dimension_numbers<[1], [0], [0], [1], [0, 0, 1, 1], [], []>} : vector<16x2xf32>, vector<2x32xf32>, vector<16x32xf32> -> vector<16x32xf32>
    %c8_111 = arith.constant 8 : index
    %c0_112 = arith.constant 0 : index
    %335 = vector.load %arg12[%c8_111, %c0_112] : memref<32x32xf32, #tpu.memory_space<vmem>>, vector<16x32xf32>
    tpu.vector_store %arg12[%c8_111, %c0_112], %269 {strides = array<i32>} : memref<32x32xf32, #tpu.memory_space<vmem>>, vector<16x32xf32>,
    %c7_113 = arith.constant 7 : index
    %c0_114 = arith.constant 0 : index
    %336 = vector.load %arg12[%c7_113, %c0_114] : memref<32x32xf32, #tpu.memory_space<vmem>>, vector<16x32xf32>
    %c9_115 = arith.constant 9 : index
    %c0_116 = arith.constant 0 : index
    %337 = vector.load %arg12[%c9_115, %c0_116] : memref<32x32xf32, #tpu.memory_space<vmem>>, vector<16x32xf32>
    %338 = arith.mulf %330, %336 : vector<16x32xf32>
    %339 = arith.mulf %331, %337 : vector<16x32xf32>
    %340 = arith.addf %338, %339 : vector<16x32xf32>
    %341 = arith.mulf %332, %269 : vector<16x32xf32>
    %342 = arith.addf %340, %341 : vector<16x32xf32>
    %343 = arith.mulf %26, %334 : vector<16x32xf32>
    %344 = arith.addf %343, %37 : vector<16x32xf32>
    %345 = arith.mulf %34, %342 : vector<16x32xf32>
    %346 = arith.addf %344, %345 : vector<16x32xf32>
    %c3_117 = arith.constant 3 : index
    %c0_118 = arith.constant 0 : index
    %c0_119 = arith.constant 0 : index
    %347 = vector.load %arg9[%c3_117, %c0_118, %c0_119] : memref<8x2x32xf32, #tpu.memory_space<vmem>>, vector<1x2x32xf32>
    %348 = vector.shape_cast %347 : vector<1x2x32xf32> to vector<2x32xf32>
    %349 = vector.shape_cast %310 : vector<2x32xf32> to vector<1x2x32xf32>
    tpu.vector_store %arg9[%c3_117, %c0_118, %c0_119], %349 {strides = array<i32>} : memref<8x2x32xf32, #tpu.memory_space<vmem>>, vector<1x2x32xf32>,
    %c4 = arith.constant 4 : index
    %c0_120 = arith.constant 0 : index
    %c0_121 = arith.constant 0 : index
    %350 = vector.load %arg0[%c4, %c0_120, %c0_121] : memref<8x2x32xf32, #tpu.memory_space<vmem>>, vector<1x2x32xf32>
    %351 = vector.shape_cast %350 : vector<1x2x32xf32> to vector<2x32xf32>
    %cst_122 = arith.constant dense<0.000000e+00> : vector<2x96xf32>
    %352 = tpu.matmul %351, %0, %cst_122 {dimension_numbers = #tpu.dot_dimension_numbers<[1], [0], [0], [1], [0, 0, 1, 1], [], []>} : vector<2x32xf32>, vector<32x96xf32>, vector<2x96xf32> -> vector<2x96xf32>
    %353 = vector.broadcast %1 : vector<1x96xf32> to vector<2x96xf32>
    %354 = arith.addf %352, %353 : vector<2x96xf32>
    %cst_123 = arith.constant dense<0.000000e+00> : vector<2x224xf32>
    %355 = tpu.matmul %310, %2, %cst_123 {dimension_numbers = #tpu.dot_dimension_numbers<[1], [0], [0], [1], [0, 0, 1, 1], [], []>} : vector<2x32xf32>, vector<32x224xf32>, vector<2x224xf32> -> vector<2x224xf32>
    %356 = vector.broadcast %3 : vector<1x224xf32> to vector<2x224xf32>
    %357 = arith.addf %355, %356 : vector<2x224xf32>
    %358 = vector.extract_strided_slice %354 {offsets = [0, 0], sizes = [2, 32], strides = [1, 1]} : vector<2x96xf32> to vector<2x32xf32>
    %359 = vector.extract_strided_slice %357 {offsets = [0, 0], sizes = [2, 32], strides = [1, 1]} : vector<2x224xf32> to vector<2x32xf32>
    %360 = arith.addf %358, %359 : vector<2x32xf32>
    %cst_124 = arith.constant 0.000000e+00 : f32
    %361 = vector.broadcast %cst_124 : f32 to vector<2x32xf32>
    %362 = arith.subf %361, %360 : vector<2x32xf32>
    %363 = math.exp %362 : vector<2x32xf32>
    %cst_125 = arith.constant 1.000000e+00 : f32
    %364 = vector.broadcast %cst_125 : f32 to vector<2x32xf32>
    %365 = arith.addf %364, %363 : vector<2x32xf32>
    %cst_126 = arith.constant 1.000000e+00 : f32
    %366 = vector.broadcast %cst_126 : f32 to vector<2x32xf32>
    %367 = arith.divf %366, %365 : vector<2x32xf32>
    %368 = vector.extract_strided_slice %354 {offsets = [0, 32], sizes = [2, 32], strides = [1, 1]} : vector<2x96xf32> to vector<2x32xf32>
    %369 = vector.extract_strided_slice %357 {offsets = [0, 32], sizes = [2, 32], strides = [1, 1]} : vector<2x224xf32> to vector<2x32xf32>
    %370 = arith.addf %368, %369 : vector<2x32xf32>
    %cst_127 = arith.constant 0.000000e+00 : f32
    %371 = vector.broadcast %cst_127 : f32 to vector<2x32xf32>
    %372 = arith.subf %371, %370 : vector<2x32xf32>
    %373 = math.exp %372 : vector<2x32xf32>
    %cst_128 = arith.constant 1.000000e+00 : f32
    %374 = vector.broadcast %cst_128 : f32 to vector<2x32xf32>
    %375 = arith.addf %374, %373 : vector<2x32xf32>
    %cst_129 = arith.constant 1.000000e+00 : f32
    %376 = vector.broadcast %cst_129 : f32 to vector<2x32xf32>
    %377 = arith.divf %376, %375 : vector<2x32xf32>
    %378 = vector.extract_strided_slice %354 {offsets = [0, 64], sizes = [2, 32], strides = [1, 1]} : vector<2x96xf32> to vector<2x32xf32>
    %379 = vector.extract_strided_slice %357 {offsets = [0, 64], sizes = [2, 32], strides = [1, 1]} : vector<2x224xf32> to vector<2x32xf32>
    %380 = arith.mulf %367, %379 : vector<2x32xf32>
    %381 = arith.addf %378, %380 : vector<2x32xf32>
    %382 = math.tanh %381 : vector<2x32xf32>
    %cst_130 = arith.constant 1.000000e+00 : f32
    %383 = vector.broadcast %cst_130 : f32 to vector<2x32xf32>
    %384 = arith.subf %383, %377 : vector<2x32xf32>
    %385 = arith.mulf %384, %382 : vector<2x32xf32>
    %386 = arith.mulf %377, %310 : vector<2x32xf32>
    %387 = arith.addf %385, %386 : vector<2x32xf32>
    %388 = vector.extract_strided_slice %357 {offsets = [0, 96], sizes = [2, 32], strides = [1, 1]} : vector<2x224xf32> to vector<2x32xf32>
    %389 = vector.extract_strided_slice %357 {offsets = [0, 128], sizes = [2, 32], strides = [1, 1]} : vector<2x224xf32> to vector<2x32xf32>
    %390 = vector.extract_strided_slice %357 {offsets = [0, 160], sizes = [2, 32], strides = [1, 1]} : vector<2x224xf32> to vector<2x32xf32>
    %391 = vector.extract_strided_slice %357 {offsets = [0, 192], sizes = [2, 32], strides = [1, 1]} : vector<2x224xf32> to vector<2x32xf32>
    %392 = math.tanh %391 : vector<2x32xf32>
    %393 = arith.maximumf %388, %389 : vector<2x32xf32>
    %394 = arith.maximumf %393, %390 : vector<2x32xf32>
    %395 = arith.subf %388, %394 : vector<2x32xf32>
    %396 = math.exp %395 : vector<2x32xf32>
    %397 = arith.subf %389, %394 : vector<2x32xf32>
    %398 = math.exp %397 : vector<2x32xf32>
    %399 = arith.subf %390, %394 : vector<2x32xf32>
    %400 = math.exp %399 : vector<2x32xf32>
    %401 = arith.addf %396, %398 : vector<2x32xf32>
    %402 = arith.addf %401, %400 : vector<2x32xf32>
    %403 = tpu.reciprocal %402 {approx = true} : vector<2x32xf32> -> vector<2x32xf32>
    %404 = arith.mulf %396, %403 : vector<2x32xf32>
    %405 = arith.mulf %398, %403 : vector<2x32xf32>
    %406 = arith.mulf %400, %403 : vector<2x32xf32>
    %cst_131 = arith.constant dense<0.000000e+00> : vector<16x32xf32>
    %407 = tpu.matmul %4, %404, %cst_131 {dimension_numbers = #tpu.dot_dimension_numbers<[1], [0], [0], [1], [0, 0, 1, 1], [], []>} : vector<16x2xf32>, vector<2x32xf32>, vector<16x32xf32> -> vector<16x32xf32>
    %cst_132 = arith.constant dense<0.000000e+00> : vector<16x32xf32>
    %408 = tpu.matmul %4, %405, %cst_132 {dimension_numbers = #tpu.dot_dimension_numbers<[1], [0], [0], [1], [0, 0, 1, 1], [], []>} : vector<16x2xf32>, vector<2x32xf32>, vector<16x32xf32> -> vector<16x32xf32>
    %cst_133 = arith.constant dense<0.000000e+00> : vector<16x32xf32>
    %409 = tpu.matmul %4, %406, %cst_133 {dimension_numbers = #tpu.dot_dimension_numbers<[1], [0], [0], [1], [0, 0, 1, 1], [], []>} : vector<16x2xf32>, vector<2x32xf32>, vector<16x32xf32> -> vector<16x32xf32>
    %410 = arith.mulf %404, %392 : vector<2x32xf32>
    %cst_134 = arith.constant dense<0.000000e+00> : vector<16x32xf32>
    %411 = tpu.matmul %4, %410, %cst_134 {dimension_numbers = #tpu.dot_dimension_numbers<[1], [0], [0], [1], [0, 0, 1, 1], [], []>} : vector<16x2xf32>, vector<2x32xf32>, vector<16x32xf32> -> vector<16x32xf32>
    %c8_135 = arith.constant 8 : index
    %c0_136 = arith.constant 0 : index
    %412 = vector.load %arg12[%c8_135, %c0_136] : memref<32x32xf32, #tpu.memory_space<vmem>>, vector<16x32xf32>
    tpu.vector_store %arg12[%c8_135, %c0_136], %346 {strides = array<i32>} : memref<32x32xf32, #tpu.memory_space<vmem>>, vector<16x32xf32>,
    %c7_137 = arith.constant 7 : index
    %c0_138 = arith.constant 0 : index
    %413 = vector.load %arg12[%c7_137, %c0_138] : memref<32x32xf32, #tpu.memory_space<vmem>>, vector<16x32xf32>
    %c9_139 = arith.constant 9 : index
    %c0_140 = arith.constant 0 : index
    %414 = vector.load %arg12[%c9_139, %c0_140] : memref<32x32xf32, #tpu.memory_space<vmem>>, vector<16x32xf32>
    %415 = arith.mulf %407, %413 : vector<16x32xf32>
    %416 = arith.mulf %408, %414 : vector<16x32xf32>
    %417 = arith.addf %415, %416 : vector<16x32xf32>
    %418 = arith.mulf %409, %346 : vector<16x32xf32>
    %419 = arith.addf %417, %418 : vector<16x32xf32>
    %420 = arith.mulf %26, %411 : vector<16x32xf32>
    %421 = arith.addf %420, %37 : vector<16x32xf32>
    %422 = arith.mulf %34, %419 : vector<16x32xf32>
    %423 = arith.addf %421, %422 : vector<16x32xf32>
    %c4_141 = arith.constant 4 : index
    %c0_142 = arith.constant 0 : index
    %c0_143 = arith.constant 0 : index
    %424 = vector.load %arg9[%c4_141, %c0_142, %c0_143] : memref<8x2x32xf32, #tpu.memory_space<vmem>>, vector<1x2x32xf32>
    %425 = vector.shape_cast %424 : vector<1x2x32xf32> to vector<2x32xf32>
    %426 = vector.shape_cast %387 : vector<2x32xf32> to vector<1x2x32xf32>
    tpu.vector_store %arg9[%c4_141, %c0_142, %c0_143], %426 {strides = array<i32>} : memref<8x2x32xf32, #tpu.memory_space<vmem>>, vector<1x2x32xf32>,
    %c5 = arith.constant 5 : index
    %c0_144 = arith.constant 0 : index
    %c0_145 = arith.constant 0 : index
    %427 = vector.load %arg0[%c5, %c0_144, %c0_145] : memref<8x2x32xf32, #tpu.memory_space<vmem>>, vector<1x2x32xf32>
    %428 = vector.shape_cast %427 : vector<1x2x32xf32> to vector<2x32xf32>
    %cst_146 = arith.constant dense<0.000000e+00> : vector<2x96xf32>
    %429 = tpu.matmul %428, %0, %cst_146 {dimension_numbers = #tpu.dot_dimension_numbers<[1], [0], [0], [1], [0, 0, 1, 1], [], []>} : vector<2x32xf32>, vector<32x96xf32>, vector<2x96xf32> -> vector<2x96xf32>
    %430 = vector.broadcast %1 : vector<1x96xf32> to vector<2x96xf32>
    %431 = arith.addf %429, %430 : vector<2x96xf32>
    %cst_147 = arith.constant dense<0.000000e+00> : vector<2x224xf32>
    %432 = tpu.matmul %387, %2, %cst_147 {dimension_numbers = #tpu.dot_dimension_numbers<[1], [0], [0], [1], [0, 0, 1, 1], [], []>} : vector<2x32xf32>, vector<32x224xf32>, vector<2x224xf32> -> vector<2x224xf32>
    %433 = vector.broadcast %3 : vector<1x224xf32> to vector<2x224xf32>
    %434 = arith.addf %432, %433 : vector<2x224xf32>
    %435 = vector.extract_strided_slice %431 {offsets = [0, 0], sizes = [2, 32], strides = [1, 1]} : vector<2x96xf32> to vector<2x32xf32>
    %436 = vector.extract_strided_slice %434 {offsets = [0, 0], sizes = [2, 32], strides = [1, 1]} : vector<2x224xf32> to vector<2x32xf32>
    %437 = arith.addf %435, %436 : vector<2x32xf32>
    %cst_148 = arith.constant 0.000000e+00 : f32
    %438 = vector.broadcast %cst_148 : f32 to vector<2x32xf32>
    %439 = arith.subf %438, %437 : vector<2x32xf32>
    %440 = math.exp %439 : vector<2x32xf32>
    %cst_149 = arith.constant 1.000000e+00 : f32
    %441 = vector.broadcast %cst_149 : f32 to vector<2x32xf32>
    %442 = arith.addf %441, %440 : vector<2x32xf32>
    %cst_150 = arith.constant 1.000000e+00 : f32
    %443 = vector.broadcast %cst_150 : f32 to vector<2x32xf32>
    %444 = arith.divf %443, %442 : vector<2x32xf32>
    %445 = vector.extract_strided_slice %431 {offsets = [0, 32], sizes = [2, 32], strides = [1, 1]} : vector<2x96xf32> to vector<2x32xf32>
    %446 = vector.extract_strided_slice %434 {offsets = [0, 32], sizes = [2, 32], strides = [1, 1]} : vector<2x224xf32> to vector<2x32xf32>
    %447 = arith.addf %445, %446 : vector<2x32xf32>
    %cst_151 = arith.constant 0.000000e+00 : f32
    %448 = vector.broadcast %cst_151 : f32 to vector<2x32xf32>
    %449 = arith.subf %448, %447 : vector<2x32xf32>
    %450 = math.exp %449 : vector<2x32xf32>
    %cst_152 = arith.constant 1.000000e+00 : f32
    %451 = vector.broadcast %cst_152 : f32 to vector<2x32xf32>
    %452 = arith.addf %451, %450 : vector<2x32xf32>
    %cst_153 = arith.constant 1.000000e+00 : f32
    %453 = vector.broadcast %cst_153 : f32 to vector<2x32xf32>
    %454 = arith.divf %453, %452 : vector<2x32xf32>
    %455 = vector.extract_strided_slice %431 {offsets = [0, 64], sizes = [2, 32], strides = [1, 1]} : vector<2x96xf32> to vector<2x32xf32>
    %456 = vector.extract_strided_slice %434 {offsets = [0, 64], sizes = [2, 32], strides = [1, 1]} : vector<2x224xf32> to vector<2x32xf32>
    %457 = arith.mulf %444, %456 : vector<2x32xf32>
    %458 = arith.addf %455, %457 : vector<2x32xf32>
    %459 = math.tanh %458 : vector<2x32xf32>
    %cst_154 = arith.constant 1.000000e+00 : f32
    %460 = vector.broadcast %cst_154 : f32 to vector<2x32xf32>
    %461 = arith.subf %460, %454 : vector<2x32xf32>
    %462 = arith.mulf %461, %459 : vector<2x32xf32>
    %463 = arith.mulf %454, %387 : vector<2x32xf32>
    %464 = arith.addf %462, %463 : vector<2x32xf32>
    %465 = vector.extract_strided_slice %434 {offsets = [0, 96], sizes = [2, 32], strides = [1, 1]} : vector<2x224xf32> to vector<2x32xf32>
    %466 = vector.extract_strided_slice %434 {offsets = [0, 128], sizes = [2, 32], strides = [1, 1]} : vector<2x224xf32> to vector<2x32xf32>
    %467 = vector.extract_strided_slice %434 {offsets = [0, 160], sizes = [2, 32], strides = [1, 1]} : vector<2x224xf32> to vector<2x32xf32>
    %468 = vector.extract_strided_slice %434 {offsets = [0, 192], sizes = [2, 32], strides = [1, 1]} : vector<2x224xf32> to vector<2x32xf32>
    %469 = math.tanh %468 : vector<2x32xf32>
    %470 = arith.maximumf %465, %466 : vector<2x32xf32>
    %471 = arith.maximumf %470, %467 : vector<2x32xf32>
    %472 = arith.subf %465, %471 : vector<2x32xf32>
    %473 = math.exp %472 : vector<2x32xf32>
    %474 = arith.subf %466, %471 : vector<2x32xf32>
    %475 = math.exp %474 : vector<2x32xf32>
    %476 = arith.subf %467, %471 : vector<2x32xf32>
    %477 = math.exp %476 : vector<2x32xf32>
    %478 = arith.addf %473, %475 : vector<2x32xf32>
    %479 = arith.addf %478, %477 : vector<2x32xf32>
    %480 = tpu.reciprocal %479 {approx = true} : vector<2x32xf32> -> vector<2x32xf32>
    %481 = arith.mulf %473, %480 : vector<2x32xf32>
    %482 = arith.mulf %475, %480 : vector<2x32xf32>
    %483 = arith.mulf %477, %480 : vector<2x32xf32>
    %cst_155 = arith.constant dense<0.000000e+00> : vector<16x32xf32>
    %484 = tpu.matmul %4, %481, %cst_155 {dimension_numbers = #tpu.dot_dimension_numbers<[1], [0], [0], [1], [0, 0, 1, 1], [], []>} : vector<16x2xf32>, vector<2x32xf32>, vector<16x32xf32> -> vector<16x32xf32>
    %cst_156 = arith.constant dense<0.000000e+00> : vector<16x32xf32>
    %485 = tpu.matmul %4, %482, %cst_156 {dimension_numbers = #tpu.dot_dimension_numbers<[1], [0], [0], [1], [0, 0, 1, 1], [], []>} : vector<16x2xf32>, vector<2x32xf32>, vector<16x32xf32> -> vector<16x32xf32>
    %cst_157 = arith.constant dense<0.000000e+00> : vector<16x32xf32>
    %486 = tpu.matmul %4, %483, %cst_157 {dimension_numbers = #tpu.dot_dimension_numbers<[1], [0], [0], [1], [0, 0, 1, 1], [], []>} : vector<16x2xf32>, vector<2x32xf32>, vector<16x32xf32> -> vector<16x32xf32>
    %487 = arith.mulf %481, %469 : vector<2x32xf32>
    %cst_158 = arith.constant dense<0.000000e+00> : vector<16x32xf32>
    %488 = tpu.matmul %4, %487, %cst_158 {dimension_numbers = #tpu.dot_dimension_numbers<[1], [0], [0], [1], [0, 0, 1, 1], [], []>} : vector<16x2xf32>, vector<2x32xf32>, vector<16x32xf32> -> vector<16x32xf32>
    %c8_159 = arith.constant 8 : index
    %c0_160 = arith.constant 0 : index
    %489 = vector.load %arg12[%c8_159, %c0_160] : memref<32x32xf32, #tpu.memory_space<vmem>>, vector<16x32xf32>
    tpu.vector_store %arg12[%c8_159, %c0_160], %423 {strides = array<i32>} : memref<32x32xf32, #tpu.memory_space<vmem>>, vector<16x32xf32>,
    %c7_161 = arith.constant 7 : index
    %c0_162 = arith.constant 0 : index
    %490 = vector.load %arg12[%c7_161, %c0_162] : memref<32x32xf32, #tpu.memory_space<vmem>>, vector<16x32xf32>
    %c9_163 = arith.constant 9 : index
    %c0_164 = arith.constant 0 : index
    %491 = vector.load %arg12[%c9_163, %c0_164] : memref<32x32xf32, #tpu.memory_space<vmem>>, vector<16x32xf32>
    %492 = arith.mulf %484, %490 : vector<16x32xf32>
    %493 = arith.mulf %485, %491 : vector<16x32xf32>
    %494 = arith.addf %492, %493 : vector<16x32xf32>
    %495 = arith.mulf %486, %423 : vector<16x32xf32>
    %496 = arith.addf %494, %495 : vector<16x32xf32>
    %497 = arith.mulf %26, %488 : vector<16x32xf32>
    %498 = arith.addf %497, %37 : vector<16x32xf32>
    %499 = arith.mulf %34, %496 : vector<16x32xf32>
    %500 = arith.addf %498, %499 : vector<16x32xf32>
    %c5_165 = arith.constant 5 : index
    %c0_166 = arith.constant 0 : index
    %c0_167 = arith.constant 0 : index
    %501 = vector.load %arg9[%c5_165, %c0_166, %c0_167] : memref<8x2x32xf32, #tpu.memory_space<vmem>>, vector<1x2x32xf32>
    %502 = vector.shape_cast %501 : vector<1x2x32xf32> to vector<2x32xf32>
    %503 = vector.shape_cast %464 : vector<2x32xf32> to vector<1x2x32xf32>
    tpu.vector_store %arg9[%c5_165, %c0_166, %c0_167], %503 {strides = array<i32>} : memref<8x2x32xf32, #tpu.memory_space<vmem>>, vector<1x2x32xf32>,
    %c6 = arith.constant 6 : index
    %c0_168 = arith.constant 0 : index
    %c0_169 = arith.constant 0 : index
    %504 = vector.load %arg0[%c6, %c0_168, %c0_169] : memref<8x2x32xf32, #tpu.memory_space<vmem>>, vector<1x2x32xf32>
    %505 = vector.shape_cast %504 : vector<1x2x32xf32> to vector<2x32xf32>
    %cst_170 = arith.constant dense<0.000000e+00> : vector<2x96xf32>
    %506 = tpu.matmul %505, %0, %cst_170 {dimension_numbers = #tpu.dot_dimension_numbers<[1], [0], [0], [1], [0, 0, 1, 1], [], []>} : vector<2x32xf32>, vector<32x96xf32>, vector<2x96xf32> -> vector<2x96xf32>
    %507 = vector.broadcast %1 : vector<1x96xf32> to vector<2x96xf32>
    %508 = arith.addf %506, %507 : vector<2x96xf32>
    %cst_171 = arith.constant dense<0.000000e+00> : vector<2x224xf32>
    %509 = tpu.matmul %464, %2, %cst_171 {dimension_numbers = #tpu.dot_dimension_numbers<[1], [0], [0], [1], [0, 0, 1, 1], [], []>} : vector<2x32xf32>, vector<32x224xf32>, vector<2x224xf32> -> vector<2x224xf32>
    %510 = vector.broadcast %3 : vector<1x224xf32> to vector<2x224xf32>
    %511 = arith.addf %509, %510 : vector<2x224xf32>
    %512 = vector.extract_strided_slice %508 {offsets = [0, 0], sizes = [2, 32], strides = [1, 1]} : vector<2x96xf32> to vector<2x32xf32>
    %513 = vector.extract_strided_slice %511 {offsets = [0, 0], sizes = [2, 32], strides = [1, 1]} : vector<2x224xf32> to vector<2x32xf32>
    %514 = arith.addf %512, %513 : vector<2x32xf32>
    %cst_172 = arith.constant 0.000000e+00 : f32
    %515 = vector.broadcast %cst_172 : f32 to vector<2x32xf32>
    %516 = arith.subf %515, %514 : vector<2x32xf32>
    %517 = math.exp %516 : vector<2x32xf32>
    %cst_173 = arith.constant 1.000000e+00 : f32
    %518 = vector.broadcast %cst_173 : f32 to vector<2x32xf32>
    %519 = arith.addf %518, %517 : vector<2x32xf32>
    %cst_174 = arith.constant 1.000000e+00 : f32
    %520 = vector.broadcast %cst_174 : f32 to vector<2x32xf32>
    %521 = arith.divf %520, %519 : vector<2x32xf32>
    %522 = vector.extract_strided_slice %508 {offsets = [0, 32], sizes = [2, 32], strides = [1, 1]} : vector<2x96xf32> to vector<2x32xf32>
    %523 = vector.extract_strided_slice %511 {offsets = [0, 32], sizes = [2, 32], strides = [1, 1]} : vector<2x224xf32> to vector<2x32xf32>
    %524 = arith.addf %522, %523 : vector<2x32xf32>
    %cst_175 = arith.constant 0.000000e+00 : f32
    %525 = vector.broadcast %cst_175 : f32 to vector<2x32xf32>
    %526 = arith.subf %525, %524 : vector<2x32xf32>
    %527 = math.exp %526 : vector<2x32xf32>
    %cst_176 = arith.constant 1.000000e+00 : f32
    %528 = vector.broadcast %cst_176 : f32 to vector<2x32xf32>
    %529 = arith.addf %528, %527 : vector<2x32xf32>
    %cst_177 = arith.constant 1.000000e+00 : f32
    %530 = vector.broadcast %cst_177 : f32 to vector<2x32xf32>
    %531 = arith.divf %530, %529 : vector<2x32xf32>
    %532 = vector.extract_strided_slice %508 {offsets = [0, 64], sizes = [2, 32], strides = [1, 1]} : vector<2x96xf32> to vector<2x32xf32>
    %533 = vector.extract_strided_slice %511 {offsets = [0, 64], sizes = [2, 32], strides = [1, 1]} : vector<2x224xf32> to vector<2x32xf32>
    %534 = arith.mulf %521, %533 : vector<2x32xf32>
    %535 = arith.addf %532, %534 : vector<2x32xf32>
    %536 = math.tanh %535 : vector<2x32xf32>
    %cst_178 = arith.constant 1.000000e+00 : f32
    %537 = vector.broadcast %cst_178 : f32 to vector<2x32xf32>
    %538 = arith.subf %537, %531 : vector<2x32xf32>
    %539 = arith.mulf %538, %536 : vector<2x32xf32>
    %540 = arith.mulf %531, %464 : vector<2x32xf32>
    %541 = arith.addf %539, %540 : vector<2x32xf32>
    %542 = vector.extract_strided_slice %511 {offsets = [0, 96], sizes = [2, 32], strides = [1, 1]} : vector<2x224xf32> to vector<2x32xf32>
    %543 = vector.extract_strided_slice %511 {offsets = [0, 128], sizes = [2, 32], strides = [1, 1]} : vector<2x224xf32> to vector<2x32xf32>
    %544 = vector.extract_strided_slice %511 {offsets = [0, 160], sizes = [2, 32], strides = [1, 1]} : vector<2x224xf32> to vector<2x32xf32>
    %545 = vector.extract_strided_slice %511 {offsets = [0, 192], sizes = [2, 32], strides = [1, 1]} : vector<2x224xf32> to vector<2x32xf32>
    %546 = math.tanh %545 : vector<2x32xf32>
    %547 = arith.maximumf %542, %543 : vector<2x32xf32>
    %548 = arith.maximumf %547, %544 : vector<2x32xf32>
    %549 = arith.subf %542, %548 : vector<2x32xf32>
    %550 = math.exp %549 : vector<2x32xf32>
    %551 = arith.subf %543, %548 : vector<2x32xf32>
    %552 = math.exp %551 : vector<2x32xf32>
    %553 = arith.subf %544, %548 : vector<2x32xf32>
    %554 = math.exp %553 : vector<2x32xf32>
    %555 = arith.addf %550, %552 : vector<2x32xf32>
    %556 = arith.addf %555, %554 : vector<2x32xf32>
    %557 = tpu.reciprocal %556 {approx = true} : vector<2x32xf32> -> vector<2x32xf32>
    %558 = arith.mulf %550, %557 : vector<2x32xf32>
    %559 = arith.mulf %552, %557 : vector<2x32xf32>
    %560 = arith.mulf %554, %557 : vector<2x32xf32>
    %cst_179 = arith.constant dense<0.000000e+00> : vector<16x32xf32>
    %561 = tpu.matmul %4, %558, %cst_179 {dimension_numbers = #tpu.dot_dimension_numbers<[1], [0], [0], [1], [0, 0, 1, 1], [], []>} : vector<16x2xf32>, vector<2x32xf32>, vector<16x32xf32> -> vector<16x32xf32>
    %cst_180 = arith.constant dense<0.000000e+00> : vector<16x32xf32>
    %562 = tpu.matmul %4, %559, %cst_180 {dimension_numbers = #tpu.dot_dimension_numbers<[1], [0], [0], [1], [0, 0, 1, 1], [], []>} : vector<16x2xf32>, vector<2x32xf32>, vector<16x32xf32> -> vector<16x32xf32>
    %cst_181 = arith.constant dense<0.000000e+00> : vector<16x32xf32>
    %563 = tpu.matmul %4, %560, %cst_181 {dimension_numbers = #tpu.dot_dimension_numbers<[1], [0], [0], [1], [0, 0, 1, 1], [], []>} : vector<16x2xf32>, vector<2x32xf32>, vector<16x32xf32> -> vector<16x32xf32>
    %564 = arith.mulf %558, %546 : vector<2x32xf32>
    %cst_182 = arith.constant dense<0.000000e+00> : vector<16x32xf32>
    %565 = tpu.matmul %4, %564, %cst_182 {dimension_numbers = #tpu.dot_dimension_numbers<[1], [0], [0], [1], [0, 0, 1, 1], [], []>} : vector<16x2xf32>, vector<2x32xf32>, vector<16x32xf32> -> vector<16x32xf32>
    %c8_183 = arith.constant 8 : index
    %c0_184 = arith.constant 0 : index
    %566 = vector.load %arg12[%c8_183, %c0_184] : memref<32x32xf32, #tpu.memory_space<vmem>>, vector<16x32xf32>
    tpu.vector_store %arg12[%c8_183, %c0_184], %500 {strides = array<i32>} : memref<32x32xf32, #tpu.memory_space<vmem>>, vector<16x32xf32>,
    %c7_185 = arith.constant 7 : index
    %c0_186 = arith.constant 0 : index
    %567 = vector.load %arg12[%c7_185, %c0_186] : memref<32x32xf32, #tpu.memory_space<vmem>>, vector<16x32xf32>
    %c9_187 = arith.constant 9 : index
    %c0_188 = arith.constant 0 : index
    %568 = vector.load %arg12[%c9_187, %c0_188] : memref<32x32xf32, #tpu.memory_space<vmem>>, vector<16x32xf32>
    %569 = arith.mulf %561, %567 : vector<16x32xf32>
    %570 = arith.mulf %562, %568 : vector<16x32xf32>
    %571 = arith.addf %569, %570 : vector<16x32xf32>
    %572 = arith.mulf %563, %500 : vector<16x32xf32>
    %573 = arith.addf %571, %572 : vector<16x32xf32>
    %574 = arith.mulf %26, %565 : vector<16x32xf32>
    %575 = arith.addf %574, %37 : vector<16x32xf32>
    %576 = arith.mulf %34, %573 : vector<16x32xf32>
    %577 = arith.addf %575, %576 : vector<16x32xf32>
    %c6_189 = arith.constant 6 : index
    %c0_190 = arith.constant 0 : index
    %c0_191 = arith.constant 0 : index
    %578 = vector.load %arg9[%c6_189, %c0_190, %c0_191] : memref<8x2x32xf32, #tpu.memory_space<vmem>>, vector<1x2x32xf32>
    %579 = vector.shape_cast %578 : vector<1x2x32xf32> to vector<2x32xf32>
    %580 = vector.shape_cast %541 : vector<2x32xf32> to vector<1x2x32xf32>
    tpu.vector_store %arg9[%c6_189, %c0_190, %c0_191], %580 {strides = array<i32>} : memref<8x2x32xf32, #tpu.memory_space<vmem>>, vector<1x2x32xf32>,
    %c7_192 = arith.constant 7 : index
    %c0_193 = arith.constant 0 : index
    %c0_194 = arith.constant 0 : index
    %581 = vector.load %arg0[%c7_192, %c0_193, %c0_194] : memref<8x2x32xf32, #tpu.memory_space<vmem>>, vector<1x2x32xf32>
    %582 = vector.shape_cast %581 : vector<1x2x32xf32> to vector<2x32xf32>
    %cst_195 = arith.constant dense<0.000000e+00> : vector<2x96xf32>
    %583 = tpu.matmul %582, %0, %cst_195 {dimension_numbers = #tpu.dot_dimension_numbers<[1], [0], [0], [1], [0, 0, 1, 1], [], []>} : vector<2x32xf32>, vector<32x96xf32>, vector<2x96xf32> -> vector<2x96xf32>
    %584 = vector.broadcast %1 : vector<1x96xf32> to vector<2x96xf32>
    %585 = arith.addf %583, %584 : vector<2x96xf32>
    %cst_196 = arith.constant dense<0.000000e+00> : vector<2x224xf32>
    %586 = tpu.matmul %541, %2, %cst_196 {dimension_numbers = #tpu.dot_dimension_numbers<[1], [0], [0], [1], [0, 0, 1, 1], [], []>} : vector<2x32xf32>, vector<32x224xf32>, vector<2x224xf32> -> vector<2x224xf32>
    %587 = vector.broadcast %3 : vector<1x224xf32> to vector<2x224xf32>
    %588 = arith.addf %586, %587 : vector<2x224xf32>
    %589 = vector.extract_strided_slice %585 {offsets = [0, 0], sizes = [2, 32], strides = [1, 1]} : vector<2x96xf32> to vector<2x32xf32>
    %590 = vector.extract_strided_slice %588 {offsets = [0, 0], sizes = [2, 32], strides = [1, 1]} : vector<2x224xf32> to vector<2x32xf32>
    %591 = arith.addf %589, %590 : vector<2x32xf32>
    %cst_197 = arith.constant 0.000000e+00 : f32
    %592 = vector.broadcast %cst_197 : f32 to vector<2x32xf32>
    %593 = arith.subf %592, %591 : vector<2x32xf32>
    %594 = math.exp %593 : vector<2x32xf32>
    %cst_198 = arith.constant 1.000000e+00 : f32
    %595 = vector.broadcast %cst_198 : f32 to vector<2x32xf32>
    %596 = arith.addf %595, %594 : vector<2x32xf32>
    %cst_199 = arith.constant 1.000000e+00 : f32
    %597 = vector.broadcast %cst_199 : f32 to vector<2x32xf32>
    %598 = arith.divf %597, %596 : vector<2x32xf32>
    %599 = vector.extract_strided_slice %585 {offsets = [0, 32], sizes = [2, 32], strides = [1, 1]} : vector<2x96xf32> to vector<2x32xf32>
    %600 = vector.extract_strided_slice %588 {offsets = [0, 32], sizes = [2, 32], strides = [1, 1]} : vector<2x224xf32> to vector<2x32xf32>
    %601 = arith.addf %599, %600 : vector<2x32xf32>
    %cst_200 = arith.constant 0.000000e+00 : f32
    %602 = vector.broadcast %cst_200 : f32 to vector<2x32xf32>
    %603 = arith.subf %602, %601 : vector<2x32xf32>
    %604 = math.exp %603 : vector<2x32xf32>
    %cst_201 = arith.constant 1.000000e+00 : f32
    %605 = vector.broadcast %cst_201 : f32 to vector<2x32xf32>
    %606 = arith.addf %605, %604 : vector<2x32xf32>
    %cst_202 = arith.constant 1.000000e+00 : f32
    %607 = vector.broadcast %cst_202 : f32 to vector<2x32xf32>
    %608 = arith.divf %607, %606 : vector<2x32xf32>
    %609 = vector.extract_strided_slice %585 {offsets = [0, 64], sizes = [2, 32], strides = [1, 1]} : vector<2x96xf32> to vector<2x32xf32>
    %610 = vector.extract_strided_slice %588 {offsets = [0, 64], sizes = [2, 32], strides = [1, 1]} : vector<2x224xf32> to vector<2x32xf32>
    %611 = arith.mulf %598, %610 : vector<2x32xf32>
    %612 = arith.addf %609, %611 : vector<2x32xf32>
    %613 = math.tanh %612 : vector<2x32xf32>
    %cst_203 = arith.constant 1.000000e+00 : f32
    %614 = vector.broadcast %cst_203 : f32 to vector<2x32xf32>
    %615 = arith.subf %614, %608 : vector<2x32xf32>
    %616 = arith.mulf %615, %613 : vector<2x32xf32>
    %617 = arith.mulf %608, %541 : vector<2x32xf32>
    %618 = arith.addf %616, %617 : vector<2x32xf32>
    %619 = vector.extract_strided_slice %588 {offsets = [0, 96], sizes = [2, 32], strides = [1, 1]} : vector<2x224xf32> to vector<2x32xf32>
    %620 = vector.extract_strided_slice %588 {offsets = [0, 128], sizes = [2, 32], strides = [1, 1]} : vector<2x224xf32> to vector<2x32xf32>
    %621 = vector.extract_strided_slice %588 {offsets = [0, 160], sizes = [2, 32], strides = [1, 1]} : vector<2x224xf32> to vector<2x32xf32>
    %622 = vector.extract_strided_slice %588 {offsets = [0, 192], sizes = [2, 32], strides = [1, 1]} : vector<2x224xf32> to vector<2x32xf32>
    %623 = math.tanh %622 : vector<2x32xf32>
    %624 = arith.maximumf %619, %620 : vector<2x32xf32>
    %625 = arith.maximumf %624, %621 : vector<2x32xf32>
    %626 = arith.subf %619, %625 : vector<2x32xf32>
    %627 = math.exp %626 : vector<2x32xf32>
    %628 = arith.subf %620, %625 : vector<2x32xf32>
    %629 = math.exp %628 : vector<2x32xf32>
    %630 = arith.subf %621, %625 : vector<2x32xf32>
    %631 = math.exp %630 : vector<2x32xf32>
    %632 = arith.addf %627, %629 : vector<2x32xf32>
    %633 = arith.addf %632, %631 : vector<2x32xf32>
    %634 = tpu.reciprocal %633 {approx = true} : vector<2x32xf32> -> vector<2x32xf32>
    %635 = arith.mulf %627, %634 : vector<2x32xf32>
    %636 = arith.mulf %629, %634 : vector<2x32xf32>
    %637 = arith.mulf %631, %634 : vector<2x32xf32>
    %cst_204 = arith.constant dense<0.000000e+00> : vector<16x32xf32>
    %638 = tpu.matmul %4, %635, %cst_204 {dimension_numbers = #tpu.dot_dimension_numbers<[1], [0], [0], [1], [0, 0, 1, 1], [], []>} : vector<16x2xf32>, vector<2x32xf32>, vector<16x32xf32> -> vector<16x32xf32>
    %cst_205 = arith.constant dense<0.000000e+00> : vector<16x32xf32>
    %639 = tpu.matmul %4, %636, %cst_205 {dimension_numbers = #tpu.dot_dimension_numbers<[1], [0], [0], [1], [0, 0, 1, 1], [], []>} : vector<16x2xf32>, vector<2x32xf32>, vector<16x32xf32> -> vector<16x32xf32>
    %cst_206 = arith.constant dense<0.000000e+00> : vector<16x32xf32>
    %640 = tpu.matmul %4, %637, %cst_206 {dimension_numbers = #tpu.dot_dimension_numbers<[1], [0], [0], [1], [0, 0, 1, 1], [], []>} : vector<16x2xf32>, vector<2x32xf32>, vector<16x32xf32> -> vector<16x32xf32>
    %641 = arith.mulf %635, %623 : vector<2x32xf32>
    %cst_207 = arith.constant dense<0.000000e+00> : vector<16x32xf32>
    %642 = tpu.matmul %4, %641, %cst_207 {dimension_numbers = #tpu.dot_dimension_numbers<[1], [0], [0], [1], [0, 0, 1, 1], [], []>} : vector<16x2xf32>, vector<2x32xf32>, vector<16x32xf32> -> vector<16x32xf32>
    %c8_208 = arith.constant 8 : index
    %c0_209 = arith.constant 0 : index
    %643 = vector.load %arg12[%c8_208, %c0_209] : memref<32x32xf32, #tpu.memory_space<vmem>>, vector<16x32xf32>
    tpu.vector_store %arg12[%c8_208, %c0_209], %577 {strides = array<i32>} : memref<32x32xf32, #tpu.memory_space<vmem>>, vector<16x32xf32>,
    %c7_210 = arith.constant 7 : index
    %c0_211 = arith.constant 0 : index
    %644 = vector.load %arg12[%c7_210, %c0_211] : memref<32x32xf32, #tpu.memory_space<vmem>>, vector<16x32xf32>
    %c9_212 = arith.constant 9 : index
    %c0_213 = arith.constant 0 : index
    %645 = vector.load %arg12[%c9_212, %c0_213] : memref<32x32xf32, #tpu.memory_space<vmem>>, vector<16x32xf32>
    %646 = arith.mulf %638, %644 : vector<16x32xf32>
    %647 = arith.mulf %639, %645 : vector<16x32xf32>
    %648 = arith.addf %646, %647 : vector<16x32xf32>
    %649 = arith.mulf %640, %577 : vector<16x32xf32>
    %650 = arith.addf %648, %649 : vector<16x32xf32>
    %651 = arith.mulf %26, %642 : vector<16x32xf32>
    %652 = arith.addf %651, %37 : vector<16x32xf32>
    %653 = arith.mulf %34, %650 : vector<16x32xf32>
    %654 = arith.addf %652, %653 : vector<16x32xf32>
    %c7_214 = arith.constant 7 : index
    %c0_215 = arith.constant 0 : index
    %c0_216 = arith.constant 0 : index
    %655 = vector.load %arg9[%c7_214, %c0_215, %c0_216] : memref<8x2x32xf32, #tpu.memory_space<vmem>>, vector<1x2x32xf32>
    %656 = vector.shape_cast %655 : vector<1x2x32xf32> to vector<2x32xf32>
    %657 = vector.shape_cast %618 : vector<2x32xf32> to vector<1x2x32xf32>
    tpu.vector_store %arg9[%c7_214, %c0_215, %c0_216], %657 {strides = array<i32>} : memref<8x2x32xf32, #tpu.memory_space<vmem>>, vector<1x2x32xf32>,
    %c0_217 = arith.constant 0 : index
    %c0_218 = arith.constant 0 : index
    %658 = vector.load %arg10[%c0_217, %c0_218] : memref<2x32xf32, #tpu.memory_space<vmem>>, vector<2x32xf32>
    tpu.vector_store %arg10[%c0_217, %c0_218], %618 {strides = array<i32>} : memref<2x32xf32, #tpu.memory_space<vmem>>, vector<2x32xf32>,
    %c0_219 = arith.constant 0 : index
    %c0_220 = arith.constant 0 : index
    %659 = vector.load %arg11[%c0_219, %c0_220] : memref<16x32xf32, #tpu.memory_space<vmem>>, vector<16x32xf32>
    tpu.vector_store %arg11[%c0_219, %c0_220], %654 {strides = array<i32>} : memref<16x32xf32, #tpu.memory_space<vmem>>, vector<16x32xf32>,
    return
  }
}

</mosaic_0001>

<llo_original>
// kernel: tpu_custom_call.1
$region0: #{tpu_custom_call.1}
  #allocation0 [shape = 'u32[]', space=smem, size = 0x4, offset = 0x4, fixed_abs, tag = 'smem constant byte address 0x4 - core index']
  #allocation1 [shape = 'u32[144,128]{1,0:T(1,128)}', space=vmem, size = 0x12000, scoped, tag = 'internal scratch']
  #allocation2 [shape = 'f32[32,32]{1,0:T(8,128)}', space=vmem, size = 0x4000, scoped, tag = 'scratch operand']
  %s0 = inlined_call_operand.vmem [shape: f32[8,2,32], index: 0, kind: input, shape index: {}]
  %s1 = inlined_call_operand.vmem [shape: f32[2,32], index: 1, kind: input, shape index: {}]
  %s2 = inlined_call_operand.hbm [shape: f32[16,32], index: 2, kind: input, shape index: {}]
  %s3 = inlined_call_operand.hbm [shape: f32[32,96], index: 3, kind: input, shape index: {}]
  %s4 = inlined_call_operand.vmem [shape: f32[1,96], index: 4, kind: input, shape index: {}]
  %s5 = inlined_call_operand.hbm [shape: f32[32,224], index: 5, kind: input, shape index: {}]
  %s6 = inlined_call_operand.vmem [shape: f32[1,224], index: 6, kind: input, shape index: {}]
  %s7 = inlined_call_operand.vmem [shape: f32[16,2], index: 7, kind: input, shape index: {}]
  %s8 = inlined_call_operand.vmem [shape: f32[1,32], index: 8, kind: input, shape index: {}]
  %s9 = inlined_call_operand.hbm [shape: f32[8,2,32], index: 9, kind: output, shape index: {0}]
  %s10 = inlined_call_operand.hbm [shape: f32[2,32], index: 10, kind: output, shape index: {1}]
  %s11 = inlined_call_operand.hbm [shape: f32[16,32], index: 11, kind: output, shape index: {2}]
  %12 = xla_tuple %s9, %s10, %s11
  %s13 = sld [smem:[#allocation0]]
  $region74: #{tpu_custom_call.1} parent=0
    _
  %s15 = ssub.s32 1, %s13
  %s16 = scalar_select 0, %s15, %s13
  $region1: #{tpu_custom_call.1} parent=0
    #allocation3 [shape = 'u8[8192]{0}', space=vmem, size = 0x2000, scoped, tag = 'input window, operand 2, single buffered']
    #allocation4 [shape = 's32[1]{0}', space=sflag, size = 0x4, scoped, tag = 'scoped memory for tpu_custom_call.1']
    #allocation5 [shape = 's32[1]{0}', space=sflag, size = 0x4, scoped, tag = 'scoped memory for tpu_custom_call.1']
    #allocation6 [shape = 'u8[16384]{0}', space=vmem, size = 0x4000, scoped, tag = 'input window, operand 3, single buffered']
    #allocation7 [shape = 's32[1]{0}', space=sflag, size = 0x4, scoped, tag = 'scoped memory for tpu_custom_call.1']
    #allocation8 [shape = 'u8[32768]{0}', space=vmem, size = 0x8000, scoped, tag = 'input window, operand 5, single buffered']
    #allocation9 [shape = 'u8[8192]{0}', space=vmem, size = 0x2000, scoped, tag = 'output window, operand 0, single buffered']
    #allocation10 [shape = 'u8[1024]{0}', space=vmem, size = 0x400, scoped, tag = 'output window, operand 1, single buffered']
    #allocation11 [shape = 's32[1]{0}', space=sflag, size = 0x4, scoped, tag = 'scoped memory for tpu_custom_call.1']
    #allocation12 [shape = 'u8[8192]{0}', space=vmem, size = 0x2000, scoped, tag = 'output window, operand 2, single buffered']
    %17 = vsyncpa [#allocation4], 0
    %18 = vsyncpa [#allocation7], 0
    %19 = vsyncpa [#allocation5], 0
    %20 = vsyncpa [#allocation11], 0
    // Predicated region
    $region2: #{tpu_custom_call.1} parent=1 // pred_check
      _
    $region3: #{tpu_custom_call.1} parent=1 // pred_check_branch
      %22 = sbr.rel (0) target = $region5
    $region4: #{tpu_custom_call.1} parent=1 // pred_region
      _
    $region5: #{tpu_custom_call.1} parent=1 // pred_fallthru
      _
    // Predicated region
    $region6: #{tpu_custom_call.1} parent=1 // pred_check
      _
    $region7: #{tpu_custom_call.1} parent=1 // pred_check_branch
      %24 = sbr.rel (0) target = $region9
    $region8: #{tpu_custom_call.1} parent=1 // pred_region
      _
    $region9: #{tpu_custom_call.1} parent=1 // pred_fallthru
      _
    // Predicated region
    $region10: #{tpu_custom_call.1} parent=1 // pred_check
      _
    $region11: #{tpu_custom_call.1} parent=1 // pred_check_branch
      %26 = sbr.rel (0) target = $region13
    $region12: #{tpu_custom_call.1} parent=1 // pred_region
      %s28 = ssub.s32 256, 256
      %29 = vsyncadd [#allocation4], %s28
      %s30 = sshll.u32 [#allocation3], 4
      %s31 = int_to_ptr.vmem [resolvable:$true] %s30
      %36 = dma.hbm_to_vmem [thread:$0]  %s2, 256, %s31, [#allocation4], 128, 128, 8
    $region13: #{tpu_custom_call.1} parent=1 // pred_fallthru
      _
    // Predicated region
    $region14: #{tpu_custom_call.1} parent=1 // pred_check
      _
    $region15: #{tpu_custom_call.1} parent=1 // pred_check_branch
      %38 = sbr.rel (0) target = $region17
    $region16: #{tpu_custom_call.1} parent=1 // pred_region
      %s40 = ssub.s32 512, 512
      %41 = vsyncadd [#allocation7], %s40
      %s42 = sshll.u32 [#allocation6], 4
      %s43 = int_to_ptr.vmem [resolvable:$true] %s42
      %48 = dma.hbm_to_vmem [thread:$0]  %s3, 512, %s43, [#allocation7], 128, 128, 8
    $region17: #{tpu_custom_call.1} parent=1 // pred_fallthru
      _
    // Predicated region
    $region18: #{tpu_custom_call.1} parent=1 // pred_check
      _
    $region19: #{tpu_custom_call.1} parent=1 // pred_check_branch
      %50 = sbr.rel (0) target = $region21
    $region20: #{tpu_custom_call.1} parent=1 // pred_region
      _
    $region21: #{tpu_custom_call.1} parent=1 // pred_fallthru
      _
    // Predicated region
    $region22: #{tpu_custom_call.1} parent=1 // pred_check
      _
    $region23: #{tpu_custom_call.1} parent=1 // pred_check_branch
      %52 = sbr.rel (0) target = $region25
    $region24: #{tpu_custom_call.1} parent=1 // pred_region
      %s54 = ssub.s32 1024, 1024
      %55 = vsyncadd [#allocation7], %s54
      %s56 = sshll.u32 [#allocation8], 4
      %s57 = int_to_ptr.vmem [resolvable:$true] %s56
      %62 = dma.hbm_to_vmem [thread:$0]  %s5, 1024, %s57, [#allocation7], 256, 256, 16
    $region25: #{tpu_custom_call.1} parent=1 // pred_fallthru
      _
    // Predicated region
    $region26: #{tpu_custom_call.1} parent=1 // pred_check
      _
    $region27: #{tpu_custom_call.1} parent=1 // pred_check_branch
      %64 = sbr.rel (0) target = $region29
    $region28: #{tpu_custom_call.1} parent=1 // pred_region
      _
    $region29: #{tpu_custom_call.1} parent=1 // pred_fallthru
      _
    // Predicated region
    $region30: #{tpu_custom_call.1} parent=1 // pred_check
      _
    $region31: #{tpu_custom_call.1} parent=1 // pred_check_branch
      %66 = sbr.rel (0) target = $region33
    $region32: #{tpu_custom_call.1} parent=1 // pred_region
      _
    $region33: #{tpu_custom_call.1} parent=1 // pred_fallthru
      _
    // Predicated region
    $region34: #{tpu_custom_call.1} parent=1 // pred_check
      _
    $region35: #{tpu_custom_call.1} parent=1 // pred_check_branch
      %68 = sbr.rel (0) target = $region37
    $region36: #{tpu_custom_call.1} parent=1 // pred_region
      _
    $region37: #{tpu_custom_call.1} parent=1 // pred_fallthru
      _
    // Predicated region
    $region38: #{tpu_custom_call.1} parent=1 // pred_check
      _
    $region39: #{tpu_custom_call.1} parent=1 // pred_check_branch
      %70 = sbr.rel (0) target = $region41
    $region40: #{tpu_custom_call.1} parent=1 // pred_region
      %71 = dma.done [#allocation4], 256
    $region41: #{tpu_custom_call.1} parent=1 // pred_fallthru
      _
    // Predicated region
    $region42: #{tpu_custom_call.1} parent=1 // pred_check
      _
    $region43: #{tpu_custom_call.1} parent=1 // pred_check_branch
      %73 = sbr.rel (0) target = $region45
    $region44: #{tpu_custom_call.1} parent=1 // pred_region
      %74 = dma.done [#allocation7], 512
    $region45: #{tpu_custom_call.1} parent=1 // pred_fallthru
      _
    // Predicated region
    $region46: #{tpu_custom_call.1} parent=1 // pred_check
      _
    $region47: #{tpu_custom_call.1} parent=1 // pred_check_branch
      %76 = sbr.rel (0) target = $region49
    $region48: #{tpu_custom_call.1} parent=1 // pred_region
      %77 = dma.done [#allocation7], 1024
    $region49: #{tpu_custom_call.1} parent=1 // pred_fallthru
      _
    %v78 = vld [vmem:[#allocation6] sm:$0xff]
    %v79 = vld [vmem:[#allocation6 + $0x8] sm:$0xff]
    %v80 = vld [vmem:[#allocation6 + $0x10] sm:$0xff]
    %v81 = vld [vmem:[#allocation6 + $0x18] sm:$0xff]
    %v82 = vld [vmem:[%s4] sm:$0x1]
    %v83 = vld [vmem:[#allocation8] sm:$0xff]
    %v84 = vld [vmem:[#allocation8 + $0x8] sm:$0xff]
    %v85 = vld [vmem:[#allocation8 + $0x10] sm:$0xff]
    %v86 = vld [vmem:[#allocation8 + $0x18] sm:$0xff]
    %v87 = vld [vmem:[#allocation8 + $0x20] sm:$0xff]
    %v88 = vld [vmem:[#allocation8 + $0x28] sm:$0xff]
    %v89 = vld [vmem:[#allocation8 + $0x30] sm:$0xff]
    %v90 = vld [vmem:[#allocation8 + $0x38] sm:$0xff]
    %v91 = vld [vmem:[%s6] sm:$0x3]
    %v92 = vld [vmem:[%s7] sm:$0xff]
    %v93 = vld [vmem:[%s7 + $0x8] sm:$0xff]
    %v94 = vlaneseq
    %v95 = vshrl.u32 %v94, 7
    %v96 = vadd.s32 %v95, 8
    %vm97 = vcmp.lt.s32.totalorder %v95, 0
    %v98 = vsub.s32 0, %v95
    %v99 = vsel %vm97, %v98, %v95
    %v100 = vshrl.u32 %v99, 3
    %v101 = vand.u32 %v99, 7
    %v102 = vsub.s32 0, %v101
    %v103 = vsel %vm97, %v102, %v101
    %vm104 = vcmp.lt.s32.totalorder %v96, 0
    %v105 = vsub.s32 0, %v96
    %v106 = vsel %vm104, %v105, %v96
    %v107 = vshrl.u32 %v106, 3
    %v108 = vand.u32 %v106, 7
    %v109 = vsub.s32 0, %v108
    %v110 = vsel %vm104, %v109, %v108
    %vm111 = vcmp.ne.s32.totalorder %v103, 0
    %vm112 = vcmp.ne.s32.totalorder %v110, 0
    %vm113 = vcmp.lt.s32.totalorder %v103, 0
    %vm114 = vcmp.lt.s32.totalorder %v110, 0
    %vm115 = vmand %vm113, %vm111
    %vm116 = vmand %vm114, %vm112
    %v117 = vadd.s32 %v103, 8
    %v118 = vadd.s32 %v110, 8
    %v119 = vsel %vm115, %v117, %v103
    %v120 = vsel %vm116, %v118, %v110
    %vm121 = vcmp.eq.s32.totalorder %v119, 0
    %vm122 = vcmp.eq.s32.totalorder %v120, 0
    %v123 = vsel %vm121, 1.0, 0.0
    %v124 = vsel %vm122, 1.0, 0.0
    %vm125 = vcmp.eq.s32.totalorder %v119, 7
    %vm126 = vcmp.eq.s32.totalorder %v120, 7
    %v127 = vsel %vm125, 1.0, 0.0
    %v128 = vsel %vm126, 1.0, 0.0
    %v129 = vsub.f32 1.0, %v123
    %v130 = vsub.f32 1.0, %v124
    %v131 = vsub.f32 %v129, %v127
    %v132 = vsub.f32 %v130, %v128
    %v133 = vld [vmem:[%s8] sm:$0x1]
    %v135 = vlaneseq
    %v136 = vshrl.u32 %v135, 7
    %v137 = vsub.s32 0, %v136
    %v138 = vrot.slane %v133, %v137
    %v140 = vmul.f32 %v127, %v138
    %v141 = vmul.f32 %v128, %v138
    %vm142 = vcmask 261120
    %143 = vst.msk [vmem:[#allocation2] sm:$0xff] %vm142, 0.0
    %144 = vst.msk [vmem:[#allocation2 + $0x8] sm:$0xff] %vm142, 0.0
    %145 = vst.msk [vmem:[#allocation2 + $0x10] sm:$0xff] %vm142, 0.0
    %146 = vst.msk [vmem:[#allocation2 + $0x18] sm:$0xff] %vm142, 0.0
    %v147 = vld [vmem:[%s1] sm:$0x3]
    %v148 = vld [vmem:[#allocation3] sm:$0xff]
    %v149 = vld [vmem:[#allocation3 + $0x8] sm:$0xff]
    %v150 = vld [vmem:[%s0] sm:$0x3]
    %v152 = vlaneseq
    %v153 = vshrl.u32 %v152, 7
    %v154 = vsub.s32 0, %v153
    %v155 = vrot.slane %v82, %v154
    %v158 = vsel %vm142, %v150, 0
    %160 = vmatprep.subr.mxu0 0.0
    %161 = vmatpush1.msra.mxu0 0.0
    %162 = vmatprep.subr.mxu0 0.0
    %163 = vmatpush1.msra.mxu0 0.0
    %164 = vmatprep.subr.mxu0 0.0
    %165 = vmatpush1.msra.mxu0 0.0
    %166 = vmatprep.subr.mxu0 0.0
    %167 = vmatpush1.msra.mxu0 0.0
    %168 = vmatprep.subr.mxu0 0.0
    %169 = vmatpush1.msra.mxu0 0.0
    %170 = vmatprep.subr.mxu0 0.0
    %171 = vmatpush1.msra.mxu0 0.0
    %172 = vmatprep.subr.mxu0 0.0
    %173 = vmatpush1.msra.mxu0 0.0
    %174 = vmatprep.subr.mxu0 0.0
    %175 = vmatpush1.msra.mxu0 0.0
    %176 = vmatprep.subr.mxu0 0.0
    %177 = vmatpush1.msra.mxu0 0.0
    %178 = vmatprep.subr.mxu0 0.0
    %179 = vmatpush1.msra.mxu0 0.0
    %180 = vmatprep.subr.mxu0 0.0
    %181 = vmatpush1.msra.mxu0 0.0
    %182 = vmatprep.subr.mxu0 0.0
    %183 = vmatpush1.msra.mxu0 0.0
    %184 = vmatprep.subr.mxu0 0.0
    %185 = vmatpush1.msra.mxu0 %v81
    %186 = vmatprep.subr.mxu0 0.0
    %187 = vmatpush1.msra.mxu0 %v80
    %188 = vmatprep.subr.mxu0 0.0
    %189 = vmatpush1.msra.mxu0 %v79
    %190 = vmatprep.subr.mxu0 0.0
    %191 = vmatpush1.msra.mxu0 %v78
    %192 = vmatprep.subr.mxu0 0.0
    %193 = vmatpush2.msra.mxu0 0.0
    %194 = vmatprep.subr.mxu0 0.0
    %195 = vmatpush2.msra.mxu0 0.0
    %196 = vmatprep.subr.mxu0 0.0
    %197 = vmatpush2.msra.mxu0 0.0
    %198 = vmatprep.subr.mxu0 0.0
    %199 = vmatpush2.msra.mxu0 0.0
    %200 = vmatprep.subr.mxu0 0.0
    %201 = vmatpush2.msra.mxu0 0.0
    %202 = vmatprep.subr.mxu0 0.0
    %203 = vmatpush2.msra.mxu0 0.0
    %204 = vmatprep.subr.mxu0 0.0
    %205 = vmatpush2.msra.mxu0 0.0
    %206 = vmatprep.subr.mxu0 0.0
    %207 = vmatpush2.msra.mxu0 0.0
    %208 = vmatprep.subr.mxu0 0.0
    %209 = vmatpush2.msra.mxu0 0.0
    %210 = vmatprep.subr.mxu0 0.0
    %211 = vmatpush2.msra.mxu0 0.0
    %212 = vmatprep.subr.mxu0 0.0
    %213 = vmatpush2.msra.mxu0 0.0
    %214 = vmatprep.subr.mxu0 0.0
    %215 = vmatpush2.msra.mxu0 0.0
    %216 = vmatprep.subr.mxu0 0.0
    %217 = vmatpush2.msra.mxu0 0.0
    %218 = vmatprep.subr.mxu0 0.0
    %219 = vmatpush2.msra.mxu0 0.0
    %220 = vmatprep.subr.mxu0 0.0
    %221 = vmatpush2.msra.mxu0 0.0
    %222 = vmatprep.subr.mxu0 0.0
    %223 = vmatpush2.msra.mxu0 0.0
    %224 = vmatprep.mubr.f32.mxu0 0.0
    %225 = vmatmul.mubr.f32.gmra.mxu0 %v158
    %v226 = vpop.f32.mrf.mxu0
    %v227 = vadd.f32 %v155, %v226
    %v228 = vpop.f32.mrf.mxu0
    %229 = vdwg.mxu0
    %v231 = vlaneseq
    %v232 = vshrl.u32 %v231, 7
    %v233 = vsub.s32 0, %v232
    %v234 = vrot.slane %v91, %v233
    %v235 = vlaneseq
    %v236 = vshrl.u32 %v235, 7
    %v237 = vsub.s32 1, %v236
    %v238 = vrot.slane %v91, %v237
    %v242 = vsel %vm142, %v147, 0
    %244 = vmatprep.subr.mxu0 0.0
    %245 = vmatpush1.msra.mxu0 0.0
    %246 = vmatprep.subr.mxu0 0.0
    %247 = vmatpush1.msra.mxu0 0.0
    %248 = vmatprep.subr.mxu0 0.0
    %249 = vmatpush1.msra.mxu0 0.0
    %250 = vmatprep.subr.mxu0 0.0
    %251 = vmatpush1.msra.mxu0 0.0
    %252 = vmatprep.subr.mxu0 0.0
    %253 = vmatpush1.msra.mxu0 0.0
    %254 = vmatprep.subr.mxu0 0.0
    %255 = vmatpush1.msra.mxu0 0.0
    %256 = vmatprep.subr.mxu0 0.0
    %257 = vmatpush1.msra.mxu0 0.0
    %258 = vmatprep.subr.mxu0 0.0
    %259 = vmatpush1.msra.mxu0 0.0
    %260 = vmatprep.subr.mxu0 0.0
    %261 = vmatpush1.msra.mxu0 0.0
    %262 = vmatprep.subr.mxu0 0.0
    %263 = vmatpush1.msra.mxu0 0.0
    %264 = vmatprep.subr.mxu0 0.0
    %265 = vmatpush1.msra.mxu0 0.0
    %266 = vmatprep.subr.mxu0 0.0
    %267 = vmatpush1.msra.mxu0 0.0
    %268 = vmatprep.subr.mxu0 %v90
    %269 = vmatpush1.msra.mxu0 %v89
    %270 = vmatprep.subr.mxu0 %v88
    %271 = vmatpush1.msra.mxu0 %v87
    %272 = vmatprep.subr.mxu0 %v86
    %273 = vmatpush1.msra.mxu0 %v85
    %274 = vmatprep.subr.mxu0 %v84
    %275 = vmatpush1.msra.mxu0 %v83
    %276 = vmatprep.subr.mxu0 0.0
    %277 = vmatpush2.msra.mxu0 0.0
    %278 = vmatprep.subr.mxu0 0.0
    %279 = vmatpush2.msra.mxu0 0.0
    %280 = vmatprep.subr.mxu0 0.0
    %281 = vmatpush2.msra.mxu0 0.0
    %282 = vmatprep.subr.mxu0 0.0
    %283 = vmatpush2.msra.mxu0 0.0
    %284 = vmatprep.subr.mxu0 0.0
    %285 = vmatpush2.msra.mxu0 0.0
    %286 = vmatprep.subr.mxu0 0.0
    %287 = vmatpush2.msra.mxu0 0.0
    %288 = vmatprep.subr.mxu0 0.0
    %289 = vmatpush2.msra.mxu0 0.0
    %290 = vmatprep.subr.mxu0 0.0
    %291 = vmatpush2.msra.mxu0 0.0
    %292 = vmatprep.subr.mxu0 0.0
    %293 = vmatpush2.msra.mxu0 0.0
    %294 = vmatprep.subr.mxu0 0.0
    %295 = vmatpush2.msra.mxu0 0.0
    %296 = vmatprep.subr.mxu0 0.0
    %297 = vmatpush2.msra.mxu0 0.0
    %298 = vmatprep.subr.mxu0 0.0
    %299 = vmatpush2.msra.mxu0 0.0
    %300 = vmatprep.subr.mxu0 0.0
    %301 = vmatpush2.msra.mxu0 0.0
    %302 = vmatprep.subr.mxu0 0.0
    %303 = vmatpush2.msra.mxu0 0.0
    %304 = vmatprep.subr.mxu0 0.0
    %305 = vmatpush2.msra.mxu0 0.0
    %306 = vmatprep.subr.mxu0 0.0
    %307 = vmatpush2.msra.mxu0 0.0
    %308 = vmatprep.mubr.f32.mxu0 0.0
    %309 = vmatmul.mubr.f32.gmra.mxu0 %v242
    %v310 = vpop.f32.mrf.mxu0
    %v311 = vadd.f32 %v234, %v310
    %v312 = vpop.f32.mrf.mxu0
    %v313 = vadd.f32 %v238, %v312
    %314 = vdwg.mxu0
    %v315 = vadd.f32 %v227, %v311
    %v316 = vsub.f32 0.0, %v315
    %v317 = vmul.f32 %v316, 1.442695
    %v318 = vpow.pop %v317
    %v319 = vadd.f32 %v318, 1.0
    %v320 = vrcp.pop %v319
    %v321 = vmul.f32 1.0, %v320
    %323 = vrot.lane.b32.xlu0 %v311, 64
    %v324 = vpop.permute.xlu0 %323
    %v326 = vmul.f32 %v321, %v324
    %328 = vrot.lane.b32.xlu0 %v326, 64
    %v329 = vpop.permute.xlu0 %328
    %v331 = vadd.f32 %v227, %v329
    %v332 = vtanh.pop %v331
    %v333 = vsub.f32 1.0, %v321
    %335 = vrot.lane.b32.xlu0 %v332, 96
    %v336 = vpop.permute.xlu0 %335
    %v338 = vmul.f32 %v333, %v336
    %339 = vrot.lane.b32.xlu0 %v147, 32
    %v340 = vpop.permute.xlu0 %339
    %v342 = vmul.f32 %v321, %v340
    %v343 = vadd.f32 %v338, %v342
    %v344 = vtanh.pop %v313
    %346 = vrot.lane.b32.xlu0 %v313, 96
    %v347 = vpop.permute.xlu0 %346
    %v349 = vmax.f32 %v311, %v347
    %350 = vrot.lane.b32.xlu0 %v313, 64
    %v351 = vpop.permute.xlu0 %350
    %v353 = vmax.f32 %v349, %v351
    %v354 = vsub.f32 %v311, %v353
    %v355 = vmul.f32 %v354, 1.442695
    %v356 = vpow.pop %v355
    %358 = vrot.lane.b32.xlu0 %v353, 32
    %v359 = vpop.permute.xlu0 %358
    %v361 = vsub.f32 %v313, %v359
    %v362 = vmul.f32 %v361, 1.442695
    %v363 = vpow.pop %v362
    %364 = vrot.lane.b32.xlu0 %v353, 64
    %v365 = vpop.permute.xlu0 %364
    %v367 = vsub.f32 %v313, %v365
    %v368 = vmul.f32 %v367, 1.442695
    %v369 = vpow.pop %v368
    %371 = vrot.lane.b32.xlu0 %v363, 96
    %v372 = vpop.permute.xlu0 %371
    %v374 = vadd.f32 %v356, %v372
    %376 = vrot.lane.b32.xlu0 %v369, 64
    %v377 = vpop.permute.xlu0 %376
    %v379 = vadd.f32 %v374, %v377
    %v380 = vrcp.pop %v379
    %v381 = vmul.f32 %v356, %v380
    %383 = vrot.lane.b32.xlu0 %v380, 32
    %v384 = vpop.permute.xlu0 %383
    %v386 = vmul.f32 %v363, %v384
    %387 = vrot.lane.b32.xlu0 %v380, 64
    %v388 = vpop.permute.xlu0 %387
    %v390 = vmul.f32 %v369, %v388
    %392 = vrot.lane.b32.xlu0 %v381, 32
    %v393 = vpop.permute.xlu0 %392
    %vm394 = vcmask 15360
    %v396 = vsel %vm394, %v92, 0
    %v399 = vsel %vm394, %v93, 0
    %vm401 = vcmask 1041408
    %v402 = vsel %vm401, %v393, 0
    %404 = vmatprep.subr.mxu0 0.0
    %405 = vmatpush1.msra.mxu0 0.0
    %406 = vmatprep.subr.mxu0 0.0
    %407 = vmatpush1.msra.mxu0 0.0
    %408 = vmatprep.subr.mxu0 0.0
    %409 = vmatpush1.msra.mxu0 0.0
    %410 = vmatprep.subr.mxu0 0.0
    %411 = vmatpush1.msra.mxu0 0.0
    %412 = vmatprep.subr.mxu0 0.0
    %413 = vmatpush1.msra.mxu0 0.0
    %414 = vmatprep.subr.mxu0 0.0
    %415 = vmatpush1.msra.mxu0 0.0
    %416 = vmatprep.subr.mxu0 0.0
    %417 = vmatpush1.msra.mxu0 0.0
    %418 = vmatprep.subr.mxu0 0.0
    %419 = vmatpush1.msra.mxu0 0.0
    %420 = vmatprep.subr.mxu0 0.0
    %421 = vmatpush1.msra.mxu0 0.0
    %422 = vmatprep.subr.mxu0 0.0
    %423 = vmatpush1.msra.mxu0 0.0
    %424 = vmatprep.subr.mxu0 0.0
    %425 = vmatpush1.msra.mxu0 0.0
    %426 = vmatprep.subr.mxu0 0.0
    %427 = vmatpush1.msra.mxu0 0.0
    %428 = vmatprep.subr.mxu0 0.0
    %429 = vmatpush1.msra.mxu0 0.0
    %430 = vmatprep.subr.mxu0 0.0
    %431 = vmatpush1.msra.mxu0 0.0
    %432 = vmatprep.subr.mxu0 0.0
    %433 = vmatpush1.msra.mxu0 0.0
    %434 = vmatprep.subr.mxu0 0.0
    %435 = vmatpush1.msra.mxu0 %v402
    %436 = vmatprep.subr.mxu0 0.0
    %437 = vmatpush2.msra.mxu0 0.0
    %438 = vmatprep.subr.mxu0 0.0
    %439 = vmatpush2.msra.mxu0 0.0
    %440 = vmatprep.subr.mxu0 0.0
    %441 = vmatpush2.msra.mxu0 0.0
    %442 = vmatprep.subr.mxu0 0.0
    %443 = vmatpush2.msra.mxu0 0.0
    %444 = vmatprep.subr.mxu0 0.0
    %445 = vmatpush2.msra.mxu0 0.0
    %446 = vmatprep.subr.mxu0 0.0
    %447 = vmatpush2.msra.mxu0 0.0
    %448 = vmatprep.subr.mxu0 0.0
    %449 = vmatpush2.msra.mxu0 0.0
    %450 = vmatprep.subr.mxu0 0.0
    %451 = vmatpush2.msra.mxu0 0.0
    %452 = vmatprep.subr.mxu0 0.0
    %453 = vmatpush2.msra.mxu0 0.0
    %454 = vmatprep.subr.mxu0 0.0
    %455 = vmatpush2.msra.mxu0 0.0
    %456 = vmatprep.subr.mxu0 0.0
    %457 = vmatpush2.msra.mxu0 0.0
    %458 = vmatprep.subr.mxu0 0.0
    %459 = vmatpush2.msra.mxu0 0.0
    %460 = vmatprep.subr.mxu0 0.0
    %461 = vmatpush2.msra.mxu0 0.0
    %462 = vmatprep.subr.mxu0 0.0
    %463 = vmatpush2.msra.mxu0 0.0
    %464 = vmatprep.subr.mxu0 0.0
    %465 = vmatpush2.msra.mxu0 0.0
    %466 = vmatprep.subr.mxu0 0.0
    %467 = vmatpush2.msra.mxu0 0.0
    %468 = vmatprep.mubr.f32.mxu0 0.0
    %469 = vmatmul.mubr.f32.gmra.mxu0 %v396
    %v470 = vpop.f32.mrf.mxu0
    %v471 = vadd.f32 0.0, %v470
    %v472 = vpop.f32.mrf.mxu0
    %473 = vmatprep.mubr.f32.mxu0 0.0
    %474 = vmatmul.mubr.f32.gmra.mxu0 %v399
    %v475 = vpop.f32.mrf.mxu0
    %v476 = vadd.f32 0.0, %v475
    %v477 = vpop.f32.mrf.mxu0
    %478 = vdwg.mxu0
    %v480 = vsel %vm401, %v386, 0
    %482 = vmatprep.subr.mxu0 0.0
    %483 = vmatpush1.msra.mxu0 0.0
    %484 = vmatprep.subr.mxu0 0.0
    %485 = vmatpush1.msra.mxu0 0.0
    %486 = vmatprep.subr.mxu0 0.0
    %487 = vmatpush1.msra.mxu0 0.0
    %488 = vmatprep.subr.mxu0 0.0
    %489 = vmatpush1.msra.mxu0 0.0
    %490 = vmatprep.subr.mxu0 0.0
    %491 = vmatpush1.msra.mxu0 0.0
    %492 = vmatprep.subr.mxu0 0.0
    %493 = vmatpush1.msra.mxu0 0.0
    %494 = vmatprep.subr.mxu0 0.0
    %495 = vmatpush1.msra.mxu0 0.0
    %496 = vmatprep.subr.mxu0 0.0
    %497 = vmatpush1.msra.mxu0 0.0
    %498 = vmatprep.subr.mxu0 0.0
    %499 = vmatpush1.msra.mxu0 0.0
    %500 = vmatprep.subr.mxu0 0.0
    %501 = vmatpush1.msra.mxu0 0.0
    %502 = vmatprep.subr.mxu0 0.0
    %503 = vmatpush1.msra.mxu0 0.0
    %504 = vmatprep.subr.mxu0 0.0
    %505 = vmatpush1.msra.mxu0 0.0
    %506 = vmatprep.subr.mxu0 0.0
    %507 = vmatpush1.msra.mxu0 0.0
    %508 = vmatprep.subr.mxu0 0.0
    %509 = vmatpush1.msra.mxu0 0.0
    %510 = vmatprep.subr.mxu0 0.0
    %511 = vmatpush1.msra.mxu0 0.0
    %512 = vmatprep.subr.mxu0 0.0
    %513 = vmatpush1.msra.mxu0 %v480
    %514 = vmatprep.subr.mxu0 0.0
    %515 = vmatpush2.msra.mxu0 0.0
    %516 = vmatprep.subr.mxu0 0.0
    %517 = vmatpush2.msra.mxu0 0.0
    %518 = vmatprep.subr.mxu0 0.0
    %519 = vmatpush2.msra.mxu0 0.0
    %520 = vmatprep.subr.mxu0 0.0
    %521 = vmatpush2.msra.mxu0 0.0
    %522 = vmatprep.subr.mxu0 0.0
    %523 = vmatpush2.msra.mxu0 0.0
    %524 = vmatprep.subr.mxu0 0.0
    %525 = vmatpush2.msra.mxu0 0.0
    %526 = vmatprep.subr.mxu0 0.0
    %527 = vmatpush2.msra.mxu0 0.0
    %528 = vmatprep.subr.mxu0 0.0
    %529 = vmatpush2.msra.mxu0 0.0
    %530 = vmatprep.subr.mxu0 0.0
    %531 = vmatpush2.msra.mxu0 0.0
    %532 = vmatprep.subr.mxu0 0.0
    %533 = vmatpush2.msra.mxu0 0.0
    %534 = vmatprep.subr.mxu0 0.0
    %535 = vmatpush2.msra.mxu0 0.0
    %536 = vmatprep.subr.mxu0 0.0
    %537 = vmatpush2.msra.mxu0 0.0
    %538 = vmatprep.subr.mxu0 0.0
    %539 = vmatpush2.msra.mxu0 0.0
    %540 = vmatprep.subr.mxu0 0.0
    %541 = vmatpush2.msra.mxu0 0.0
    %542 = vmatprep.subr.mxu0 0.0
    %543 = vmatpush2.msra.mxu0 0.0
    %544 = vmatprep.subr.mxu0 0.0
    %545 = vmatpush2.msra.mxu0 0.0
    %546 = vmatprep.mubr.f32.mxu0 0.0
    %547 = vmatmul.mubr.f32.gmra.mxu0 %v396
    %v548 = vpop.f32.mrf.mxu0
    %v549 = vadd.f32 0.0, %v548
    %v550 = vpop.f32.mrf.mxu0
    %551 = vmatprep.mubr.f32.mxu0 0.0
    %552 = vmatmul.mubr.f32.gmra.mxu0 %v399
    %v553 = vpop.f32.mrf.mxu0
    %v554 = vadd.f32 0.0, %v553
    %v555 = vpop.f32.mrf.mxu0
    %556 = vdwg.mxu0
    %558 = vrot.lane.b32.xlu0 %v390, 96
    %v559 = vpop.permute.xlu0 %558
    %v560 = vsel %vm401, %v559, 0
    %562 = vmatprep.subr.mxu0 0.0
    %563 = vmatpush1.msra.mxu0 0.0
    %564 = vmatprep.subr.mxu0 0.0
    %565 = vmatpush1.msra.mxu0 0.0
    %566 = vmatprep.subr.mxu0 0.0
    %567 = vmatpush1.msra.mxu0 0.0
    %568 = vmatprep.subr.mxu0 0.0
    %569 = vmatpush1.msra.mxu0 0.0
    %570 = vmatprep.subr.mxu0 0.0
    %571 = vmatpush1.msra.mxu0 0.0
    %572 = vmatprep.subr.mxu0 0.0
    %573 = vmatpush1.msra.mxu0 0.0
    %574 = vmatprep.subr.mxu0 0.0
    %575 = vmatpush1.msra.mxu0 0.0
    %576 = vmatprep.subr.mxu0 0.0
    %577 = vmatpush1.msra.mxu0 0.0
    %578 = vmatprep.subr.mxu0 0.0
    %579 = vmatpush1.msra.mxu0 0.0
    %580 = vmatprep.subr.mxu0 0.0
    %581 = vmatpush1.msra.mxu0 0.0
    %582 = vmatprep.subr.mxu0 0.0
    %583 = vmatpush1.msra.mxu0 0.0
    %584 = vmatprep.subr.mxu0 0.0
    %585 = vmatpush1.msra.mxu0 0.0
    %586 = vmatprep.subr.mxu0 0.0
    %587 = vmatpush1.msra.mxu0 0.0
    %588 = vmatprep.subr.mxu0 0.0
    %589 = vmatpush1.msra.mxu0 0.0
    %590 = vmatprep.subr.mxu0 0.0
    %591 = vmatpush1.msra.mxu0 0.0
    %592 = vmatprep.subr.mxu0 0.0
    %593 = vmatpush1.msra.mxu0 %v560
    %594 = vmatprep.subr.mxu0 0.0
    %595 = vmatpush2.msra.mxu0 0.0
    %596 = vmatprep.subr.mxu0 0.0
    %597 = vmatpush2.msra.mxu0 0.0
    %598 = vmatprep.subr.mxu0 0.0
    %599 = vmatpush2.msra.mxu0 0.0
    %600 = vmatprep.subr.mxu0 0.0
    %601 = vmatpush2.msra.mxu0 0.0
    %602 = vmatprep.subr.mxu0 0.0
    %603 = vmatpush2.msra.mxu0 0.0
    %604 = vmatprep.subr.mxu0 0.0
    %605 = vmatpush2.msra.mxu0 0.0
    %606 = vmatprep.subr.mxu0 0.0
    %607 = vmatpush2.msra.mxu0 0.0
    %608 = vmatprep.subr.mxu0 0.0
    %609 = vmatpush2.msra.mxu0 0.0
    %610 = vmatprep.subr.mxu0 0.0
    %611 = vmatpush2.msra.mxu0 0.0
    %612 = vmatprep.subr.mxu0 0.0
    %613 = vmatpush2.msra.mxu0 0.0
    %614 = vmatprep.subr.mxu0 0.0
    %615 = vmatpush2.msra.mxu0 0.0
    %616 = vmatprep.subr.mxu0 0.0
    %617 = vmatpush2.msra.mxu0 0.0
    %618 = vmatprep.subr.mxu0 0.0
    %619 = vmatpush2.msra.mxu0 0.0
    %620 = vmatprep.subr.mxu0 0.0
    %621 = vmatpush2.msra.mxu0 0.0
    %622 = vmatprep.subr.mxu0 0.0
    %623 = vmatpush2.msra.mxu0 0.0
    %624 = vmatprep.subr.mxu0 0.0
    %625 = vmatpush2.msra.mxu0 0.0
    %626 = vmatprep.mubr.f32.mxu0 0.0
    %627 = vmatmul.mubr.f32.gmra.mxu0 %v396
    %v628 = vpop.f32.mrf.mxu0
    %v629 = vadd.f32 0.0, %v628
    %v630 = vpop.f32.mrf.mxu0
    %631 = vmatprep.mubr.f32.mxu0 0.0
    %632 = vmatmul.mubr.f32.gmra.mxu0 %v399
    %v633 = vpop.f32.mrf.mxu0
    %v634 = vadd.f32 0.0, %v633
    %v635 = vpop.f32.mrf.mxu0
    %636 = vdwg.mxu0
    %638 = vrot.lane.b32.xlu0 %v344, 32
    %v639 = vpop.permute.xlu0 %638
    %v641 = vmul.f32 %v381, %v639
    %643 = vrot.lane.b32.xlu0 %v641, 32
    %v644 = vpop.permute.xlu0 %643
    %v645 = vsel %vm401, %v644, 0
    %647 = vmatprep.subr.mxu0 0.0
    %648 = vmatpush1.msra.mxu0 0.0
    %649 = vmatprep.subr.mxu0 0.0
    %650 = vmatpush1.msra.mxu0 0.0
    %651 = vmatprep.subr.mxu0 0.0
    %652 = vmatpush1.msra.mxu0 0.0
    %653 = vmatprep.subr.mxu0 0.0
    %654 = vmatpush1.msra.mxu0 0.0
    %655 = vmatprep.subr.mxu0 0.0
    %656 = vmatpush1.msra.mxu0 0.0
    %657 = vmatprep.subr.mxu0 0.0
    %658 = vmatpush1.msra.mxu0 0.0
    %659 = vmatprep.subr.mxu0 0.0
    %660 = vmatpush1.msra.mxu0 0.0
    %661 = vmatprep.subr.mxu0 0.0
    %662 = vmatpush1.msra.mxu0 0.0
    %663 = vmatprep.subr.mxu0 0.0
    %664 = vmatpush1.msra.mxu0 0.0
    %665 = vmatprep.subr.mxu0 0.0
    %666 = vmatpush1.msra.mxu0 0.0
    %667 = vmatprep.subr.mxu0 0.0
    %668 = vmatpush1.msra.mxu0 0.0
    %669 = vmatprep.subr.mxu0 0.0
    %670 = vmatpush1.msra.mxu0 0.0
    %671 = vmatprep.subr.mxu0 0.0
    %672 = vmatpush1.msra.mxu0 0.0
    %673 = vmatprep.subr.mxu0 0.0
    %674 = vmatpush1.msra.mxu0 0.0
    %675 = vmatprep.subr.mxu0 0.0
    %676 = vmatpush1.msra.mxu0 0.0
    %677 = vmatprep.subr.mxu0 0.0
    %678 = vmatpush1.msra.mxu0 %v645
    %679 = vmatprep.subr.mxu0 0.0
    %680 = vmatpush2.msra.mxu0 0.0
    %681 = vmatprep.subr.mxu0 0.0
    %682 = vmatpush2.msra.mxu0 0.0
    %683 = vmatprep.subr.mxu0 0.0
    %684 = vmatpush2.msra.mxu0 0.0
    %685 = vmatprep.subr.mxu0 0.0
    %686 = vmatpush2.msra.mxu0 0.0
    %687 = vmatprep.subr.mxu0 0.0
    %688 = vmatpush2.msra.mxu0 0.0
    %689 = vmatprep.subr.mxu0 0.0
    %690 = vmatpush2.msra.mxu0 0.0
    %691 = vmatprep.subr.mxu0 0.0
    %692 = vmatpush2.msra.mxu0 0.0
    %693 = vmatprep.subr.mxu0 0.0
    %694 = vmatpush2.msra.mxu0 0.0
    %695 = vmatprep.subr.mxu0 0.0
    %696 = vmatpush2.msra.mxu0 0.0
    %697 = vmatprep.subr.mxu0 0.0
    %698 = vmatpush2.msra.mxu0 0.0
    %699 = vmatprep.subr.mxu0 0.0
    %700 = vmatpush2.msra.mxu0 0.0
    %701 = vmatprep.subr.mxu0 0.0
    %702 = vmatpush2.msra.mxu0 0.0
    %703 = vmatprep.subr.mxu0 0.0
    %704 = vmatpush2.msra.mxu0 0.0
    %705 = vmatprep.subr.mxu0 0.0
    %706 = vmatpush2.msra.mxu0 0.0
    %707 = vmatprep.subr.mxu0 0.0
    %708 = vmatpush2.msra.mxu0 0.0
    %709 = vmatprep.subr.mxu0 0.0
    %710 = vmatpush2.msra.mxu0 0.0
    %711 = vmatprep.mubr.f32.mxu0 0.0
    %712 = vmatmul.mubr.f32.gmra.mxu0 %v396
    %v713 = vpop.f32.mrf.mxu0
    %v714 = vadd.f32 0.0, %v713
    %v715 = vpop.f32.mrf.mxu0
    %716 = vmatprep.mubr.f32.mxu0 0.0
    %717 = vmatmul.mubr.f32.gmra.mxu0 %v399
    %v718 = vpop.f32.mrf.mxu0
    %v719 = vadd.f32 0.0, %v718
    %v720 = vpop.f32.mrf.mxu0
    %721 = vdwg.mxu0
    %722 = vst.msk [vmem:[#allocation2 + $0x8] sm:$0xff] %vm142, %v148
    %723 = vst.msk [vmem:[#allocation2 + $0x10] sm:$0xff] %vm142, %v149
    %v724 = vld [vmem:[#allocation2 + $0x7] sm:$0xff]
    %v725 = vld [vmem:[#allocation2 + $0xf] sm:$0xff]
    %v726 = vld [vmem:[#allocation2 + $0x9] sm:$0xff]
    %v727 = vld [vmem:[#allocation2 + $0x11] sm:$0xff]
    %v728 = vmul.f32 %v471, %v724
    %v729 = vmul.f32 %v476, %v725
    %v730 = vmul.f32 %v549, %v726
    %v731 = vmul.f32 %v554, %v727
    %v732 = vadd.f32 %v728, %v730
    %v733 = vadd.f32 %v729, %v731
    %v734 = vmul.f32 %v629, %v148
    %v735 = vmul.f32 %v634, %v149
    %v736 = vadd.f32 %v732, %v734
    %v737 = vadd.f32 %v733, %v735
    %v738 = vmul.f32 %v123, %v714
    %v739 = vmul.f32 %v124, %v719
    %v740 = vadd.f32 %v738, %v140
    %v741 = vadd.f32 %v739, %v141
    %v742 = vmul.f32 %v131, %v736
    %v743 = vmul.f32 %v132, %v737
    %v744 = vadd.f32 %v740, %v742
    %v745 = vadd.f32 %v741, %v743
    %747 = vrot.lane.b32.xlu0 %v343, 96
    %v748 = vpop.permute.xlu0 %747
    %vm750 = vcmask 254976
    %751 = vst.msk [vmem:[#allocation9] sm:$0x3] %vm750, %v748
    %s752 = scalar_lea.vmem %s0, 2
    %v753 = vld [vmem:[%s752] sm:$0x3]
    %v755 = vsel %vm142, %v753, 0
    %757 = vmatprep.subr.mxu0 0.0
    %758 = vmatpush1.msra.mxu0 0.0
    %759 = vmatprep.subr.mxu0 0.0
    %760 = vmatpush1.msra.mxu0 0.0
    %761 = vmatprep.subr.mxu0 0.0
    %762 = vmatpush1.msra.mxu0 0.0
    %763 = vmatprep.subr.mxu0 0.0
    %764 = vmatpush1.msra.mxu0 0.0
    %765 = vmatprep.subr.mxu0 0.0
    %766 = vmatpush1.msra.mxu0 0.0
    %767 = vmatprep.subr.mxu0 0.0
    %768 = vmatpush1.msra.mxu0 0.0
    %769 = vmatprep.subr.mxu0 0.0
    %770 = vmatpush1.msra.mxu0 0.0
    %771 = vmatprep.subr.mxu0 0.0
    %772 = vmatpush1.msra.mxu0 0.0
    %773 = vmatprep.subr.mxu0 0.0
    %774 = vmatpush1.msra.mxu0 0.0
    %775 = vmatprep.subr.mxu0 0.0
    %776 = vmatpush1.msra.mxu0 0.0
    %777 = vmatprep.subr.mxu0 0.0
    %778 = vmatpush1.msra.mxu0 0.0
    %779 = vmatprep.subr.mxu0 0.0
    %780 = vmatpush1.msra.mxu0 0.0
    %781 = vmatprep.subr.mxu0 0.0
    %782 = vmatpush1.msra.mxu0 %v81
    %783 = vmatprep.subr.mxu0 0.0
    %784 = vmatpush1.msra.mxu0 %v80
    %785 = vmatprep.subr.mxu0 0.0
    %786 = vmatpush1.msra.mxu0 %v79
    %787 = vmatprep.subr.mxu0 0.0
    %788 = vmatpush1.msra.mxu0 %v78
    %789 = vmatprep.subr.mxu0 0.0
    %790 = vmatpush2.msra.mxu0 0.0
    %791 = vmatprep.subr.mxu0 0.0
    %792 = vmatpush2.msra.mxu0 0.0
    %793 = vmatprep.subr.mxu0 0.0
    %794 = vmatpush2.msra.mxu0 0.0
    %795 = vmatprep.subr.mxu0 0.0
    %796 = vmatpush2.msra.mxu0 0.0
    %797 = vmatprep.subr.mxu0 0.0
    %798 = vmatpush2.msra.mxu0 0.0
    %799 = vmatprep.subr.mxu0 0.0
    %800 = vmatpush2.msra.mxu0 0.0
    %801 = vmatprep.subr.mxu0 0.0
    %802 = vmatpush2.msra.mxu0 0.0
    %803 = vmatprep.subr.mxu0 0.0
    %804 = vmatpush2.msra.mxu0 0.0
    %805 = vmatprep.subr.mxu0 0.0
    %806 = vmatpush2.msra.mxu0 0.0
    %807 = vmatprep.subr.mxu0 0.0
    %808 = vmatpush2.msra.mxu0 0.0
    %809 = vmatprep.subr.mxu0 0.0
    %810 = vmatpush2.msra.mxu0 0.0
    %811 = vmatprep.subr.mxu0 0.0
    %812 = vmatpush2.msra.mxu0 0.0
    %813 = vmatprep.subr.mxu0 0.0
    %814 = vmatpush2.msra.mxu0 0.0
    %815 = vmatprep.subr.mxu0 0.0
    %816 = vmatpush2.msra.mxu0 0.0
    %817 = vmatprep.subr.mxu0 0.0
    %818 = vmatpush2.msra.mxu0 0.0
    %819 = vmatprep.subr.mxu0 0.0
    %820 = vmatpush2.msra.mxu0 0.0
    %821 = vmatprep.mubr.f32.mxu0 0.0
    %822 = vmatmul.mubr.f32.gmra.mxu0 %v755
    %v823 = vpop.f32.mrf.mxu0
    %v824 = vadd.f32 %v155, %v823
    %v825 = vpop.f32.mrf.mxu0
    %826 = vdwg.mxu0
    %v827 = vsel %vm142, %v748, 0
    %829 = vmatprep.subr.mxu0 0.0
    %830 = vmatpush1.msra.mxu0 0.0
    %831 = vmatprep.subr.mxu0 0.0
    %832 = vmatpush1.msra.mxu0 0.0
    %833 = vmatprep.subr.mxu0 0.0
    %834 = vmatpush1.msra.mxu0 0.0
    %835 = vmatprep.subr.mxu0 0.0
    %836 = vmatpush1.msra.mxu0 0.0
    %837 = vmatprep.subr.mxu0 0.0
    %838 = vmatpush1.msra.mxu0 0.0
    %839 = vmatprep.subr.mxu0 0.0
    %840 = vmatpush1.msra.mxu0 0.0
    %841 = vmatprep.subr.mxu0 0.0
    %842 = vmatpush1.msra.mxu0 0.0
    %843 = vmatprep.subr.mxu0 0.0
    %844 = vmatpush1.msra.mxu0 0.0
    %845 = vmatprep.subr.mxu0 0.0
    %846 = vmatpush1.msra.mxu0 0.0
    %847 = vmatprep.subr.mxu0 0.0
    %848 = vmatpush1.msra.mxu0 0.0
    %849 = vmatprep.subr.mxu0 0.0
    %850 = vmatpush1.msra.mxu0 0.0
    %851 = vmatprep.subr.mxu0 0.0
    %852 = vmatpush1.msra.mxu0 0.0
    %853 = vmatprep.subr.mxu0 %v90
    %854 = vmatpush1.msra.mxu0 %v89
    %855 = vmatprep.subr.mxu0 %v88
    %856 = vmatpush1.msra.mxu0 %v87
    %857 = vmatprep.subr.mxu0 %v86
    %858 = vmatpush1.msra.mxu0 %v85
    %859 = vmatprep.subr.mxu0 %v84
    %860 = vmatpush1.msra.mxu0 %v83
    %861 = vmatprep.subr.mxu0 0.0
    %862 = vmatpush2.msra.mxu0 0.0
    %863 = vmatprep.subr.mxu0 0.0
    %864 = vmatpush2.msra.mxu0 0.0
    %865 = vmatprep.subr.mxu0 0.0
    %866 = vmatpush2.msra.mxu0 0.0
    %867 = vmatprep.subr.mxu0 0.0
    %868 = vmatpush2.msra.mxu0 0.0
    %869 = vmatprep.subr.mxu0 0.0
    %870 = vmatpush2.msra.mxu0 0.0
    %871 = vmatprep.subr.mxu0 0.0
    %872 = vmatpush2.msra.mxu0 0.0
    %873 = vmatprep.subr.mxu0 0.0
    %874 = vmatpush2.msra.mxu0 0.0
    %875 = vmatprep.subr.mxu0 0.0
    %876 = vmatpush2.msra.mxu0 0.0
    %877 = vmatprep.subr.mxu0 0.0
    %878 = vmatpush2.msra.mxu0 0.0
    %879 = vmatprep.subr.mxu0 0.0
    %880 = vmatpush2.msra.mxu0 0.0
    %881 = vmatprep.subr.mxu0 0.0
    %882 = vmatpush2.msra.mxu0 0.0
    %883 = vmatprep.subr.mxu0 0.0
    %884 = vmatpush2.msra.mxu0 0.0
    %885 = vmatprep.subr.mxu0 0.0
    %886 = vmatpush2.msra.mxu0 0.0
    %887 = vmatprep.subr.mxu0 0.0
    %888 = vmatpush2.msra.mxu0 0.0
    %889 = vmatprep.subr.mxu0 0.0
    %890 = vmatpush2.msra.mxu0 0.0
    %891 = vmatprep.subr.mxu0 0.0
    %892 = vmatpush2.msra.mxu0 0.0
    %893 = vmatprep.mubr.f32.mxu0 0.0
    %894 = vmatmul.mubr.f32.gmra.mxu0 %v827
    %v895 = vpop.f32.mrf.mxu0
    %v896 = vadd.f32 %v234, %v895
    %v897 = vpop.f32.mrf.mxu0
    %v898 = vadd.f32 %v238, %v897
    %899 = vdwg.mxu0
    %v900 = vadd.f32 %v824, %v896
    %v901 = vsub.f32 0.0, %v900
    %v902 = vmul.f32 %v901, 1.442695
    %v903 = vpow.pop %v902
    %v904 = vadd.f32 %v903, 1.0
    %v905 = vrcp.pop %v904
    %v906 = vmul.f32 1.0, %v905
    %908 = vrot.lane.b32.xlu0 %v896, 64
    %v909 = vpop.permute.xlu0 %908
    %v911 = vmul.f32 %v906, %v909
    %913 = vrot.lane.b32.xlu0 %v911, 64
    %v914 = vpop.permute.xlu0 %913
    %v916 = vadd.f32 %v824, %v914
    %v917 = vtanh.pop %v916
    %v918 = vsub.f32 1.0, %v906
    %920 = vrot.lane.b32.xlu0 %v917, 96
    %v921 = vpop.permute.xlu0 %920
    %v923 = vmul.f32 %v918, %v921
    %v924 = vmul.f32 %v906, %v343
    %v925 = vadd.f32 %v923, %v924
    %v926 = vtanh.pop %v898
    %928 = vrot.lane.b32.xlu0 %v898, 96
    %v929 = vpop.permute.xlu0 %928
    %v931 = vmax.f32 %v896, %v929
    %932 = vrot.lane.b32.xlu0 %v898, 64
    %v933 = vpop.permute.xlu0 %932
    %v935 = vmax.f32 %v931, %v933
    %v936 = vsub.f32 %v896, %v935
    %v937 = vmul.f32 %v936, 1.442695
    %v938 = vpow.pop %v937
    %940 = vrot.lane.b32.xlu0 %v935, 32
    %v941 = vpop.permute.xlu0 %940
    %v943 = vsub.f32 %v898, %v941
    %v944 = vmul.f32 %v943, 1.442695
    %v945 = vpow.pop %v944
    %946 = vrot.lane.b32.xlu0 %v935, 64
    %v947 = vpop.permute.xlu0 %946
    %v949 = vsub.f32 %v898, %v947
    %v950 = vmul.f32 %v949, 1.442695
    %v951 = vpow.pop %v950
    %953 = vrot.lane.b32.xlu0 %v945, 96
    %v954 = vpop.permute.xlu0 %953
    %v956 = vadd.f32 %v938, %v954
    %958 = vrot.lane.b32.xlu0 %v951, 64
    %v959 = vpop.permute.xlu0 %958
    %v961 = vadd.f32 %v956, %v959
    %v962 = vrcp.pop %v961
    %v963 = vmul.f32 %v938, %v962
    %965 = vrot.lane.b32.xlu0 %v962, 32
    %v966 = vpop.permute.xlu0 %965
    %v968 = vmul.f32 %v945, %v966
    %969 = vrot.lane.b32.xlu0 %v962, 64
    %v970 = vpop.permute.xlu0 %969
    %v972 = vmul.f32 %v951, %v970
    %974 = vrot.lane.b32.xlu0 %v963, 32
    %v975 = vpop.permute.xlu0 %974
    %v976 = vsel %vm401, %v975, 0
    %978 = vmatprep.subr.mxu0 0.0
    %979 = vmatpush1.msra.mxu0 0.0
    %980 = vmatprep.subr.mxu0 0.0
    %981 = vmatpush1.msra.mxu0 0.0
    %982 = vmatprep.subr.mxu0 0.0
    %983 = vmatpush1.msra.mxu0 0.0
    %984 = vmatprep.subr.mxu0 0.0
    %985 = vmatpush1.msra.mxu0 0.0
    %986 = vmatprep.subr.mxu0 0.0
    %987 = vmatpush1.msra.mxu0 0.0
    %988 = vmatprep.subr.mxu0 0.0
    %989 = vmatpush1.msra.mxu0 0.0
    %990 = vmatprep.subr.mxu0 0.0
    %991 = vmatpush1.msra.mxu0 0.0
    %992 = vmatprep.subr.mxu0 0.0
    %993 = vmatpush1.msra.mxu0 0.0
    %994 = vmatprep.subr.mxu0 0.0
    %995 = vmatpush1.msra.mxu0 0.0
    %996 = vmatprep.subr.mxu0 0.0
    %997 = vmatpush1.msra.mxu0 0.0
    %998 = vmatprep.subr.mxu0 0.0
    %999 = vmatpush1.msra.mxu0 0.0
    %1000 = vmatprep.subr.mxu0 0.0
    %1001 = vmatpush1.msra.mxu0 0.0
    %1002 = vmatprep.subr.mxu0 0.0
    %1003 = vmatpush1.msra.mxu0 0.0
    %1004 = vmatprep.subr.mxu0 0.0
    %1005 = vmatpush1.msra.mxu0 0.0
    %1006 = vmatprep.subr.mxu0 0.0
    %1007 = vmatpush1.msra.mxu0 0.0
    %1008 = vmatprep.subr.mxu0 0.0
    %1009 = vmatpush1.msra.mxu0 %v976
    %1010 = vmatprep.subr.mxu0 0.0
    %1011 = vmatpush2.msra.mxu0 0.0
    %1012 = vmatprep.subr.mxu0 0.0
    %1013 = vmatpush2.msra.mxu0 0.0
    %1014 = vmatprep.subr.mxu0 0.0
    %1015 = vmatpush2.msra.mxu0 0.0
    %1016 = vmatprep.subr.mxu0 0.0
    %1017 = vmatpush2.msra.mxu0 0.0
    %1018 = vmatprep.subr.mxu0 0.0
    %1019 = vmatpush2.msra.mxu0 0.0
    %1020 = vmatprep.subr.mxu0 0.0
    %1021 = vmatpush2.msra.mxu0 0.0
    %1022 = vmatprep.subr.mxu0 0.0
    %1023 = vmatpush2.msra.mxu0 0.0
    %1024 = vmatprep.subr.mxu0 0.0
    %1025 = vmatpush2.msra.mxu0 0.0
    %1026 = vmatprep.subr.mxu0 0.0
    %1027 = vmatpush2.msra.mxu0 0.0
    %1028 = vmatprep.subr.mxu0 0.0
    %1029 = vmatpush2.msra.mxu0 0.0
    %1030 = vmatprep.subr.mxu0 0.0
    %1031 = vmatpush2.msra.mxu0 0.0
    %1032 = vmatprep.subr.mxu0 0.0
    %1033 = vmatpush2.msra.mxu0 0.0
    %1034 = vmatprep.subr.mxu0 0.0
    %1035 = vmatpush2.msra.mxu0 0.0
    %1036 = vmatprep.subr.mxu0 0.0
    %1037 = vmatpush2.msra.mxu0 0.0
    %1038 = vmatprep.subr.mxu0 0.0
    %1039 = vmatpush2.msra.mxu0 0.0
    %1040 = vmatprep.subr.mxu0 0.0
    %1041 = vmatpush2.msra.mxu0 0.0
    %1042 = vmatprep.mubr.f32.mxu0 0.0
    %1043 = vmatmul.mubr.f32.gmra.mxu0 %v396
    %v1044 = vpop.f32.mrf.mxu0
    %v1045 = vadd.f32 0.0, %v1044
    %v1046 = vpop.f32.mrf.mxu0
    %1047 = vmatprep.mubr.f32.mxu0 0.0
    %1048 = vmatmul.mubr.f32.gmra.mxu0 %v399
    %v1049 = vpop.f32.mrf.mxu0
    %v1050 = vadd.f32 0.0, %v1049
    %v1051 = vpop.f32.mrf.mxu0
    %1052 = vdwg.mxu0
    %v1054 = vsel %vm401, %v968, 0
    %1056 = vmatprep.subr.mxu0 0.0
    %1057 = vmatpush1.msra.mxu0 0.0
    %1058 = vmatprep.subr.mxu0 0.0
    %1059 = vmatpush1.msra.mxu0 0.0
    %1060 = vmatprep.subr.mxu0 0.0
    %1061 = vmatpush1.msra.mxu0 0.0
    %1062 = vmatprep.subr.mxu0 0.0
    %1063 = vmatpush1.msra.mxu0 0.0
    %1064 = vmatprep.subr.mxu0 0.0
    %1065 = vmatpush1.msra.mxu0 0.0
    %1066 = vmatprep.subr.mxu0 0.0
    %1067 = vmatpush1.msra.mxu0 0.0
    %1068 = vmatprep.subr.mxu0 0.0
    %1069 = vmatpush1.msra.mxu0 0.0
    %1070 = vmatprep.subr.mxu0 0.0
    %1071 = vmatpush1.msra.mxu0 0.0
    %1072 = vmatprep.subr.mxu0 0.0
    %1073 = vmatpush1.msra.mxu0 0.0
    %1074 = vmatprep.subr.mxu0 0.0
    %1075 = vmatpush1.msra.mxu0 0.0
    %1076 = vmatprep.subr.mxu0 0.0
    %1077 = vmatpush1.msra.mxu0 0.0
    %1078 = vmatprep.subr.mxu0 0.0
    %1079 = vmatpush1.msra.mxu0 0.0
    %1080 = vmatprep.subr.mxu0 0.0
    %1081 = vmatpush1.msra.mxu0 0.0
    %1082 = vmatprep.subr.mxu0 0.0
    %1083 = vmatpush1.msra.mxu0 0.0
    %1084 = vmatprep.subr.mxu0 0.0
    %1085 = vmatpush1.msra.mxu0 0.0
    %1086 = vmatprep.subr.mxu0 0.0
    %1087 = vmatpush1.msra.mxu0 %v1054
    %1088 = vmatprep.subr.mxu0 0.0
    %1089 = vmatpush2.msra.mxu0 0.0
    %1090 = vmatprep.subr.mxu0 0.0
    %1091 = vmatpush2.msra.mxu0 0.0
    %1092 = vmatprep.subr.mxu0 0.0
    %1093 = vmatpush2.msra.mxu0 0.0
    %1094 = vmatprep.subr.mxu0 0.0
    %1095 = vmatpush2.msra.mxu0 0.0
    %1096 = vmatprep.subr.mxu0 0.0
    %1097 = vmatpush2.msra.mxu0 0.0
    %1098 = vmatprep.subr.mxu0 0.0
    %1099 = vmatpush2.msra.mxu0 0.0
    %1100 = vmatprep.subr.mxu0 0.0
    %1101 = vmatpush2.msra.mxu0 0.0
    %1102 = vmatprep.subr.mxu0 0.0
    %1103 = vmatpush2.msra.mxu0 0.0
    %1104 = vmatprep.subr.mxu0 0.0
    %1105 = vmatpush2.msra.mxu0 0.0
    %1106 = vmatprep.subr.mxu0 0.0
    %1107 = vmatpush2.msra.mxu0 0.0
    %1108 = vmatprep.subr.mxu0 0.0
    %1109 = vmatpush2.msra.mxu0 0.0
    %1110 = vmatprep.subr.mxu0 0.0
    %1111 = vmatpush2.msra.mxu0 0.0
    %1112 = vmatprep.subr.mxu0 0.0
    %1113 = vmatpush2.msra.mxu0 0.0
    %1114 = vmatprep.subr.mxu0 0.0
    %1115 = vmatpush2.msra.mxu0 0.0
    %1116 = vmatprep.subr.mxu0 0.0
    %1117 = vmatpush2.msra.mxu0 0.0
    %1118 = vmatprep.subr.mxu0 0.0
    %1119 = vmatpush2.msra.mxu0 0.0
    %1120 = vmatprep.mubr.f32.mxu0 0.0
    %1121 = vmatmul.mubr.f32.gmra.mxu0 %v396
    %v1122 = vpop.f32.mrf.mxu0
    %v1123 = vadd.f32 0.0, %v1122
    %v1124 = vpop.f32.mrf.mxu0
    %1125 = vmatprep.mubr.f32.mxu0 0.0
    %1126 = vmatmul.mubr.f32.gmra.mxu0 %v399
    %v1127 = vpop.f32.mrf.mxu0
    %v1128 = vadd.f32 0.0, %v1127
    %v1129 = vpop.f32.mrf.mxu0
    %1130 = vdwg.mxu0
    %1132 = vrot.lane.b32.xlu0 %v972, 96
    %v1133 = vpop.permute.xlu0 %1132
    %v1134 = vsel %vm401, %v1133, 0
    %1136 = vmatprep.subr.mxu0 0.0
    %1137 = vmatpush1.msra.mxu0 0.0
    %1138 = vmatprep.subr.mxu0 0.0
    %1139 = vmatpush1.msra.mxu0 0.0
    %1140 = vmatprep.subr.mxu0 0.0
    %1141 = vmatpush1.msra.mxu0 0.0
    %1142 = vmatprep.subr.mxu0 0.0
    %1143 = vmatpush1.msra.mxu0 0.0
    %1144 = vmatprep.subr.mxu0 0.0
    %1145 = vmatpush1.msra.mxu0 0.0
    %1146 = vmatprep.subr.mxu0 0.0
    %1147 = vmatpush1.msra.mxu0 0.0
    %1148 = vmatprep.subr.mxu0 0.0
    %1149 = vmatpush1.msra.mxu0 0.0
    %1150 = vmatprep.subr.mxu0 0.0
    %1151 = vmatpush1.msra.mxu0 0.0
    %1152 = vmatprep.subr.mxu0 0.0
    %1153 = vmatpush1.msra.mxu0 0.0
    %1154 = vmatprep.subr.mxu0 0.0
    %1155 = vmatpush1.msra.mxu0 0.0
    %1156 = vmatprep.subr.mxu0 0.0
    %1157 = vmatpush1.msra.mxu0 0.0
    %1158 = vmatprep.subr.mxu0 0.0
    %1159 = vmatpush1.msra.mxu0 0.0
    %1160 = vmatprep.subr.mxu0 0.0
    %1161 = vmatpush1.msra.mxu0 0.0
    %1162 = vmatprep.subr.mxu0 0.0
    %1163 = vmatpush1.msra.mxu0 0.0
    %1164 = vmatprep.subr.mxu0 0.0
    %1165 = vmatpush1.msra.mxu0 0.0
    %1166 = vmatprep.subr.mxu0 0.0
    %1167 = vmatpush1.msra.mxu0 %v1134
    %1168 = vmatprep.subr.mxu0 0.0
    %1169 = vmatpush2.msra.mxu0 0.0
    %1170 = vmatprep.subr.mxu0 0.0
    %1171 = vmatpush2.msra.mxu0 0.0
    %1172 = vmatprep.subr.mxu0 0.0
    %1173 = vmatpush2.msra.mxu0 0.0
    %1174 = vmatprep.subr.mxu0 0.0
    %1175 = vmatpush2.msra.mxu0 0.0
    %1176 = vmatprep.subr.mxu0 0.0
    %1177 = vmatpush2.msra.mxu0 0.0
    %1178 = vmatprep.subr.mxu0 0.0
    %1179 = vmatpush2.msra.mxu0 0.0
    %1180 = vmatprep.subr.mxu0 0.0
    %1181 = vmatpush2.msra.mxu0 0.0
    %1182 = vmatprep.subr.mxu0 0.0
    %1183 = vmatpush2.msra.mxu0 0.0
    %1184 = vmatprep.subr.mxu0 0.0
    %1185 = vmatpush2.msra.mxu0 0.0
    %1186 = vmatprep.subr.mxu0 0.0
    %1187 = vmatpush2.msra.mxu0 0.0
    %1188 = vmatprep.subr.mxu0 0.0
    %1189 = vmatpush2.msra.mxu0 0.0
    %1190 = vmatprep.subr.mxu0 0.0
    %1191 = vmatpush2.msra.mxu0 0.0
    %1192 = vmatprep.subr.mxu0 0.0
    %1193 = vmatpush2.msra.mxu0 0.0
    %1194 = vmatprep.subr.mxu0 0.0
    %1195 = vmatpush2.msra.mxu0 0.0
    %1196 = vmatprep.subr.mxu0 0.0
    %1197 = vmatpush2.msra.mxu0 0.0
    %1198 = vmatprep.subr.mxu0 0.0
    %1199 = vmatpush2.msra.mxu0 0.0
    %1200 = vmatprep.mubr.f32.mxu0 0.0
    %1201 = vmatmul.mubr.f32.gmra.mxu0 %v396
    %v1202 = vpop.f32.mrf.mxu0
    %v1203 = vadd.f32 0.0, %v1202
    %v1204 = vpop.f32.mrf.mxu0
    %1205 = vmatprep.mubr.f32.mxu0 0.0
    %1206 = vmatmul.mubr.f32.gmra.mxu0 %v399
    %v1207 = vpop.f32.mrf.mxu0
    %v1208 = vadd.f32 0.0, %v1207
    %v1209 = vpop.f32.mrf.mxu0
    %1210 = vdwg.mxu0
    %1212 = vrot.lane.b32.xlu0 %v926, 32
    %v1213 = vpop.permute.xlu0 %1212
    %v1215 = vmul.f32 %v963, %v1213
    %1217 = vrot.lane.b32.xlu0 %v1215, 32
    %v1218 = vpop.permute.xlu0 %1217
    %v1219 = vsel %vm401, %v1218, 0
    %1221 = vmatprep.subr.mxu0 0.0
    %1222 = vmatpush1.msra.mxu0 0.0
    %1223 = vmatprep.subr.mxu0 0.0
    %1224 = vmatpush1.msra.mxu0 0.0
    %1225 = vmatprep.subr.mxu0 0.0
    %1226 = vmatpush1.msra.mxu0 0.0
    %1227 = vmatprep.subr.mxu0 0.0
    %1228 = vmatpush1.msra.mxu0 0.0
    %1229 = vmatprep.subr.mxu0 0.0
    %1230 = vmatpush1.msra.mxu0 0.0
    %1231 = vmatprep.subr.mxu0 0.0
    %1232 = vmatpush1.msra.mxu0 0.0
    %1233 = vmatprep.subr.mxu0 0.0
    %1234 = vmatpush1.msra.mxu0 0.0
    %1235 = vmatprep.subr.mxu0 0.0
    %1236 = vmatpush1.msra.mxu0 0.0
    %1237 = vmatprep.subr.mxu0 0.0
    %1238 = vmatpush1.msra.mxu0 0.0
    %1239 = vmatprep.subr.mxu0 0.0
    %1240 = vmatpush1.msra.mxu0 0.0
    %1241 = vmatprep.subr.mxu0 0.0
    %1242 = vmatpush1.msra.mxu0 0.0
    %1243 = vmatprep.subr.mxu0 0.0
    %1244 = vmatpush1.msra.mxu0 0.0
    %1245 = vmatprep.subr.mxu0 0.0
    %1246 = vmatpush1.msra.mxu0 0.0
    %1247 = vmatprep.subr.mxu0 0.0
    %1248 = vmatpush1.msra.mxu0 0.0
    %1249 = vmatprep.subr.mxu0 0.0
    %1250 = vmatpush1.msra.mxu0 0.0
    %1251 = vmatprep.subr.mxu0 0.0
    %1252 = vmatpush1.msra.mxu0 %v1219
    %1253 = vmatprep.subr.mxu0 0.0
    %1254 = vmatpush2.msra.mxu0 0.0
    %1255 = vmatprep.subr.mxu0 0.0
    %1256 = vmatpush2.msra.mxu0 0.0
    %1257 = vmatprep.subr.mxu0 0.0
    %1258 = vmatpush2.msra.mxu0 0.0
    %1259 = vmatprep.subr.mxu0 0.0
    %1260 = vmatpush2.msra.mxu0 0.0
    %1261 = vmatprep.subr.mxu0 0.0
    %1262 = vmatpush2.msra.mxu0 0.0
    %1263 = vmatprep.subr.mxu0 0.0
    %1264 = vmatpush2.msra.mxu0 0.0
    %1265 = vmatprep.subr.mxu0 0.0
    %1266 = vmatpush2.msra.mxu0 0.0
    %1267 = vmatprep.subr.mxu0 0.0
    %1268 = vmatpush2.msra.mxu0 0.0
    %1269 = vmatprep.subr.mxu0 0.0
    %1270 = vmatpush2.msra.mxu0 0.0
    %1271 = vmatprep.subr.mxu0 0.0
    %1272 = vmatpush2.msra.mxu0 0.0
    %1273 = vmatprep.subr.mxu0 0.0
    %1274 = vmatpush2.msra.mxu0 0.0
    %1275 = vmatprep.subr.mxu0 0.0
    %1276 = vmatpush2.msra.mxu0 0.0
    %1277 = vmatprep.subr.mxu0 0.0
    %1278 = vmatpush2.msra.mxu0 0.0
    %1279 = vmatprep.subr.mxu0 0.0
    %1280 = vmatpush2.msra.mxu0 0.0
    %1281 = vmatprep.subr.mxu0 0.0
    %1282 = vmatpush2.msra.mxu0 0.0
    %1283 = vmatprep.subr.mxu0 0.0
    %1284 = vmatpush2.msra.mxu0 0.0
    %1285 = vmatprep.mubr.f32.mxu0 0.0
    %1286 = vmatmul.mubr.f32.gmra.mxu0 %v396
    %v1287 = vpop.f32.mrf.mxu0
    %v1288 = vadd.f32 0.0, %v1287
    %v1289 = vpop.f32.mrf.mxu0
    %1290 = vmatprep.mubr.f32.mxu0 0.0
    %1291 = vmatmul.mubr.f32.gmra.mxu0 %v399
    %v1292 = vpop.f32.mrf.mxu0
    %v1293 = vadd.f32 0.0, %v1292
    %v1294 = vpop.f32.mrf.mxu0
    %1295 = vdwg.mxu0
    %1296 = vst.msk [vmem:[#allocation2 + $0x8] sm:$0xff] %vm142, %v744
    %1297 = vst.msk [vmem:[#allocation2 + $0x10] sm:$0xff] %vm142, %v745
    %v1298 = vld [vmem:[#allocation2 + $0x7] sm:$0xff]
    %v1299 = vld [vmem:[#allocation2 + $0xf] sm:$0xff]
    %v1300 = vld [vmem:[#allocation2 + $0x9] sm:$0xff]
    %v1301 = vld [vmem:[#allocation2 + $0x11] sm:$0xff]
    %v1302 = vmul.f32 %v1045, %v1298
    %v1303 = vmul.f32 %v1050, %v1299
    %v1304 = vmul.f32 %v1123, %v1300
    %v1305 = vmul.f32 %v1128, %v1301
    %v1306 = vadd.f32 %v1302, %v1304
    %v1307 = vadd.f32 %v1303, %v1305
    %v1308 = vmul.f32 %v1203, %v744
    %v1309 = vmul.f32 %v1208, %v745
    %v1310 = vadd.f32 %v1306, %v1308
    %v1311 = vadd.f32 %v1307, %v1309
    %v1312 = vmul.f32 %v123, %v1288
    %v1313 = vmul.f32 %v124, %v1293
    %v1314 = vadd.f32 %v1312, %v140
    %v1315 = vadd.f32 %v1313, %v141
    %v1316 = vmul.f32 %v131, %v1310
    %v1317 = vmul.f32 %v132, %v1311
    %v1318 = vadd.f32 %v1314, %v1316
    %v1319 = vadd.f32 %v1315, %v1317
    %1321 = vrot.lane.b32.xlu0 %v925, 96
    %v1322 = vpop.permute.xlu0 %1321
    %s1324 = scalar_lea.vmem [#allocation9], 2
    %1325 = vst.msk [vmem:[%s1324] sm:$0x3] %vm750, %v1322
    %s1326 = scalar_lea.vmem %s0, 4
    %v1327 = vld [vmem:[%s1326] sm:$0x3]
    %v1329 = vsel %vm142, %v1327, 0
    %1331 = vmatprep.subr.mxu0 0.0
    %1332 = vmatpush1.msra.mxu0 0.0
    %1333 = vmatprep.subr.mxu0 0.0
    %1334 = vmatpush1.msra.mxu0 0.0
    %1335 = vmatprep.subr.mxu0 0.0
    %1336 = vmatpush1.msra.mxu0 0.0
    %1337 = vmatprep.subr.mxu0 0.0
    %1338 = vmatpush1.msra.mxu0 0.0
    %1339 = vmatprep.subr.mxu0 0.0
    %1340 = vmatpush1.msra.mxu0 0.0
    %1341 = vmatprep.subr.mxu0 0.0
    %1342 = vmatpush1.msra.mxu0 0.0
    %1343 = vmatprep.subr.mxu0 0.0
    %1344 = vmatpush1.msra.mxu0 0.0
    %1345 = vmatprep.subr.mxu0 0.0
    %1346 = vmatpush1.msra.mxu0 0.0
    %1347 = vmatprep.subr.mxu0 0.0
    %1348 = vmatpush1.msra.mxu0 0.0
    %1349 = vmatprep.subr.mxu0 0.0
    %1350 = vmatpush1.msra.mxu0 0.0
    %1351 = vmatprep.subr.mxu0 0.0
    %1352 = vmatpush1.msra.mxu0 0.0
    %1353 = vmatprep.subr.mxu0 0.0
    %1354 = vmatpush1.msra.mxu0 0.0
    %1355 = vmatprep.subr.mxu0 0.0
    %1356 = vmatpush1.msra.mxu0 %v81
    %1357 = vmatprep.subr.mxu0 0.0
    %1358 = vmatpush1.msra.mxu0 %v80
    %1359 = vmatprep.subr.mxu0 0.0
    %1360 = vmatpush1.msra.mxu0 %v79
    %1361 = vmatprep.subr.mxu0 0.0
    %1362 = vmatpush1.msra.mxu0 %v78
    %1363 = vmatprep.subr.mxu0 0.0
    %1364 = vmatpush2.msra.mxu0 0.0
    %1365 = vmatprep.subr.mxu0 0.0
    %1366 = vmatpush2.msra.mxu0 0.0
    %1367 = vmatprep.subr.mxu0 0.0
    %1368 = vmatpush2.msra.mxu0 0.0
    %1369 = vmatprep.subr.mxu0 0.0
    %1370 = vmatpush2.msra.mxu0 0.0
    %1371 = vmatprep.subr.mxu0 0.0
    %1372 = vmatpush2.msra.mxu0 0.0
    %1373 = vmatprep.subr.mxu0 0.0
    %1374 = vmatpush2.msra.mxu0 0.0
    %1375 = vmatprep.subr.mxu0 0.0
    %1376 = vmatpush2.msra.mxu0 0.0
    %1377 = vmatprep.subr.mxu0 0.0
    %1378 = vmatpush2.msra.mxu0 0.0
    %1379 = vmatprep.subr.mxu0 0.0
    %1380 = vmatpush2.msra.mxu0 0.0
    %1381 = vmatprep.subr.mxu0 0.0
    %1382 = vmatpush2.msra.mxu0 0.0
    %1383 = vmatprep.subr.mxu0 0.0
    %1384 = vmatpush2.msra.mxu0 0.0
    %1385 = vmatprep.subr.mxu0 0.0
    %1386 = vmatpush2.msra.mxu0 0.0
    %1387 = vmatprep.subr.mxu0 0.0
    %1388 = vmatpush2.msra.mxu0 0.0
    %1389 = vmatprep.subr.mxu0 0.0
    %1390 = vmatpush2.msra.mxu0 0.0
    %1391 = vmatprep.subr.mxu0 0.0
    %1392 = vmatpush2.msra.mxu0 0.0
    %1393 = vmatprep.subr.mxu0 0.0
    %1394 = vmatpush2.msra.mxu0 0.0
    %1395 = vmatprep.mubr.f32.mxu0 0.0
    %1396 = vmatmul.mubr.f32.gmra.mxu0 %v1329
    %v1397 = vpop.f32.mrf.mxu0
    %v1398 = vadd.f32 %v155, %v1397
    %v1399 = vpop.f32.mrf.mxu0
    %1400 = vdwg.mxu0
    %v1401 = vsel %vm142, %v1322, 0
    %1403 = vmatprep.subr.mxu0 0.0
    %1404 = vmatpush1.msra.mxu0 0.0
    %1405 = vmatprep.subr.mxu0 0.0
    %1406 = vmatpush1.msra.mxu0 0.0
    %1407 = vmatprep.subr.mxu0 0.0
    %1408 = vmatpush1.msra.mxu0 0.0
    %1409 = vmatprep.subr.mxu0 0.0
    %1410 = vmatpush1.msra.mxu0 0.0
    %1411 = vmatprep.subr.mxu0 0.0
    %1412 = vmatpush1.msra.mxu0 0.0
    %1413 = vmatprep.subr.mxu0 0.0
    %1414 = vmatpush1.msra.mxu0 0.0
    %1415 = vmatprep.subr.mxu0 0.0
    %1416 = vmatpush1.msra.mxu0 0.0
    %1417 = vmatprep.subr.mxu0 0.0
    %1418 = vmatpush1.msra.mxu0 0.0
    %1419 = vmatprep.subr.mxu0 0.0
    %1420 = vmatpush1.msra.mxu0 0.0
    %1421 = vmatprep.subr.mxu0 0.0
    %1422 = vmatpush1.msra.mxu0 0.0
    %1423 = vmatprep.subr.mxu0 0.0
    %1424 = vmatpush1.msra.mxu0 0.0
    %1425 = vmatprep.subr.mxu0 0.0
    %1426 = vmatpush1.msra.mxu0 0.0
    %1427 = vmatprep.subr.mxu0 %v90
    %1428 = vmatpush1.msra.mxu0 %v89
    %1429 = vmatprep.subr.mxu0 %v88
    %1430 = vmatpush1.msra.mxu0 %v87
    %1431 = vmatprep.subr.mxu0 %v86
    %1432 = vmatpush1.msra.mxu0 %v85
    %1433 = vmatprep.subr.mxu0 %v84
    %1434 = vmatpush1.msra.mxu0 %v83
    %1435 = vmatprep.subr.mxu0 0.0
    %1436 = vmatpush2.msra.mxu0 0.0
    %1437 = vmatprep.subr.mxu0 0.0
    %1438 = vmatpush2.msra.mxu0 0.0
    %1439 = vmatprep.subr.mxu0 0.0
    %1440 = vmatpush2.msra.mxu0 0.0
    %1441 = vmatprep.subr.mxu0 0.0
    %1442 = vmatpush2.msra.mxu0 0.0
    %1443 = vmatprep.subr.mxu0 0.0
    %1444 = vmatpush2.msra.mxu0 0.0
    %1445 = vmatprep.subr.mxu0 0.0
    %1446 = vmatpush2.msra.mxu0 0.0
    %1447 = vmatprep.subr.mxu0 0.0
    %1448 = vmatpush2.msra.mxu0 0.0
    %1449 = vmatprep.subr.mxu0 0.0
    %1450 = vmatpush2.msra.mxu0 0.0
    %1451 = vmatprep.subr.mxu0 0.0
    %1452 = vmatpush2.msra.mxu0 0.0
    %1453 = vmatprep.subr.mxu0 0.0
    %1454 = vmatpush2.msra.mxu0 0.0
    %1455 = vmatprep.subr.mxu0 0.0
    %1456 = vmatpush2.msra.mxu0 0.0
    %1457 = vmatprep.subr.mxu0 0.0
    %1458 = vmatpush2.msra.mxu0 0.0
    %1459 = vmatprep.subr.mxu0 0.0
    %1460 = vmatpush2.msra.mxu0 0.0
    %1461 = vmatprep.subr.mxu0 0.0
    %1462 = vmatpush2.msra.mxu0 0.0
    %1463 = vmatprep.subr.mxu0 0.0
    %1464 = vmatpush2.msra.mxu0 0.0
    %1465 = vmatprep.subr.mxu0 0.0
    %1466 = vmatpush2.msra.mxu0 0.0
    %1467 = vmatprep.mubr.f32.mxu0 0.0
    %1468 = vmatmul.mubr.f32.gmra.mxu0 %v1401
    %v1469 = vpop.f32.mrf.mxu0
    %v1470 = vadd.f32 %v234, %v1469
    %v1471 = vpop.f32.mrf.mxu0
    %v1472 = vadd.f32 %v238, %v1471
    %1473 = vdwg.mxu0
    %v1474 = vadd.f32 %v1398, %v1470
    %v1475 = vsub.f32 0.0, %v1474
    %v1476 = vmul.f32 %v1475, 1.442695
    %v1477 = vpow.pop %v1476
    %v1478 = vadd.f32 %v1477, 1.0
    %v1479 = vrcp.pop %v1478
    %v1480 = vmul.f32 1.0, %v1479
    %1482 = vrot.lane.b32.xlu0 %v1470, 64
    %v1483 = vpop.permute.xlu0 %1482
    %v1485 = vmul.f32 %v1480, %v1483
    %1487 = vrot.lane.b32.xlu0 %v1485, 64
    %v1488 = vpop.permute.xlu0 %1487
    %v1490 = vadd.f32 %v1398, %v1488
    %v1491 = vtanh.pop %v1490
    %v1492 = vsub.f32 1.0, %v1480
    %1494 = vrot.lane.b32.xlu0 %v1491, 96
    %v1495 = vpop.permute.xlu0 %1494
    %v1497 = vmul.f32 %v1492, %v1495
    %v1498 = vmul.f32 %v1480, %v925
    %v1499 = vadd.f32 %v1497, %v1498
    %v1500 = vtanh.pop %v1472
    %1502 = vrot.lane.b32.xlu0 %v1472, 96
    %v1503 = vpop.permute.xlu0 %1502
    %v1505 = vmax.f32 %v1470, %v1503
    %1506 = vrot.lane.b32.xlu0 %v1472, 64
    %v1507 = vpop.permute.xlu0 %1506
    %v1509 = vmax.f32 %v1505, %v1507
    %v1510 = vsub.f32 %v1470, %v1509
    %v1511 = vmul.f32 %v1510, 1.442695
    %v1512 = vpow.pop %v1511
    %1514 = vrot.lane.b32.xlu0 %v1509, 32
    %v1515 = vpop.permute.xlu0 %1514
    %v1517 = vsub.f32 %v1472, %v1515
    %v1518 = vmul.f32 %v1517, 1.442695
    %v1519 = vpow.pop %v1518
    %1520 = vrot.lane.b32.xlu0 %v1509, 64
    %v1521 = vpop.permute.xlu0 %1520
    %v1523 = vsub.f32 %v1472, %v1521
    %v1524 = vmul.f32 %v1523, 1.442695
    %v1525 = vpow.pop %v1524
    %1527 = vrot.lane.b32.xlu0 %v1519, 96
    %v1528 = vpop.permute.xlu0 %1527
    %v1530 = vadd.f32 %v1512, %v1528
    %1532 = vrot.lane.b32.xlu0 %v1525, 64
    %v1533 = vpop.permute.xlu0 %1532
    %v1535 = vadd.f32 %v1530, %v1533
    %v1536 = vrcp.pop %v1535
    %v1537 = vmul.f32 %v1512, %v1536
    %1539 = vrot.lane.b32.xlu0 %v1536, 32
    %v1540 = vpop.permute.xlu0 %1539
    %v1542 = vmul.f32 %v1519, %v1540
    %1543 = vrot.lane.b32.xlu0 %v1536, 64
    %v1544 = vpop.permute.xlu0 %1543
    %v1546 = vmul.f32 %v1525, %v1544
    %1548 = vrot.lane.b32.xlu0 %v1537, 32
    %v1549 = vpop.permute.xlu0 %1548
    %v1550 = vsel %vm401, %v1549, 0
    %1552 = vmatprep.subr.mxu0 0.0
    %1553 = vmatpush1.msra.mxu0 0.0
    %1554 = vmatprep.subr.mxu0 0.0
    %1555 = vmatpush1.msra.mxu0 0.0
    %1556 = vmatprep.subr.mxu0 0.0
    %1557 = vmatpush1.msra.mxu0 0.0
    %1558 = vmatprep.subr.mxu0 0.0
    %1559 = vmatpush1.msra.mxu0 0.0
    %1560 = vmatprep.subr.mxu0 0.0
    %1561 = vmatpush1.msra.mxu0 0.0
    %1562 = vmatprep.subr.mxu0 0.0
    %1563 = vmatpush1.msra.mxu0 0.0
    %1564 = vmatprep.subr.mxu0 0.0
    %1565 = vmatpush1.msra.mxu0 0.0
    %1566 = vmatprep.subr.mxu0 0.0
    %1567 = vmatpush1.msra.mxu0 0.0
    %1568 = vmatprep.subr.mxu0 0.0
    %1569 = vmatpush1.msra.mxu0 0.0
    %1570 = vmatprep.subr.mxu0 0.0
    %1571 = vmatpush1.msra.mxu0 0.0
    %1572 = vmatprep.subr.mxu0 0.0
    %1573 = vmatpush1.msra.mxu0 0.0
    %1574 = vmatprep.subr.mxu0 0.0
    %1575 = vmatpush1.msra.mxu0 0.0
    %1576 = vmatprep.subr.mxu0 0.0
    %1577 = vmatpush1.msra.mxu0 0.0
    %1578 = vmatprep.subr.mxu0 0.0
    %1579 = vmatpush1.msra.mxu0 0.0
    %1580 = vmatprep.subr.mxu0 0.0
    %1581 = vmatpush1.msra.mxu0 0.0
    %1582 = vmatprep.subr.mxu0 0.0
    %1583 = vmatpush1.msra.mxu0 %v1550
    %1584 = vmatprep.subr.mxu0 0.0
    %1585 = vmatpush2.msra.mxu0 0.0
    %1586 = vmatprep.subr.mxu0 0.0
    %1587 = vmatpush2.msra.mxu0 0.0
    %1588 = vmatprep.subr.mxu0 0.0
    %1589 = vmatpush2.msra.mxu0 0.0
    %1590 = vmatprep.subr.mxu0 0.0
    %1591 = vmatpush2.msra.mxu0 0.0
    %1592 = vmatprep.subr.mxu0 0.0
    %1593 = vmatpush2.msra.mxu0 0.0
    %1594 = vmatprep.subr.mxu0 0.0
    %1595 = vmatpush2.msra.mxu0 0.0
    %1596 = vmatprep.subr.mxu0 0.0
    %1597 = vmatpush2.msra.mxu0 0.0
    %1598 = vmatprep.subr.mxu0 0.0
    %1599 = vmatpush2.msra.mxu0 0.0
    %1600 = vmatprep.subr.mxu0 0.0
    %1601 = vmatpush2.msra.mxu0 0.0
    %1602 = vmatprep.subr.mxu0 0.0
    %1603 = vmatpush2.msra.mxu0 0.0
    %1604 = vmatprep.subr.mxu0 0.0
    %1605 = vmatpush2.msra.mxu0 0.0
    %1606 = vmatprep.subr.mxu0 0.0
    %1607 = vmatpush2.msra.mxu0 0.0
    %1608 = vmatprep.subr.mxu0 0.0
    %1609 = vmatpush2.msra.mxu0 0.0
    %1610 = vmatprep.subr.mxu0 0.0
    %1611 = vmatpush2.msra.mxu0 0.0
    %1612 = vmatprep.subr.mxu0 0.0
    %1613 = vmatpush2.msra.mxu0 0.0
    %1614 = vmatprep.subr.mxu0 0.0
    %1615 = vmatpush2.msra.mxu0 0.0
    %1616 = vmatprep.mubr.f32.mxu0 0.0
    %1617 = vmatmul.mubr.f32.gmra.mxu0 %v396
    %v1618 = vpop.f32.mrf.mxu0
    %v1619 = vadd.f32 0.0, %v1618
    %v1620 = vpop.f32.mrf.mxu0
    %1621 = vmatprep.mubr.f32.mxu0 0.0
    %1622 = vmatmul.mubr.f32.gmra.mxu0 %v399
    %v1623 = vpop.f32.mrf.mxu0
    %v1624 = vadd.f32 0.0, %v1623
    %v1625 = vpop.f32.mrf.mxu0
    %1626 = vdwg.mxu0
    %v1628 = vsel %vm401, %v1542, 0
    %1630 = vmatprep.subr.mxu0 0.0
    %1631 = vmatpush1.msra.mxu0 0.0
    %1632 = vmatprep.subr.mxu0 0.0
    %1633 = vmatpush1.msra.mxu0 0.0
    %1634 = vmatprep.subr.mxu0 0.0
    %1635 = vmatpush1.msra.mxu0 0.0
    %1636 = vmatprep.subr.mxu0 0.0
    %1637 = vmatpush1.msra.mxu0 0.0
    %1638 = vmatprep.subr.mxu0 0.0
    %1639 = vmatpush1.msra.mxu0 0.0
    %1640 = vmatprep.subr.mxu0 0.0
    %1641 = vmatpush1.msra.mxu0 0.0
    %1642 = vmatprep.subr.mxu0 0.0
    %1643 = vmatpush1.msra.mxu0 0.0
    %1644 = vmatprep.subr.mxu0 0.0
    %1645 = vmatpush1.msra.mxu0 0.0
    %1646 = vmatprep.subr.mxu0 0.0
    %1647 = vmatpush1.msra.mxu0 0.0
    %1648 = vmatprep.subr.mxu0 0.0
    %1649 = vmatpush1.msra.mxu0 0.0
    %1650 = vmatprep.subr.mxu0 0.0
    %1651 = vmatpush1.msra.mxu0 0.0
    %1652 = vmatprep.subr.mxu0 0.0
    %1653 = vmatpush1.msra.mxu0 0.0
    %1654 = vmatprep.subr.mxu0 0.0
    %1655 = vmatpush1.msra.mxu0 0.0
    %1656 = vmatprep.subr.mxu0 0.0
    %1657 = vmatpush1.msra.mxu0 0.0
    %1658 = vmatprep.subr.mxu0 0.0
    %1659 = vmatpush1.msra.mxu0 0.0
    %1660 = vmatprep.subr.mxu0 0.0
    %1661 = vmatpush1.msra.mxu0 %v1628
    %1662 = vmatprep.subr.mxu0 0.0
    %1663 = vmatpush2.msra.mxu0 0.0
    %1664 = vmatprep.subr.mxu0 0.0
    %1665 = vmatpush2.msra.mxu0 0.0
    %1666 = vmatprep.subr.mxu0 0.0
    %1667 = vmatpush2.msra.mxu0 0.0
    %1668 = vmatprep.subr.mxu0 0.0
    %1669 = vmatpush2.msra.mxu0 0.0
    %1670 = vmatprep.subr.mxu0 0.0
    %1671 = vmatpush2.msra.mxu0 0.0
    %1672 = vmatprep.subr.mxu0 0.0
    %1673 = vmatpush2.msra.mxu0 0.0
    %1674 = vmatprep.subr.mxu0 0.0
    %1675 = vmatpush2.msra.mxu0 0.0
    %1676 = vmatprep.subr.mxu0 0.0
    %1677 = vmatpush2.msra.mxu0 0.0
    %1678 = vmatprep.subr.mxu0 0.0
    %1679 = vmatpush2.msra.mxu0 0.0
    %1680 = vmatprep.subr.mxu0 0.0
    %1681 = vmatpush2.msra.mxu0 0.0
    %1682 = vmatprep.subr.mxu0 0.0
    %1683 = vmatpush2.msra.mxu0 0.0
    %1684 = vmatprep.subr.mxu0 0.0
    %1685 = vmatpush2.msra.mxu0 0.0
    %1686 = vmatprep.subr.mxu0 0.0
    %1687 = vmatpush2.msra.mxu0 0.0
    %1688 = vmatprep.subr.mxu0 0.0
    %1689 = vmatpush2.msra.mxu0 0.0
    %1690 = vmatprep.subr.mxu0 0.0
    %1691 = vmatpush2.msra.mxu0 0.0
    %1692 = vmatprep.subr.mxu0 0.0
    %1693 = vmatpush2.msra.mxu0 0.0
    %1694 = vmatprep.mubr.f32.mxu0 0.0
    %1695 = vmatmul.mubr.f32.gmra.mxu0 %v396
    %v1696 = vpop.f32.mrf.mxu0
    %v1697 = vadd.f32 0.0, %v1696
    %v1698 = vpop.f32.mrf.mxu0
    %1699 = vmatprep.mubr.f32.mxu0 0.0
    %1700 = vmatmul.mubr.f32.gmra.mxu0 %v399
    %v1701 = vpop.f32.mrf.mxu0
    %v1702 = vadd.f32 0.0, %v1701
    %v1703 = vpop.f32.mrf.mxu0
    %1704 = vdwg.mxu0
    %1706 = vrot.lane.b32.xlu0 %v1546, 96
    %v1707 = vpop.permute.xlu0 %1706
    %v1708 = vsel %vm401, %v1707, 0
    %1710 = vmatprep.subr.mxu0 0.0
    %1711 = vmatpush1.msra.mxu0 0.0
    %1712 = vmatprep.subr.mxu0 0.0
    %1713 = vmatpush1.msra.mxu0 0.0
    %1714 = vmatprep.subr.mxu0 0.0
    %1715 = vmatpush1.msra.mxu0 0.0
    %1716 = vmatprep.subr.mxu0 0.0
    %1717 = vmatpush1.msra.mxu0 0.0
    %1718 = vmatprep.subr.mxu0 0.0
    %1719 = vmatpush1.msra.mxu0 0.0
    %1720 = vmatprep.subr.mxu0 0.0
    %1721 = vmatpush1.msra.mxu0 0.0
    %1722 = vmatprep.subr.mxu0 0.0
    %1723 = vmatpush1.msra.mxu0 0.0
    %1724 = vmatprep.subr.mxu0 0.0
    %1725 = vmatpush1.msra.mxu0 0.0
    %1726 = vmatprep.subr.mxu0 0.0
    %1727 = vmatpush1.msra.mxu0 0.0
    %1728 = vmatprep.subr.mxu0 0.0
    %1729 = vmatpush1.msra.mxu0 0.0
    %1730 = vmatprep.subr.mxu0 0.0
    %1731 = vmatpush1.msra.mxu0 0.0
    %1732 = vmatprep.subr.mxu0 0.0
    %1733 = vmatpush1.msra.mxu0 0.0
    %1734 = vmatprep.subr.mxu0 0.0
    %1735 = vmatpush1.msra.mxu0 0.0
    %1736 = vmatprep.subr.mxu0 0.0
    %1737 = vmatpush1.msra.mxu0 0.0
    %1738 = vmatprep.subr.mxu0 0.0
    %1739 = vmatpush1.msra.mxu0 0.0
    %1740 = vmatprep.subr.mxu0 0.0
    %1741 = vmatpush1.msra.mxu0 %v1708
    %1742 = vmatprep.subr.mxu0 0.0
    %1743 = vmatpush2.msra.mxu0 0.0
    %1744 = vmatprep.subr.mxu0 0.0
    %1745 = vmatpush2.msra.mxu0 0.0
    %1746 = vmatprep.subr.mxu0 0.0
    %1747 = vmatpush2.msra.mxu0 0.0
    %1748 = vmatprep.subr.mxu0 0.0
    %1749 = vmatpush2.msra.mxu0 0.0
    %1750 = vmatprep.subr.mxu0 0.0
    %1751 = vmatpush2.msra.mxu0 0.0
    %1752 = vmatprep.subr.mxu0 0.0
    %1753 = vmatpush2.msra.mxu0 0.0
    %1754 = vmatprep.subr.mxu0 0.0
    %1755 = vmatpush2.msra.mxu0 0.0
    %1756 = vmatprep.subr.mxu0 0.0
    %1757 = vmatpush2.msra.mxu0 0.0
    %1758 = vmatprep.subr.mxu0 0.0
    %1759 = vmatpush2.msra.mxu0 0.0
    %1760 = vmatprep.subr.mxu0 0.0
    %1761 = vmatpush2.msra.mxu0 0.0
    %1762 = vmatprep.subr.mxu0 0.0
    %1763 = vmatpush2.msra.mxu0 0.0
    %1764 = vmatprep.subr.mxu0 0.0
    %1765 = vmatpush2.msra.mxu0 0.0
    %1766 = vmatprep.subr.mxu0 0.0
    %1767 = vmatpush2.msra.mxu0 0.0
    %1768 = vmatprep.subr.mxu0 0.0
    %1769 = vmatpush2.msra.mxu0 0.0
    %1770 = vmatprep.subr.mxu0 0.0
    %1771 = vmatpush2.msra.mxu0 0.0
    %1772 = vmatprep.subr.mxu0 0.0
    %1773 = vmatpush2.msra.mxu0 0.0
    %1774 = vmatprep.mubr.f32.mxu0 0.0
    %1775 = vmatmul.mubr.f32.gmra.mxu0 %v396
    %v1776 = vpop.f32.mrf.mxu0
    %v1777 = vadd.f32 0.0, %v1776
    %v1778 = vpop.f32.mrf.mxu0
    %1779 = vmatprep.mubr.f32.mxu0 0.0
    %1780 = vmatmul.mubr.f32.gmra.mxu0 %v399
    %v1781 = vpop.f32.mrf.mxu0
    %v1782 = vadd.f32 0.0, %v1781
    %v1783 = vpop.f32.mrf.mxu0
    %1784 = vdwg.mxu0
    %1786 = vrot.lane.b32.xlu0 %v1500, 32
    %v1787 = vpop.permute.xlu0 %1786
    %v1789 = vmul.f32 %v1537, %v1787
    %1791 = vrot.lane.b32.xlu0 %v1789, 32
    %v1792 = vpop.permute.xlu0 %1791
    %v1793 = vsel %vm401, %v1792, 0
    %1795 = vmatprep.subr.mxu0 0.0
    %1796 = vmatpush1.msra.mxu0 0.0
    %1797 = vmatprep.subr.mxu0 0.0
    %1798 = vmatpush1.msra.mxu0 0.0
    %1799 = vmatprep.subr.mxu0 0.0
    %1800 = vmatpush1.msra.mxu0 0.0
    %1801 = vmatprep.subr.mxu0 0.0
    %1802 = vmatpush1.msra.mxu0 0.0
    %1803 = vmatprep.subr.mxu0 0.0
    %1804 = vmatpush1.msra.mxu0 0.0
    %1805 = vmatprep.subr.mxu0 0.0
    %1806 = vmatpush1.msra.mxu0 0.0
    %1807 = vmatprep.subr.mxu0 0.0
    %1808 = vmatpush1.msra.mxu0 0.0
    %1809 = vmatprep.subr.mxu0 0.0
    %1810 = vmatpush1.msra.mxu0 0.0
    %1811 = vmatprep.subr.mxu0 0.0
    %1812 = vmatpush1.msra.mxu0 0.0
    %1813 = vmatprep.subr.mxu0 0.0
    %1814 = vmatpush1.msra.mxu0 0.0
    %1815 = vmatprep.subr.mxu0 0.0
    %1816 = vmatpush1.msra.mxu0 0.0
    %1817 = vmatprep.subr.mxu0 0.0
    %1818 = vmatpush1.msra.mxu0 0.0
    %1819 = vmatprep.subr.mxu0 0.0
    %1820 = vmatpush1.msra.mxu0 0.0
    %1821 = vmatprep.subr.mxu0 0.0
    %1822 = vmatpush1.msra.mxu0 0.0
    %1823 = vmatprep.subr.mxu0 0.0
    %1824 = vmatpush1.msra.mxu0 0.0
    %1825 = vmatprep.subr.mxu0 0.0
    %1826 = vmatpush1.msra.mxu0 %v1793
    %1827 = vmatprep.subr.mxu0 0.0
    %1828 = vmatpush2.msra.mxu0 0.0
    %1829 = vmatprep.subr.mxu0 0.0
    %1830 = vmatpush2.msra.mxu0 0.0
    %1831 = vmatprep.subr.mxu0 0.0
    %1832 = vmatpush2.msra.mxu0 0.0
    %1833 = vmatprep.subr.mxu0 0.0
    %1834 = vmatpush2.msra.mxu0 0.0
    %1835 = vmatprep.subr.mxu0 0.0
    %1836 = vmatpush2.msra.mxu0 0.0
    %1837 = vmatprep.subr.mxu0 0.0
    %1838 = vmatpush2.msra.mxu0 0.0
    %1839 = vmatprep.subr.mxu0 0.0
    %1840 = vmatpush2.msra.mxu0 0.0
    %1841 = vmatprep.subr.mxu0 0.0
    %1842 = vmatpush2.msra.mxu0 0.0
    %1843 = vmatprep.subr.mxu0 0.0
    %1844 = vmatpush2.msra.mxu0 0.0
    %1845 = vmatprep.subr.mxu0 0.0
    %1846 = vmatpush2.msra.mxu0 0.0
    %1847 = vmatprep.subr.mxu0 0.0
    %1848 = vmatpush2.msra.mxu0 0.0
    %1849 = vmatprep.subr.mxu0 0.0
    %1850 = vmatpush2.msra.mxu0 0.0
    %1851 = vmatprep.subr.mxu0 0.0
    %1852 = vmatpush2.msra.mxu0 0.0
    %1853 = vmatprep.subr.mxu0 0.0
    %1854 = vmatpush2.msra.mxu0 0.0
    %1855 = vmatprep.subr.mxu0 0.0
    %1856 = vmatpush2.msra.mxu0 0.0
    %1857 = vmatprep.subr.mxu0 0.0
    %1858 = vmatpush2.msra.mxu0 0.0
    %1859 = vmatprep.mubr.f32.mxu0 0.0
    %1860 = vmatmul.mubr.f32.gmra.mxu0 %v396
    %v1861 = vpop.f32.mrf.mxu0
    %v1862 = vadd.f32 0.0, %v1861
    %v1863 = vpop.f32.mrf.mxu0
    %1864 = vmatprep.mubr.f32.mxu0 0.0
    %1865 = vmatmul.mubr.f32.gmra.mxu0 %v399
    %v1866 = vpop.f32.mrf.mxu0
    %v1867 = vadd.f32 0.0, %v1866
    %v1868 = vpop.f32.mrf.mxu0
    %1869 = vdwg.mxu0
    %1870 = vst.msk [vmem:[#allocation2 + $0x8] sm:$0xff] %vm142, %v1318
    %1871 = vst.msk [vmem:[#allocation2 + $0x10] sm:$0xff] %vm142, %v1319
    %v1872 = vld [vmem:[#allocation2 + $0x7] sm:$0xff]
    %v1873 = vld [vmem:[#allocation2 + $0xf] sm:$0xff]
    %v1874 = vld [vmem:[#allocation2 + $0x9] sm:$0xff]
    %v1875 = vld [vmem:[#allocation2 + $0x11] sm:$0xff]
    %v1876 = vmul.f32 %v1619, %v1872
    %v1877 = vmul.f32 %v1624, %v1873
    %v1878 = vmul.f32 %v1697, %v1874
    %v1879 = vmul.f32 %v1702, %v1875
    %v1880 = vadd.f32 %v1876, %v1878
    %v1881 = vadd.f32 %v1877, %v1879
    %v1882 = vmul.f32 %v1777, %v1318
    %v1883 = vmul.f32 %v1782, %v1319
    %v1884 = vadd.f32 %v1880, %v1882
    %v1885 = vadd.f32 %v1881, %v1883
    %v1886 = vmul.f32 %v123, %v1862
    %v1887 = vmul.f32 %v124, %v1867
    %v1888 = vadd.f32 %v1886, %v140
    %v1889 = vadd.f32 %v1887, %v141
    %v1890 = vmul.f32 %v131, %v1884
    %v1891 = vmul.f32 %v132, %v1885
    %v1892 = vadd.f32 %v1888, %v1890
    %v1893 = vadd.f32 %v1889, %v1891
    %1895 = vrot.lane.b32.xlu0 %v1499, 96
    %v1896 = vpop.permute.xlu0 %1895
    %s1898 = scalar_lea.vmem [#allocation9], 4
    %1899 = vst.msk [vmem:[%s1898] sm:$0x3] %vm750, %v1896
    %s1900 = scalar_lea.vmem %s0, 6
    %v1901 = vld [vmem:[%s1900] sm:$0x3]
    %v1903 = vsel %vm142, %v1901, 0
    %1905 = vmatprep.subr.mxu0 0.0
    %1906 = vmatpush1.msra.mxu0 0.0
    %1907 = vmatprep.subr.mxu0 0.0
    %1908 = vmatpush1.msra.mxu0 0.0
    %1909 = vmatprep.subr.mxu0 0.0
    %1910 = vmatpush1.msra.mxu0 0.0
    %1911 = vmatprep.subr.mxu0 0.0
    %1912 = vmatpush1.msra.mxu0 0.0
    %1913 = vmatprep.subr.mxu0 0.0
    %1914 = vmatpush1.msra.mxu0 0.0
    %1915 = vmatprep.subr.mxu0 0.0
    %1916 = vmatpush1.msra.mxu0 0.0
    %1917 = vmatprep.subr.mxu0 0.0
    %1918 = vmatpush1.msra.mxu0 0.0
    %1919 = vmatprep.subr.mxu0 0.0
    %1920 = vmatpush1.msra.mxu0 0.0
    %1921 = vmatprep.subr.mxu0 0.0
    %1922 = vmatpush1.msra.mxu0 0.0
    %1923 = vmatprep.subr.mxu0 0.0
    %1924 = vmatpush1.msra.mxu0 0.0
    %1925 = vmatprep.subr.mxu0 0.0
    %1926 = vmatpush1.msra.mxu0 0.0
    %1927 = vmatprep.subr.mxu0 0.0
    %1928 = vmatpush1.msra.mxu0 0.0
    %1929 = vmatprep.subr.mxu0 0.0
    %1930 = vmatpush1.msra.mxu0 %v81
    %1931 = vmatprep.subr.mxu0 0.0
    %1932 = vmatpush1.msra.mxu0 %v80
    %1933 = vmatprep.subr.mxu0 0.0
    %1934 = vmatpush1.msra.mxu0 %v79
    %1935 = vmatprep.subr.mxu0 0.0
    %1936 = vmatpush1.msra.mxu0 %v78
    %1937 = vmatprep.subr.mxu0 0.0
    %1938 = vmatpush2.msra.mxu0 0.0
    %1939 = vmatprep.subr.mxu0 0.0
    %1940 = vmatpush2.msra.mxu0 0.0
    %1941 = vmatprep.subr.mxu0 0.0
    %1942 = vmatpush2.msra.mxu0 0.0
    %1943 = vmatprep.subr.mxu0 0.0
    %1944 = vmatpush2.msra.mxu0 0.0
    %1945 = vmatprep.subr.mxu0 0.0
    %1946 = vmatpush2.msra.mxu0 0.0
    %1947 = vmatprep.subr.mxu0 0.0
    %1948 = vmatpush2.msra.mxu0 0.0
    %1949 = vmatprep.subr.mxu0 0.0
    %1950 = vmatpush2.msra.mxu0 0.0
    %1951 = vmatprep.subr.mxu0 0.0
    %1952 = vmatpush2.msra.mxu0 0.0
    %1953 = vmatprep.subr.mxu0 0.0
    %1954 = vmatpush2.msra.mxu0 0.0
    %1955 = vmatprep.subr.mxu0 0.0
    %1956 = vmatpush2.msra.mxu0 0.0
    %1957 = vmatprep.subr.mxu0 0.0
    %1958 = vmatpush2.msra.mxu0 0.0
    %1959 = vmatprep.subr.mxu0 0.0
    %1960 = vmatpush2.msra.mxu0 0.0
    %1961 = vmatprep.subr.mxu0 0.0
    %1962 = vmatpush2.msra.mxu0 0.0
    %1963 = vmatprep.subr.mxu0 0.0
    %1964 = vmatpush2.msra.mxu0 0.0
    %1965 = vmatprep.subr.mxu0 0.0
    %1966 = vmatpush2.msra.mxu0 0.0
    %1967 = vmatprep.subr.mxu0 0.0
    %1968 = vmatpush2.msra.mxu0 0.0
    %1969 = vmatprep.mubr.f32.mxu0 0.0
    %1970 = vmatmul.mubr.f32.gmra.mxu0 %v1903
    %v1971 = vpop.f32.mrf.mxu0
    %v1972 = vadd.f32 %v155, %v1971
    %v1973 = vpop.f32.mrf.mxu0
    %1974 = vdwg.mxu0
    %v1975 = vsel %vm142, %v1896, 0
    %1977 = vmatprep.subr.mxu0 0.0
    %1978 = vmatpush1.msra.mxu0 0.0
    %1979 = vmatprep.subr.mxu0 0.0
    %1980 = vmatpush1.msra.mxu0 0.0
    %1981 = vmatprep.subr.mxu0 0.0
    %1982 = vmatpush1.msra.mxu0 0.0
    %1983 = vmatprep.subr.mxu0 0.0
    %1984 = vmatpush1.msra.mxu0 0.0
    %1985 = vmatprep.subr.mxu0 0.0
    %1986 = vmatpush1.msra.mxu0 0.0
    %1987 = vmatprep.subr.mxu0 0.0
    %1988 = vmatpush1.msra.mxu0 0.0
    %1989 = vmatprep.subr.mxu0 0.0
    %1990 = vmatpush1.msra.mxu0 0.0
    %1991 = vmatprep.subr.mxu0 0.0
    %1992 = vmatpush1.msra.mxu0 0.0
    %1993 = vmatprep.subr.mxu0 0.0
    %1994 = vmatpush1.msra.mxu0 0.0
    %1995 = vmatprep.subr.mxu0 0.0
    %1996 = vmatpush1.msra.mxu0 0.0
    %1997 = vmatprep.subr.mxu0 0.0
    %1998 = vmatpush1.msra.mxu0 0.0
    %1999 = vmatprep.subr.mxu0 0.0
    %2000 = vmatpush1.msra.mxu0 0.0
    %2001 = vmatprep.subr.mxu0 %v90
    %2002 = vmatpush1.msra.mxu0 %v89
    %2003 = vmatprep.subr.mxu0 %v88
    %2004 = vmatpush1.msra.mxu0 %v87
    %2005 = vmatprep.subr.mxu0 %v86
    %2006 = vmatpush1.msra.mxu0 %v85
    %2007 = vmatprep.subr.mxu0 %v84
    %2008 = vmatpush1.msra.mxu0 %v83
    %2009 = vmatprep.subr.mxu0 0.0
    %2010 = vmatpush2.msra.mxu0 0.0
    %2011 = vmatprep.subr.mxu0 0.0
    %2012 = vmatpush2.msra.mxu0 0.0
    %2013 = vmatprep.subr.mxu0 0.0
    %2014 = vmatpush2.msra.mxu0 0.0
    %2015 = vmatprep.subr.mxu0 0.0
    %2016 = vmatpush2.msra.mxu0 0.0
    %2017 = vmatprep.subr.mxu0 0.0
    %2018 = vmatpush2.msra.mxu0 0.0
    %2019 = vmatprep.subr.mxu0 0.0
    %2020 = vmatpush2.msra.mxu0 0.0
    %2021 = vmatprep.subr.mxu0 0.0
    %2022 = vmatpush2.msra.mxu0 0.0
    %2023 = vmatprep.subr.mxu0 0.0
    %2024 = vmatpush2.msra.mxu0 0.0
    %2025 = vmatprep.subr.mxu0 0.0
    %2026 = vmatpush2.msra.mxu0 0.0
    %2027 = vmatprep.subr.mxu0 0.0
    %2028 = vmatpush2.msra.mxu0 0.0
    %2029 = vmatprep.subr.mxu0 0.0
    %2030 = vmatpush2.msra.mxu0 0.0
    %2031 = vmatprep.subr.mxu0 0.0
    %2032 = vmatpush2.msra.mxu0 0.0
    %2033 = vmatprep.subr.mxu0 0.0
    %2034 = vmatpush2.msra.mxu0 0.0
    %2035 = vmatprep.subr.mxu0 0.0
    %2036 = vmatpush2.msra.mxu0 0.0
    %2037 = vmatprep.subr.mxu0 0.0
    %2038 = vmatpush2.msra.mxu0 0.0
    %2039 = vmatprep.subr.mxu0 0.0
    %2040 = vmatpush2.msra.mxu0 0.0
    %2041 = vmatprep.mubr.f32.mxu0 0.0
    %2042 = vmatmul.mubr.f32.gmra.mxu0 %v1975
    %v2043 = vpop.f32.mrf.mxu0
    %v2044 = vadd.f32 %v234, %v2043
    %v2045 = vpop.f32.mrf.mxu0
    %v2046 = vadd.f32 %v238, %v2045
    %2047 = vdwg.mxu0
    %v2048 = vadd.f32 %v1972, %v2044
    %v2049 = vsub.f32 0.0, %v2048
    %v2050 = vmul.f32 %v2049, 1.442695
    %v2051 = vpow.pop %v2050
    %v2052 = vadd.f32 %v2051, 1.0
    %v2053 = vrcp.pop %v2052
    %v2054 = vmul.f32 1.0, %v2053
    %2056 = vrot.lane.b32.xlu0 %v2044, 64
    %v2057 = vpop.permute.xlu0 %2056
    %v2059 = vmul.f32 %v2054, %v2057
    %2061 = vrot.lane.b32.xlu0 %v2059, 64
    %v2062 = vpop.permute.xlu0 %2061
    %v2064 = vadd.f32 %v1972, %v2062
    %v2065 = vtanh.pop %v2064
    %v2066 = vsub.f32 1.0, %v2054
    %2068 = vrot.lane.b32.xlu0 %v2065, 96
    %v2069 = vpop.permute.xlu0 %2068
    %v2071 = vmul.f32 %v2066, %v2069
    %v2072 = vmul.f32 %v2054, %v1499
    %v2073 = vadd.f32 %v2071, %v2072
    %v2074 = vtanh.pop %v2046
    %2076 = vrot.lane.b32.xlu0 %v2046, 96
    %v2077 = vpop.permute.xlu0 %2076
    %v2079 = vmax.f32 %v2044, %v2077
    %2080 = vrot.lane.b32.xlu0 %v2046, 64
    %v2081 = vpop.permute.xlu0 %2080
    %v2083 = vmax.f32 %v2079, %v2081
    %v2084 = vsub.f32 %v2044, %v2083
    %v2085 = vmul.f32 %v2084, 1.442695
    %v2086 = vpow.pop %v2085
    %2088 = vrot.lane.b32.xlu0 %v2083, 32
    %v2089 = vpop.permute.xlu0 %2088
    %v2091 = vsub.f32 %v2046, %v2089
    %v2092 = vmul.f32 %v2091, 1.442695
    %v2093 = vpow.pop %v2092
    %2094 = vrot.lane.b32.xlu0 %v2083, 64
    %v2095 = vpop.permute.xlu0 %2094
    %v2097 = vsub.f32 %v2046, %v2095
    %v2098 = vmul.f32 %v2097, 1.442695
    %v2099 = vpow.pop %v2098
    %2101 = vrot.lane.b32.xlu0 %v2093, 96
    %v2102 = vpop.permute.xlu0 %2101
    %v2104 = vadd.f32 %v2086, %v2102
    %2106 = vrot.lane.b32.xlu0 %v2099, 64
    %v2107 = vpop.permute.xlu0 %2106
    %v2109 = vadd.f32 %v2104, %v2107
    %v2110 = vrcp.pop %v2109
    %v2111 = vmul.f32 %v2086, %v2110
    %2113 = vrot.lane.b32.xlu0 %v2110, 32
    %v2114 = vpop.permute.xlu0 %2113
    %v2116 = vmul.f32 %v2093, %v2114
    %2117 = vrot.lane.b32.xlu0 %v2110, 64
    %v2118 = vpop.permute.xlu0 %2117
    %v2120 = vmul.f32 %v2099, %v2118
    %2122 = vrot.lane.b32.xlu0 %v2111, 32
    %v2123 = vpop.permute.xlu0 %2122
    %v2124 = vsel %vm401, %v2123, 0
    %2126 = vmatprep.subr.mxu0 0.0
    %2127 = vmatpush1.msra.mxu0 0.0
    %2128 = vmatprep.subr.mxu0 0.0
    %2129 = vmatpush1.msra.mxu0 0.0
    %2130 = vmatprep.subr.mxu0 0.0
    %2131 = vmatpush1.msra.mxu0 0.0
    %2132 = vmatprep.subr.mxu0 0.0
    %2133 = vmatpush1.msra.mxu0 0.0
    %2134 = vmatprep.subr.mxu0 0.0
    %2135 = vmatpush1.msra.mxu0 0.0
    %2136 = vmatprep.subr.mxu0 0.0
    %2137 = vmatpush1.msra.mxu0 0.0
    %2138 = vmatprep.subr.mxu0 0.0
    %2139 = vmatpush1.msra.mxu0 0.0
    %2140 = vmatprep.subr.mxu0 0.0
    %2141 = vmatpush1.msra.mxu0 0.0
    %2142 = vmatprep.subr.mxu0 0.0
    %2143 = vmatpush1.msra.mxu0 0.0
    %2144 = vmatprep.subr.mxu0 0.0
    %2145 = vmatpush1.msra.mxu0 0.0
    %2146 = vmatprep.subr.mxu0 0.0
    %2147 = vmatpush1.msra.mxu0 0.0
    %2148 = vmatprep.subr.mxu0 0.0
    %2149 = vmatpush1.msra.mxu0 0.0
    %2150 = vmatprep.subr.mxu0 0.0
    %2151 = vmatpush1.msra.mxu0 0.0
    %2152 = vmatprep.subr.mxu0 0.0
    %2153 = vmatpush1.msra.mxu0 0.0
    %2154 = vmatprep.subr.mxu0 0.0
    %2155 = vmatpush1.msra.mxu0 0.0
    %2156 = vmatprep.subr.mxu0 0.0
    %2157 = vmatpush1.msra.mxu0 %v2124
    %2158 = vmatprep.subr.mxu0 0.0
    %2159 = vmatpush2.msra.mxu0 0.0
    %2160 = vmatprep.subr.mxu0 0.0
    %2161 = vmatpush2.msra.mxu0 0.0
    %2162 = vmatprep.subr.mxu0 0.0
    %2163 = vmatpush2.msra.mxu0 0.0
    %2164 = vmatprep.subr.mxu0 0.0
    %2165 = vmatpush2.msra.mxu0 0.0
    %2166 = vmatprep.subr.mxu0 0.0
    %2167 = vmatpush2.msra.mxu0 0.0
    %2168 = vmatprep.subr.mxu0 0.0
    %2169 = vmatpush2.msra.mxu0 0.0
    %2170 = vmatprep.subr.mxu0 0.0
    %2171 = vmatpush2.msra.mxu0 0.0
    %2172 = vmatprep.subr.mxu0 0.0
    %2173 = vmatpush2.msra.mxu0 0.0
    %2174 = vmatprep.subr.mxu0 0.0
    %2175 = vmatpush2.msra.mxu0 0.0
    %2176 = vmatprep.subr.mxu0 0.0
    %2177 = vmatpush2.msra.mxu0 0.0
    %2178 = vmatprep.subr.mxu0 0.0
    %2179 = vmatpush2.msra.mxu0 0.0
    %2180 = vmatprep.subr.mxu0 0.0
    %2181 = vmatpush2.msra.mxu0 0.0
    %2182 = vmatprep.subr.mxu0 0.0
    %2183 = vmatpush2.msra.mxu0 0.0
    %2184 = vmatprep.subr.mxu0 0.0
    %2185 = vmatpush2.msra.mxu0 0.0
    %2186 = vmatprep.subr.mxu0 0.0
    %2187 = vmatpush2.msra.mxu0 0.0
    %2188 = vmatprep.subr.mxu0 0.0
    %2189 = vmatpush2.msra.mxu0 0.0
    %2190 = vmatprep.mubr.f32.mxu0 0.0
    %2191 = vmatmul.mubr.f32.gmra.mxu0 %v396
    %v2192 = vpop.f32.mrf.mxu0
    %v2193 = vadd.f32 0.0, %v2192
    %v2194 = vpop.f32.mrf.mxu0
    %2195 = vmatprep.mubr.f32.mxu0 0.0
    %2196 = vmatmul.mubr.f32.gmra.mxu0 %v399
    %v2197 = vpop.f32.mrf.mxu0
    %v2198 = vadd.f32 0.0, %v2197
    %v2199 = vpop.f32.mrf.mxu0
    %2200 = vdwg.mxu0
    %v2202 = vsel %vm401, %v2116, 0
    %2204 = vmatprep.subr.mxu0 0.0
    %2205 = vmatpush1.msra.mxu0 0.0
    %2206 = vmatprep.subr.mxu0 0.0
    %2207 = vmatpush1.msra.mxu0 0.0
    %2208 = vmatprep.subr.mxu0 0.0
    %2209 = vmatpush1.msra.mxu0 0.0
    %2210 = vmatprep.subr.mxu0 0.0
    %2211 = vmatpush1.msra.mxu0 0.0
    %2212 = vmatprep.subr.mxu0 0.0
    %2213 = vmatpush1.msra.mxu0 0.0
    %2214 = vmatprep.subr.mxu0 0.0
    %2215 = vmatpush1.msra.mxu0 0.0
    %2216 = vmatprep.subr.mxu0 0.0
    %2217 = vmatpush1.msra.mxu0 0.0
    %2218 = vmatprep.subr.mxu0 0.0
    %2219 = vmatpush1.msra.mxu0 0.0
    %2220 = vmatprep.subr.mxu0 0.0
    %2221 = vmatpush1.msra.mxu0 0.0
    %2222 = vmatprep.subr.mxu0 0.0
    %2223 = vmatpush1.msra.mxu0 0.0
    %2224 = vmatprep.subr.mxu0 0.0
    %2225 = vmatpush1.msra.mxu0 0.0
    %2226 = vmatprep.subr.mxu0 0.0
    %2227 = vmatpush1.msra.mxu0 0.0
    %2228 = vmatprep.subr.mxu0 0.0
    %2229 = vmatpush1.msra.mxu0 0.0
    %2230 = vmatprep.subr.mxu0 0.0
    %2231 = vmatpush1.msra.mxu0 0.0
    %2232 = vmatprep.subr.mxu0 0.0
    %2233 = vmatpush1.msra.mxu0 0.0
    %2234 = vmatprep.subr.mxu0 0.0
    %2235 = vmatpush1.msra.mxu0 %v2202
    %2236 = vmatprep.subr.mxu0 0.0
    %2237 = vmatpush2.msra.mxu0 0.0
    %2238 = vmatprep.subr.mxu0 0.0
    %2239 = vmatpush2.msra.mxu0 0.0
    %2240 = vmatprep.subr.mxu0 0.0
    %2241 = vmatpush2.msra.mxu0 0.0
    %2242 = vmatprep.subr.mxu0 0.0
    %2243 = vmatpush2.msra.mxu0 0.0
    %2244 = vmatprep.subr.mxu0 0.0
    %2245 = vmatpush2.msra.mxu0 0.0
    %2246 = vmatprep.subr.mxu0 0.0
    %2247 = vmatpush2.msra.mxu0 0.0
    %2248 = vmatprep.subr.mxu0 0.0
    %2249 = vmatpush2.msra.mxu0 0.0
    %2250 = vmatprep.subr.mxu0 0.0
    %2251 = vmatpush2.msra.mxu0 0.0
    %2252 = vmatprep.subr.mxu0 0.0
    %2253 = vmatpush2.msra.mxu0 0.0
    %2254 = vmatprep.subr.mxu0 0.0
    %2255 = vmatpush2.msra.mxu0 0.0
    %2256 = vmatprep.subr.mxu0 0.0
    %2257 = vmatpush2.msra.mxu0 0.0
    %2258 = vmatprep.subr.mxu0 0.0
    %2259 = vmatpush2.msra.mxu0 0.0
    %2260 = vmatprep.subr.mxu0 0.0
    %2261 = vmatpush2.msra.mxu0 0.0
    %2262 = vmatprep.subr.mxu0 0.0
    %2263 = vmatpush2.msra.mxu0 0.0
    %2264 = vmatprep.subr.mxu0 0.0
    %2265 = vmatpush2.msra.mxu0 0.0
    %2266 = vmatprep.subr.mxu0 0.0
    %2267 = vmatpush2.msra.mxu0 0.0
    %2268 = vmatprep.mubr.f32.mxu0 0.0
    %2269 = vmatmul.mubr.f32.gmra.mxu0 %v396
    %v2270 = vpop.f32.mrf.mxu0
    %v2271 = vadd.f32 0.0, %v2270
    %v2272 = vpop.f32.mrf.mxu0
    %2273 = vmatprep.mubr.f32.mxu0 0.0
    %2274 = vmatmul.mubr.f32.gmra.mxu0 %v399
    %v2275 = vpop.f32.mrf.mxu0
    %v2276 = vadd.f32 0.0, %v2275
    %v2277 = vpop.f32.mrf.mxu0
    %2278 = vdwg.mxu0
    %2280 = vrot.lane.b32.xlu0 %v2120, 96
    %v2281 = vpop.permute.xlu0 %2280
    %v2282 = vsel %vm401, %v2281, 0
    %2284 = vmatprep.subr.mxu0 0.0
    %2285 = vmatpush1.msra.mxu0 0.0
    %2286 = vmatprep.subr.mxu0 0.0
    %2287 = vmatpush1.msra.mxu0 0.0
    %2288 = vmatprep.subr.mxu0 0.0
    %2289 = vmatpush1.msra.mxu0 0.0
    %2290 = vmatprep.subr.mxu0 0.0
    %2291 = vmatpush1.msra.mxu0 0.0
    %2292 = vmatprep.subr.mxu0 0.0
    %2293 = vmatpush1.msra.mxu0 0.0
    %2294 = vmatprep.subr.mxu0 0.0
    %2295 = vmatpush1.msra.mxu0 0.0
    %2296 = vmatprep.subr.mxu0 0.0
    %2297 = vmatpush1.msra.mxu0 0.0
    %2298 = vmatprep.subr.mxu0 0.0
    %2299 = vmatpush1.msra.mxu0 0.0
    %2300 = vmatprep.subr.mxu0 0.0
    %2301 = vmatpush1.msra.mxu0 0.0
    %2302 = vmatprep.subr.mxu0 0.0
    %2303 = vmatpush1.msra.mxu0 0.0
    %2304 = vmatprep.subr.mxu0 0.0
    %2305 = vmatpush1.msra.mxu0 0.0
    %2306 = vmatprep.subr.mxu0 0.0
    %2307 = vmatpush1.msra.mxu0 0.0
    %2308 = vmatprep.subr.mxu0 0.0
    %2309 = vmatpush1.msra.mxu0 0.0
    %2310 = vmatprep.subr.mxu0 0.0
    %2311 = vmatpush1.msra.mxu0 0.0
    %2312 = vmatprep.subr.mxu0 0.0
    %2313 = vmatpush1.msra.mxu0 0.0
    %2314 = vmatprep.subr.mxu0 0.0
    %2315 = vmatpush1.msra.mxu0 %v2282
    %2316 = vmatprep.subr.mxu0 0.0
    %2317 = vmatpush2.msra.mxu0 0.0
    %2318 = vmatprep.subr.mxu0 0.0
    %2319 = vmatpush2.msra.mxu0 0.0
    %2320 = vmatprep.subr.mxu0 0.0
    %2321 = vmatpush2.msra.mxu0 0.0
    %2322 = vmatprep.subr.mxu0 0.0
    %2323 = vmatpush2.msra.mxu0 0.0
    %2324 = vmatprep.subr.mxu0 0.0
    %2325 = vmatpush2.msra.mxu0 0.0
    %2326 = vmatprep.subr.mxu0 0.0
    %2327 = vmatpush2.msra.mxu0 0.0
    %2328 = vmatprep.subr.mxu0 0.0
    %2329 = vmatpush2.msra.mxu0 0.0
    %2330 = vmatprep.subr.mxu0 0.0
    %2331 = vmatpush2.msra.mxu0 0.0
    %2332 = vmatprep.subr.mxu0 0.0
    %2333 = vmatpush2.msra.mxu0 0.0
    %2334 = vmatprep.subr.mxu0 0.0
    %2335 = vmatpush2.msra.mxu0 0.0
    %2336 = vmatprep.subr.mxu0 0.0
    %2337 = vmatpush2.msra.mxu0 0.0
    %2338 = vmatprep.subr.mxu0 0.0
    %2339 = vmatpush2.msra.mxu0 0.0
    %2340 = vmatprep.subr.mxu0 0.0
    %2341 = vmatpush2.msra.mxu0 0.0
    %2342 = vmatprep.subr.mxu0 0.0
    %2343 = vmatpush2.msra.mxu0 0.0
    %2344 = vmatprep.subr.mxu0 0.0
    %2345 = vmatpush2.msra.mxu0 0.0
    %2346 = vmatprep.subr.mxu0 0.0
    %2347 = vmatpush2.msra.mxu0 0.0
    %2348 = vmatprep.mubr.f32.mxu0 0.0
    %2349 = vmatmul.mubr.f32.gmra.mxu0 %v396
    %v2350 = vpop.f32.mrf.mxu0
    %v2351 = vadd.f32 0.0, %v2350
    %v2352 = vpop.f32.mrf.mxu0
    %2353 = vmatprep.mubr.f32.mxu0 0.0
    %2354 = vmatmul.mubr.f32.gmra.mxu0 %v399
    %v2355 = vpop.f32.mrf.mxu0
    %v2356 = vadd.f32 0.0, %v2355
    %v2357 = vpop.f32.mrf.mxu0
    %2358 = vdwg.mxu0
    %2360 = vrot.lane.b32.xlu0 %v2074, 32
    %v2361 = vpop.permute.xlu0 %2360
    %v2363 = vmul.f32 %v2111, %v2361
    %2365 = vrot.lane.b32.xlu0 %v2363, 32
    %v2366 = vpop.permute.xlu0 %2365
    %v2367 = vsel %vm401, %v2366, 0
    %2369 = vmatprep.subr.mxu0 0.0
    %2370 = vmatpush1.msra.mxu0 0.0
    %2371 = vmatprep.subr.mxu0 0.0
    %2372 = vmatpush1.msra.mxu0 0.0
    %2373 = vmatprep.subr.mxu0 0.0
    %2374 = vmatpush1.msra.mxu0 0.0
    %2375 = vmatprep.subr.mxu0 0.0
    %2376 = vmatpush1.msra.mxu0 0.0
    %2377 = vmatprep.subr.mxu0 0.0
    %2378 = vmatpush1.msra.mxu0 0.0
    %2379 = vmatprep.subr.mxu0 0.0
    %2380 = vmatpush1.msra.mxu0 0.0
    %2381 = vmatprep.subr.mxu0 0.0
    %2382 = vmatpush1.msra.mxu0 0.0
    %2383 = vmatprep.subr.mxu0 0.0
    %2384 = vmatpush1.msra.mxu0 0.0
    %2385 = vmatprep.subr.mxu0 0.0
    %2386 = vmatpush1.msra.mxu0 0.0
    %2387 = vmatprep.subr.mxu0 0.0
    %2388 = vmatpush1.msra.mxu0 0.0
    %2389 = vmatprep.subr.mxu0 0.0
    %2390 = vmatpush1.msra.mxu0 0.0
    %2391 = vmatprep.subr.mxu0 0.0
    %2392 = vmatpush1.msra.mxu0 0.0
    %2393 = vmatprep.subr.mxu0 0.0
    %2394 = vmatpush1.msra.mxu0 0.0
    %2395 = vmatprep.subr.mxu0 0.0
    %2396 = vmatpush1.msra.mxu0 0.0
    %2397 = vmatprep.subr.mxu0 0.0
    %2398 = vmatpush1.msra.mxu0 0.0
    %2399 = vmatprep.subr.mxu0 0.0
    %2400 = vmatpush1.msra.mxu0 %v2367
    %2401 = vmatprep.subr.mxu0 0.0
    %2402 = vmatpush2.msra.mxu0 0.0
    %2403 = vmatprep.subr.mxu0 0.0
    %2404 = vmatpush2.msra.mxu0 0.0
    %2405 = vmatprep.subr.mxu0 0.0
    %2406 = vmatpush2.msra.mxu0 0.0
    %2407 = vmatprep.subr.mxu0 0.0
    %2408 = vmatpush2.msra.mxu0 0.0
    %2409 = vmatprep.subr.mxu0 0.0
    %2410 = vmatpush2.msra.mxu0 0.0
    %2411 = vmatprep.subr.mxu0 0.0
    %2412 = vmatpush2.msra.mxu0 0.0
    %2413 = vmatprep.subr.mxu0 0.0
    %2414 = vmatpush2.msra.mxu0 0.0
    %2415 = vmatprep.subr.mxu0 0.0
    %2416 = vmatpush2.msra.mxu0 0.0
    %2417 = vmatprep.subr.mxu0 0.0
    %2418 = vmatpush2.msra.mxu0 0.0
    %2419 = vmatprep.subr.mxu0 0.0
    %2420 = vmatpush2.msra.mxu0 0.0
    %2421 = vmatprep.subr.mxu0 0.0
    %2422 = vmatpush2.msra.mxu0 0.0
    %2423 = vmatprep.subr.mxu0 0.0
    %2424 = vmatpush2.msra.mxu0 0.0
    %2425 = vmatprep.subr.mxu0 0.0
    %2426 = vmatpush2.msra.mxu0 0.0
    %2427 = vmatprep.subr.mxu0 0.0
    %2428 = vmatpush2.msra.mxu0 0.0
    %2429 = vmatprep.subr.mxu0 0.0
    %2430 = vmatpush2.msra.mxu0 0.0
    %2431 = vmatprep.subr.mxu0 0.0
    %2432 = vmatpush2.msra.mxu0 0.0
    %2433 = vmatprep.mubr.f32.mxu0 0.0
    %2434 = vmatmul.mubr.f32.gmra.mxu0 %v396
    %v2435 = vpop.f32.mrf.mxu0
    %v2436 = vadd.f32 0.0, %v2435
    %v2437 = vpop.f32.mrf.mxu0
    %2438 = vmatprep.mubr.f32.mxu0 0.0
    %2439 = vmatmul.mubr.f32.gmra.mxu0 %v399
    %v2440 = vpop.f32.mrf.mxu0
    %v2441 = vadd.f32 0.0, %v2440
    %v2442 = vpop.f32.mrf.mxu0
    %2443 = vdwg.mxu0
    %2444 = vst.msk [vmem:[#allocation2 + $0x8] sm:$0xff] %vm142, %v1892
    %2445 = vst.msk [vmem:[#allocation2 + $0x10] sm:$0xff] %vm142, %v1893
    %v2446 = vld [vmem:[#allocation2 + $0x7] sm:$0xff]
    %v2447 = vld [vmem:[#allocation2 + $0xf] sm:$0xff]
    %v2448 = vld [vmem:[#allocation2 + $0x9] sm:$0xff]
    %v2449 = vld [vmem:[#allocation2 + $0x11] sm:$0xff]
    %v2450 = vmul.f32 %v2193, %v2446
    %v2451 = vmul.f32 %v2198, %v2447
    %v2452 = vmul.f32 %v2271, %v2448
    %v2453 = vmul.f32 %v2276, %v2449
    %v2454 = vadd.f32 %v2450, %v2452
    %v2455 = vadd.f32 %v2451, %v2453
    %v2456 = vmul.f32 %v2351, %v1892
    %v2457 = vmul.f32 %v2356, %v1893
    %v2458 = vadd.f32 %v2454, %v2456
    %v2459 = vadd.f32 %v2455, %v2457
    %v2460 = vmul.f32 %v123, %v2436
    %v2461 = vmul.f32 %v124, %v2441
    %v2462 = vadd.f32 %v2460, %v140
    %v2463 = vadd.f32 %v2461, %v141
    %v2464 = vmul.f32 %v131, %v2458
    %v2465 = vmul.f32 %v132, %v2459
    %v2466 = vadd.f32 %v2462, %v2464
    %v2467 = vadd.f32 %v2463, %v2465
    %2469 = vrot.lane.b32.xlu0 %v2073, 96
    %v2470 = vpop.permute.xlu0 %2469
    %s2472 = scalar_lea.vmem [#allocation9], 6
    %2473 = vst.msk [vmem:[%s2472] sm:$0x3] %vm750, %v2470
    %s2474 = scalar_lea.vmem %s0, 8
    %v2475 = vld [vmem:[%s2474] sm:$0x3]
    %v2477 = vsel %vm142, %v2475, 0
    %2479 = vmatprep.subr.mxu0 0.0
    %2480 = vmatpush1.msra.mxu0 0.0
    %2481 = vmatprep.subr.mxu0 0.0
    %2482 = vmatpush1.msra.mxu0 0.0
    %2483 = vmatprep.subr.mxu0 0.0
    %2484 = vmatpush1.msra.mxu0 0.0
    %2485 = vmatprep.subr.mxu0 0.0
    %2486 = vmatpush1.msra.mxu0 0.0
    %2487 = vmatprep.subr.mxu0 0.0
    %2488 = vmatpush1.msra.mxu0 0.0
    %2489 = vmatprep.subr.mxu0 0.0
    %2490 = vmatpush1.msra.mxu0 0.0
    %2491 = vmatprep.subr.mxu0 0.0
    %2492 = vmatpush1.msra.mxu0 0.0
    %2493 = vmatprep.subr.mxu0 0.0
    %2494 = vmatpush1.msra.mxu0 0.0
    %2495 = vmatprep.subr.mxu0 0.0
    %2496 = vmatpush1.msra.mxu0 0.0
    %2497 = vmatprep.subr.mxu0 0.0
    %2498 = vmatpush1.msra.mxu0 0.0
    %2499 = vmatprep.subr.mxu0 0.0
    %2500 = vmatpush1.msra.mxu0 0.0
    %2501 = vmatprep.subr.mxu0 0.0
    %2502 = vmatpush1.msra.mxu0 0.0
    %2503 = vmatprep.subr.mxu0 0.0
    %2504 = vmatpush1.msra.mxu0 %v81
    %2505 = vmatprep.subr.mxu0 0.0
    %2506 = vmatpush1.msra.mxu0 %v80
    %2507 = vmatprep.subr.mxu0 0.0
    %2508 = vmatpush1.msra.mxu0 %v79
    %2509 = vmatprep.subr.mxu0 0.0
    %2510 = vmatpush1.msra.mxu0 %v78
    %2511 = vmatprep.subr.mxu0 0.0
    %2512 = vmatpush2.msra.mxu0 0.0
    %2513 = vmatprep.subr.mxu0 0.0
    %2514 = vmatpush2.msra.mxu0 0.0
    %2515 = vmatprep.subr.mxu0 0.0
    %2516 = vmatpush2.msra.mxu0 0.0
    %2517 = vmatprep.subr.mxu0 0.0
    %2518 = vmatpush2.msra.mxu0 0.0
    %2519 = vmatprep.subr.mxu0 0.0
    %2520 = vmatpush2.msra.mxu0 0.0
    %2521 = vmatprep.subr.mxu0 0.0
    %2522 = vmatpush2.msra.mxu0 0.0
    %2523 = vmatprep.subr.mxu0 0.0
    %2524 = vmatpush2.msra.mxu0 0.0
    %2525 = vmatprep.subr.mxu0 0.0
    %2526 = vmatpush2.msra.mxu0 0.0
    %2527 = vmatprep.subr.mxu0 0.0
    %2528 = vmatpush2.msra.mxu0 0.0
    %2529 = vmatprep.subr.mxu0 0.0
    %2530 = vmatpush2.msra.mxu0 0.0
    %2531 = vmatprep.subr.mxu0 0.0
    %2532 = vmatpush2.msra.mxu0 0.0
    %2533 = vmatprep.subr.mxu0 0.0
    %2534 = vmatpush2.msra.mxu0 0.0
    %2535 = vmatprep.subr.mxu0 0.0
    %2536 = vmatpush2.msra.mxu0 0.0
    %2537 = vmatprep.subr.mxu0 0.0
    %2538 = vmatpush2.msra.mxu0 0.0
    %2539 = vmatprep.subr.mxu0 0.0
    %2540 = vmatpush2.msra.mxu0 0.0
    %2541 = vmatprep.subr.mxu0 0.0
    %2542 = vmatpush2.msra.mxu0 0.0
    %2543 = vmatprep.mubr.f32.mxu0 0.0
    %2544 = vmatmul.mubr.f32.gmra.mxu0 %v2477
    %v2545 = vpop.f32.mrf.mxu0
    %v2546 = vadd.f32 %v155, %v2545
    %v2547 = vpop.f32.mrf.mxu0
    %2548 = vdwg.mxu0
    %v2549 = vsel %vm142, %v2470, 0
    %2551 = vmatprep.subr.mxu0 0.0
    %2552 = vmatpush1.msra.mxu0 0.0
    %2553 = vmatprep.subr.mxu0 0.0
    %2554 = vmatpush1.msra.mxu0 0.0
    %2555 = vmatprep.subr.mxu0 0.0
    %2556 = vmatpush1.msra.mxu0 0.0
    %2557 = vmatprep.subr.mxu0 0.0
    %2558 = vmatpush1.msra.mxu0 0.0
    %2559 = vmatprep.subr.mxu0 0.0
    %2560 = vmatpush1.msra.mxu0 0.0
    %2561 = vmatprep.subr.mxu0 0.0
    %2562 = vmatpush1.msra.mxu0 0.0
    %2563 = vmatprep.subr.mxu0 0.0
    %2564 = vmatpush1.msra.mxu0 0.0
    %2565 = vmatprep.subr.mxu0 0.0
    %2566 = vmatpush1.msra.mxu0 0.0
    %2567 = vmatprep.subr.mxu0 0.0
    %2568 = vmatpush1.msra.mxu0 0.0
    %2569 = vmatprep.subr.mxu0 0.0
    %2570 = vmatpush1.msra.mxu0 0.0
    %2571 = vmatprep.subr.mxu0 0.0
    %2572 = vmatpush1.msra.mxu0 0.0
    %2573 = vmatprep.subr.mxu0 0.0
    %2574 = vmatpush1.msra.mxu0 0.0
    %2575 = vmatprep.subr.mxu0 %v90
    %2576 = vmatpush1.msra.mxu0 %v89
    %2577 = vmatprep.subr.mxu0 %v88
    %2578 = vmatpush1.msra.mxu0 %v87
    %2579 = vmatprep.subr.mxu0 %v86
    %2580 = vmatpush1.msra.mxu0 %v85
    %2581 = vmatprep.subr.mxu0 %v84
    %2582 = vmatpush1.msra.mxu0 %v83
    %2583 = vmatprep.subr.mxu0 0.0
    %2584 = vmatpush2.msra.mxu0 0.0
    %2585 = vmatprep.subr.mxu0 0.0
    %2586 = vmatpush2.msra.mxu0 0.0
    %2587 = vmatprep.subr.mxu0 0.0
    %2588 = vmatpush2.msra.mxu0 0.0
    %2589 = vmatprep.subr.mxu0 0.0
    %2590 = vmatpush2.msra.mxu0 0.0
    %2591 = vmatprep.subr.mxu0 0.0
    %2592 = vmatpush2.msra.mxu0 0.0
    %2593 = vmatprep.subr.mxu0 0.0
    %2594 = vmatpush2.msra.mxu0 0.0
    %2595 = vmatprep.subr.mxu0 0.0
    %2596 = vmatpush2.msra.mxu0 0.0
    %2597 = vmatprep.subr.mxu0 0.0
    %2598 = vmatpush2.msra.mxu0 0.0
    %2599 = vmatprep.subr.mxu0 0.0
    %2600 = vmatpush2.msra.mxu0 0.0
    %2601 = vmatprep.subr.mxu0 0.0
    %2602 = vmatpush2.msra.mxu0 0.0
    %2603 = vmatprep.subr.mxu0 0.0
    %2604 = vmatpush2.msra.mxu0 0.0
    %2605 = vmatprep.subr.mxu0 0.0
    %2606 = vmatpush2.msra.mxu0 0.0
    %2607 = vmatprep.subr.mxu0 0.0
    %2608 = vmatpush2.msra.mxu0 0.0
    %2609 = vmatprep.subr.mxu0 0.0
    %2610 = vmatpush2.msra.mxu0 0.0
    %2611 = vmatprep.subr.mxu0 0.0
    %2612 = vmatpush2.msra.mxu0 0.0
    %2613 = vmatprep.subr.mxu0 0.0
    %2614 = vmatpush2.msra.mxu0 0.0
    %2615 = vmatprep.mubr.f32.mxu0 0.0
    %2616 = vmatmul.mubr.f32.gmra.mxu0 %v2549
    %v2617 = vpop.f32.mrf.mxu0
    %v2618 = vadd.f32 %v234, %v2617
    %v2619 = vpop.f32.mrf.mxu0
    %v2620 = vadd.f32 %v238, %v2619
    %2621 = vdwg.mxu0
    %v2622 = vadd.f32 %v2546, %v2618
    %v2623 = vsub.f32 0.0, %v2622
    %v2624 = vmul.f32 %v2623, 1.442695
    %v2625 = vpow.pop %v2624
    %v2626 = vadd.f32 %v2625, 1.0
    %v2627 = vrcp.pop %v2626
    %v2628 = vmul.f32 1.0, %v2627
    %2630 = vrot.lane.b32.xlu0 %v2618, 64
    %v2631 = vpop.permute.xlu0 %2630
    %v2633 = vmul.f32 %v2628, %v2631
    %2635 = vrot.lane.b32.xlu0 %v2633, 64
    %v2636 = vpop.permute.xlu0 %2635
    %v2638 = vadd.f32 %v2546, %v2636
    %v2639 = vtanh.pop %v2638
    %v2640 = vsub.f32 1.0, %v2628
    %2642 = vrot.lane.b32.xlu0 %v2639, 96
    %v2643 = vpop.permute.xlu0 %2642
    %v2645 = vmul.f32 %v2640, %v2643
    %v2646 = vmul.f32 %v2628, %v2073
    %v2647 = vadd.f32 %v2645, %v2646
    %v2648 = vtanh.pop %v2620
    %2650 = vrot.lane.b32.xlu0 %v2620, 96
    %v2651 = vpop.permute.xlu0 %2650
    %v2653 = vmax.f32 %v2618, %v2651
    %2654 = vrot.lane.b32.xlu0 %v2620, 64
    %v2655 = vpop.permute.xlu0 %2654
    %v2657 = vmax.f32 %v2653, %v2655
    %v2658 = vsub.f32 %v2618, %v2657
    %v2659 = vmul.f32 %v2658, 1.442695
    %v2660 = vpow.pop %v2659
    %2662 = vrot.lane.b32.xlu0 %v2657, 32
    %v2663 = vpop.permute.xlu0 %2662
    %v2665 = vsub.f32 %v2620, %v2663
    %v2666 = vmul.f32 %v2665, 1.442695
    %v2667 = vpow.pop %v2666
    %2668 = vrot.lane.b32.xlu0 %v2657, 64
    %v2669 = vpop.permute.xlu0 %2668
    %v2671 = vsub.f32 %v2620, %v2669
    %v2672 = vmul.f32 %v2671, 1.442695
    %v2673 = vpow.pop %v2672
    %2675 = vrot.lane.b32.xlu0 %v2667, 96
    %v2676 = vpop.permute.xlu0 %2675
    %v2678 = vadd.f32 %v2660, %v2676
    %2680 = vrot.lane.b32.xlu0 %v2673, 64
    %v2681 = vpop.permute.xlu0 %2680
    %v2683 = vadd.f32 %v2678, %v2681
    %v2684 = vrcp.pop %v2683
    %v2685 = vmul.f32 %v2660, %v2684
    %2687 = vrot.lane.b32.xlu0 %v2684, 32
    %v2688 = vpop.permute.xlu0 %2687
    %v2690 = vmul.f32 %v2667, %v2688
    %2691 = vrot.lane.b32.xlu0 %v2684, 64
    %v2692 = vpop.permute.xlu0 %2691
    %v2694 = vmul.f32 %v2673, %v2692
    %2696 = vrot.lane.b32.xlu0 %v2685, 32
    %v2697 = vpop.permute.xlu0 %2696
    %v2698 = vsel %vm401, %v2697, 0
    %2700 = vmatprep.subr.mxu0 0.0
    %2701 = vmatpush1.msra.mxu0 0.0
    %2702 = vmatprep.subr.mxu0 0.0
    %2703 = vmatpush1.msra.mxu0 0.0
    %2704 = vmatprep.subr.mxu0 0.0
    %2705 = vmatpush1.msra.mxu0 0.0
    %2706 = vmatprep.subr.mxu0 0.0
    %2707 = vmatpush1.msra.mxu0 0.0
    %2708 = vmatprep.subr.mxu0 0.0
    %2709 = vmatpush1.msra.mxu0 0.0
    %2710 = vmatprep.subr.mxu0 0.0
    %2711 = vmatpush1.msra.mxu0 0.0
    %2712 = vmatprep.subr.mxu0 0.0
    %2713 = vmatpush1.msra.mxu0 0.0
    %2714 = vmatprep.subr.mxu0 0.0
    %2715 = vmatpush1.msra.mxu0 0.0
    %2716 = vmatprep.subr.mxu0 0.0
    %2717 = vmatpush1.msra.mxu0 0.0
    %2718 = vmatprep.subr.mxu0 0.0
    %2719 = vmatpush1.msra.mxu0 0.0
    %2720 = vmatprep.subr.mxu0 0.0
    %2721 = vmatpush1.msra.mxu0 0.0
    %2722 = vmatprep.subr.mxu0 0.0
    %2723 = vmatpush1.msra.mxu0 0.0
    %2724 = vmatprep.subr.mxu0 0.0
    %2725 = vmatpush1.msra.mxu0 0.0
    %2726 = vmatprep.subr.mxu0 0.0
    %2727 = vmatpush1.msra.mxu0 0.0
    %2728 = vmatprep.subr.mxu0 0.0
    %2729 = vmatpush1.msra.mxu0 0.0
    %2730 = vmatprep.subr.mxu0 0.0
    %2731 = vmatpush1.msra.mxu0 %v2698
    %2732 = vmatprep.subr.mxu0 0.0
    %2733 = vmatpush2.msra.mxu0 0.0
    %2734 = vmatprep.subr.mxu0 0.0
    %2735 = vmatpush2.msra.mxu0 0.0
    %2736 = vmatprep.subr.mxu0 0.0
    %2737 = vmatpush2.msra.mxu0 0.0
    %2738 = vmatprep.subr.mxu0 0.0
    %2739 = vmatpush2.msra.mxu0 0.0
    %2740 = vmatprep.subr.mxu0 0.0
    %2741 = vmatpush2.msra.mxu0 0.0
    %2742 = vmatprep.subr.mxu0 0.0
    %2743 = vmatpush2.msra.mxu0 0.0
    %2744 = vmatprep.subr.mxu0 0.0
    %2745 = vmatpush2.msra.mxu0 0.0
    %2746 = vmatprep.subr.mxu0 0.0
    %2747 = vmatpush2.msra.mxu0 0.0
    %2748 = vmatprep.subr.mxu0 0.0
    %2749 = vmatpush2.msra.mxu0 0.0
    %2750 = vmatprep.subr.mxu0 0.0
    %2751 = vmatpush2.msra.mxu0 0.0
    %2752 = vmatprep.subr.mxu0 0.0
    %2753 = vmatpush2.msra.mxu0 0.0
    %2754 = vmatprep.subr.mxu0 0.0
    %2755 = vmatpush2.msra.mxu0 0.0
    %2756 = vmatprep.subr.mxu0 0.0
    %2757 = vmatpush2.msra.mxu0 0.0
    %2758 = vmatprep.subr.mxu0 0.0
    %2759 = vmatpush2.msra.mxu0 0.0
    %2760 = vmatprep.subr.mxu0 0.0
    %2761 = vmatpush2.msra.mxu0 0.0
    %2762 = vmatprep.subr.mxu0 0.0
    %2763 = vmatpush2.msra.mxu0 0.0
    %2764 = vmatprep.mubr.f32.mxu0 0.0
    %2765 = vmatmul.mubr.f32.gmra.mxu0 %v396
    %v2766 = vpop.f32.mrf.mxu0
    %v2767 = vadd.f32 0.0, %v2766
    %v2768 = vpop.f32.mrf.mxu0
    %2769 = vmatprep.mubr.f32.mxu0 0.0
    %2770 = vmatmul.mubr.f32.gmra.mxu0 %v399
    %v2771 = vpop.f32.mrf.mxu0
    %v2772 = vadd.f32 0.0, %v2771
    %v2773 = vpop.f32.mrf.mxu0
    %2774 = vdwg.mxu0
    %v2776 = vsel %vm401, %v2690, 0
    %2778 = vmatprep.subr.mxu0 0.0
    %2779 = vmatpush1.msra.mxu0 0.0
    %2780 = vmatprep.subr.mxu0 0.0
    %2781 = vmatpush1.msra.mxu0 0.0
    %2782 = vmatprep.subr.mxu0 0.0
    %2783 = vmatpush1.msra.mxu0 0.0
    %2784 = vmatprep.subr.mxu0 0.0
    %2785 = vmatpush1.msra.mxu0 0.0
    %2786 = vmatprep.subr.mxu0 0.0
    %2787 = vmatpush1.msra.mxu0 0.0
    %2788 = vmatprep.subr.mxu0 0.0
    %2789 = vmatpush1.msra.mxu0 0.0
    %2790 = vmatprep.subr.mxu0 0.0
    %2791 = vmatpush1.msra.mxu0 0.0
    %2792 = vmatprep.subr.mxu0 0.0
    %2793 = vmatpush1.msra.mxu0 0.0
    %2794 = vmatprep.subr.mxu0 0.0
    %2795 = vmatpush1.msra.mxu0 0.0
    %2796 = vmatprep.subr.mxu0 0.0
    %2797 = vmatpush1.msra.mxu0 0.0
    %2798 = vmatprep.subr.mxu0 0.0
    %2799 = vmatpush1.msra.mxu0 0.0
    %2800 = vmatprep.subr.mxu0 0.0
    %2801 = vmatpush1.msra.mxu0 0.0
    %2802 = vmatprep.subr.mxu0 0.0
    %2803 = vmatpush1.msra.mxu0 0.0
    %2804 = vmatprep.subr.mxu0 0.0
    %2805 = vmatpush1.msra.mxu0 0.0
    %2806 = vmatprep.subr.mxu0 0.0
    %2807 = vmatpush1.msra.mxu0 0.0
    %2808 = vmatprep.subr.mxu0 0.0
    %2809 = vmatpush1.msra.mxu0 %v2776
    %2810 = vmatprep.subr.mxu0 0.0
    %2811 = vmatpush2.msra.mxu0 0.0
    %2812 = vmatprep.subr.mxu0 0.0
    %2813 = vmatpush2.msra.mxu0 0.0
    %2814 = vmatprep.subr.mxu0 0.0
    %2815 = vmatpush2.msra.mxu0 0.0
    %2816 = vmatprep.subr.mxu0 0.0
    %2817 = vmatpush2.msra.mxu0 0.0
    %2818 = vmatprep.subr.mxu0 0.0
    %2819 = vmatpush2.msra.mxu0 0.0
    %2820 = vmatprep.subr.mxu0 0.0
    %2821 = vmatpush2.msra.mxu0 0.0
    %2822 = vmatprep.subr.mxu0 0.0
    %2823 = vmatpush2.msra.mxu0 0.0
    %2824 = vmatprep.subr.mxu0 0.0
    %2825 = vmatpush2.msra.mxu0 0.0
    %2826 = vmatprep.subr.mxu0 0.0
    %2827 = vmatpush2.msra.mxu0 0.0
    %2828 = vmatprep.subr.mxu0 0.0
    %2829 = vmatpush2.msra.mxu0 0.0
    %2830 = vmatprep.subr.mxu0 0.0
    %2831 = vmatpush2.msra.mxu0 0.0
    %2832 = vmatprep.subr.mxu0 0.0
    %2833 = vmatpush2.msra.mxu0 0.0
    %2834 = vmatprep.subr.mxu0 0.0
    %2835 = vmatpush2.msra.mxu0 0.0
    %2836 = vmatprep.subr.mxu0 0.0
    %2837 = vmatpush2.msra.mxu0 0.0
    %2838 = vmatprep.subr.mxu0 0.0
    %2839 = vmatpush2.msra.mxu0 0.0
    %2840 = vmatprep.subr.mxu0 0.0
    %2841 = vmatpush2.msra.mxu0 0.0
    %2842 = vmatprep.mubr.f32.mxu0 0.0
    %2843 = vmatmul.mubr.f32.gmra.mxu0 %v396
    %v2844 = vpop.f32.mrf.mxu0
    %v2845 = vadd.f32 0.0, %v2844
    %v2846 = vpop.f32.mrf.mxu0
    %2847 = vmatprep.mubr.f32.mxu0 0.0
    %2848 = vmatmul.mubr.f32.gmra.mxu0 %v399
    %v2849 = vpop.f32.mrf.mxu0
    %v2850 = vadd.f32 0.0, %v2849
    %v2851 = vpop.f32.mrf.mxu0
    %2852 = vdwg.mxu0
    %2854 = vrot.lane.b32.xlu0 %v2694, 96
    %v2855 = vpop.permute.xlu0 %2854
    %v2856 = vsel %vm401, %v2855, 0
    %2858 = vmatprep.subr.mxu0 0.0
    %2859 = vmatpush1.msra.mxu0 0.0
    %2860 = vmatprep.subr.mxu0 0.0
    %2861 = vmatpush1.msra.mxu0 0.0
    %2862 = vmatprep.subr.mxu0 0.0
    %2863 = vmatpush1.msra.mxu0 0.0
    %2864 = vmatprep.subr.mxu0 0.0
    %2865 = vmatpush1.msra.mxu0 0.0
    %2866 = vmatprep.subr.mxu0 0.0
    %2867 = vmatpush1.msra.mxu0 0.0
    %2868 = vmatprep.subr.mxu0 0.0
    %2869 = vmatpush1.msra.mxu0 0.0
    %2870 = vmatprep.subr.mxu0 0.0
    %2871 = vmatpush1.msra.mxu0 0.0
    %2872 = vmatprep.subr.mxu0 0.0
    %2873 = vmatpush1.msra.mxu0 0.0
    %2874 = vmatprep.subr.mxu0 0.0
    %2875 = vmatpush1.msra.mxu0 0.0
    %2876 = vmatprep.subr.mxu0 0.0
    %2877 = vmatpush1.msra.mxu0 0.0
    %2878 = vmatprep.subr.mxu0 0.0
    %2879 = vmatpush1.msra.mxu0 0.0
    %2880 = vmatprep.subr.mxu0 0.0
    %2881 = vmatpush1.msra.mxu0 0.0
    %2882 = vmatprep.subr.mxu0 0.0
    %2883 = vmatpush1.msra.mxu0 0.0
    %2884 = vmatprep.subr.mxu0 0.0
    %2885 = vmatpush1.msra.mxu0 0.0
    %2886 = vmatprep.subr.mxu0 0.0
    %2887 = vmatpush1.msra.mxu0 0.0
    %2888 = vmatprep.subr.mxu0 0.0
    %2889 = vmatpush1.msra.mxu0 %v2856
    %2890 = vmatprep.subr.mxu0 0.0
    %2891 = vmatpush2.msra.mxu0 0.0
    %2892 = vmatprep.subr.mxu0 0.0
    %2893 = vmatpush2.msra.mxu0 0.0
    %2894 = vmatprep.subr.mxu0 0.0
    %2895 = vmatpush2.msra.mxu0 0.0
    %2896 = vmatprep.subr.mxu0 0.0
    %2897 = vmatpush2.msra.mxu0 0.0
    %2898 = vmatprep.subr.mxu0 0.0
    %2899 = vmatpush2.msra.mxu0 0.0
    %2900 = vmatprep.subr.mxu0 0.0
    %2901 = vmatpush2.msra.mxu0 0.0
    %2902 = vmatprep.subr.mxu0 0.0
    %2903 = vmatpush2.msra.mxu0 0.0
    %2904 = vmatprep.subr.mxu0 0.0
    %2905 = vmatpush2.msra.mxu0 0.0
    %2906 = vmatprep.subr.mxu0 0.0
    %2907 = vmatpush2.msra.mxu0 0.0
    %2908 = vmatprep.subr.mxu0 0.0
    %2909 = vmatpush2.msra.mxu0 0.0
    %2910 = vmatprep.subr.mxu0 0.0
    %2911 = vmatpush2.msra.mxu0 0.0
    %2912 = vmatprep.subr.mxu0 0.0
    %2913 = vmatpush2.msra.mxu0 0.0
    %2914 = vmatprep.subr.mxu0 0.0
    %2915 = vmatpush2.msra.mxu0 0.0
    %2916 = vmatprep.subr.mxu0 0.0
    %2917 = vmatpush2.msra.mxu0 0.0
    %2918 = vmatprep.subr.mxu0 0.0
    %2919 = vmatpush2.msra.mxu0 0.0
    %2920 = vmatprep.subr.mxu0 0.0
    %2921 = vmatpush2.msra.mxu0 0.0
    %2922 = vmatprep.mubr.f32.mxu0 0.0
    %2923 = vmatmul.mubr.f32.gmra.mxu0 %v396
    %v2924 = vpop.f32.mrf.mxu0
    %v2925 = vadd.f32 0.0, %v2924
    %v2926 = vpop.f32.mrf.mxu0
    %2927 = vmatprep.mubr.f32.mxu0 0.0
    %2928 = vmatmul.mubr.f32.gmra.mxu0 %v399
    %v2929 = vpop.f32.mrf.mxu0
    %v2930 = vadd.f32 0.0, %v2929
    %v2931 = vpop.f32.mrf.mxu0
    %2932 = vdwg.mxu0
    %2934 = vrot.lane.b32.xlu0 %v2648, 32
    %v2935 = vpop.permute.xlu0 %2934
    %v2937 = vmul.f32 %v2685, %v2935
    %2939 = vrot.lane.b32.xlu0 %v2937, 32
    %v2940 = vpop.permute.xlu0 %2939
    %v2941 = vsel %vm401, %v2940, 0
    %2943 = vmatprep.subr.mxu0 0.0
    %2944 = vmatpush1.msra.mxu0 0.0
    %2945 = vmatprep.subr.mxu0 0.0
    %2946 = vmatpush1.msra.mxu0 0.0
    %2947 = vmatprep.subr.mxu0 0.0
    %2948 = vmatpush1.msra.mxu0 0.0
    %2949 = vmatprep.subr.mxu0 0.0
    %2950 = vmatpush1.msra.mxu0 0.0
    %2951 = vmatprep.subr.mxu0 0.0
    %2952 = vmatpush1.msra.mxu0 0.0
    %2953 = vmatprep.subr.mxu0 0.0
    %2954 = vmatpush1.msra.mxu0 0.0
    %2955 = vmatprep.subr.mxu0 0.0
    %2956 = vmatpush1.msra.mxu0 0.0
    %2957 = vmatprep.subr.mxu0 0.0
    %2958 = vmatpush1.msra.mxu0 0.0
    %2959 = vmatprep.subr.mxu0 0.0
    %2960 = vmatpush1.msra.mxu0 0.0
    %2961 = vmatprep.subr.mxu0 0.0
    %2962 = vmatpush1.msra.mxu0 0.0
    %2963 = vmatprep.subr.mxu0 0.0
    %2964 = vmatpush1.msra.mxu0 0.0
    %2965 = vmatprep.subr.mxu0 0.0
    %2966 = vmatpush1.msra.mxu0 0.0
    %2967 = vmatprep.subr.mxu0 0.0
    %2968 = vmatpush1.msra.mxu0 0.0
    %2969 = vmatprep.subr.mxu0 0.0
    %2970 = vmatpush1.msra.mxu0 0.0
    %2971 = vmatprep.subr.mxu0 0.0
    %2972 = vmatpush1.msra.mxu0 0.0
    %2973 = vmatprep.subr.mxu0 0.0
    %2974 = vmatpush1.msra.mxu0 %v2941
    %2975 = vmatprep.subr.mxu0 0.0
    %2976 = vmatpush2.msra.mxu0 0.0
    %2977 = vmatprep.subr.mxu0 0.0
    %2978 = vmatpush2.msra.mxu0 0.0
    %2979 = vmatprep.subr.mxu0 0.0
    %2980 = vmatpush2.msra.mxu0 0.0
    %2981 = vmatprep.subr.mxu0 0.0
    %2982 = vmatpush2.msra.mxu0 0.0
    %2983 = vmatprep.subr.mxu0 0.0
    %2984 = vmatpush2.msra.mxu0 0.0
    %2985 = vmatprep.subr.mxu0 0.0
    %2986 = vmatpush2.msra.mxu0 0.0
    %2987 = vmatprep.subr.mxu0 0.0
    %2988 = vmatpush2.msra.mxu0 0.0
    %2989 = vmatprep.subr.mxu0 0.0
    %2990 = vmatpush2.msra.mxu0 0.0
    %2991 = vmatprep.subr.mxu0 0.0
    %2992 = vmatpush2.msra.mxu0 0.0
    %2993 = vmatprep.subr.mxu0 0.0
    %2994 = vmatpush2.msra.mxu0 0.0
    %2995 = vmatprep.subr.mxu0 0.0
    %2996 = vmatpush2.msra.mxu0 0.0
    %2997 = vmatprep.subr.mxu0 0.0
    %2998 = vmatpush2.msra.mxu0 0.0
    %2999 = vmatprep.subr.mxu0 0.0
    %3000 = vmatpush2.msra.mxu0 0.0
    %3001 = vmatprep.subr.mxu0 0.0
    %3002 = vmatpush2.msra.mxu0 0.0
    %3003 = vmatprep.subr.mxu0 0.0
    %3004 = vmatpush2.msra.mxu0 0.0
    %3005 = vmatprep.subr.mxu0 0.0
    %3006 = vmatpush2.msra.mxu0 0.0
    %3007 = vmatprep.mubr.f32.mxu0 0.0
    %3008 = vmatmul.mubr.f32.gmra.mxu0 %v396
    %v3009 = vpop.f32.mrf.mxu0
    %v3010 = vadd.f32 0.0, %v3009
    %v3011 = vpop.f32.mrf.mxu0
    %3012 = vmatprep.mubr.f32.mxu0 0.0
    %3013 = vmatmul.mubr.f32.gmra.mxu0 %v399
    %v3014 = vpop.f32.mrf.mxu0
    %v3015 = vadd.f32 0.0, %v3014
    %v3016 = vpop.f32.mrf.mxu0
    %3017 = vdwg.mxu0
    %3018 = vst.msk [vmem:[#allocation2 + $0x8] sm:$0xff] %vm142, %v2466
    %3019 = vst.msk [vmem:[#allocation2 + $0x10] sm:$0xff] %vm142, %v2467
    %v3020 = vld [vmem:[#allocation2 + $0x7] sm:$0xff]
    %v3021 = vld [vmem:[#allocation2 + $0xf] sm:$0xff]
    %v3022 = vld [vmem:[#allocation2 + $0x9] sm:$0xff]
    %v3023 = vld [vmem:[#allocation2 + $0x11] sm:$0xff]
    %v3024 = vmul.f32 %v2767, %v3020
    %v3025 = vmul.f32 %v2772, %v3021
    %v3026 = vmul.f32 %v2845, %v3022
    %v3027 = vmul.f32 %v2850, %v3023
    %v3028 = vadd.f32 %v3024, %v3026
    %v3029 = vadd.f32 %v3025, %v3027
    %v3030 = vmul.f32 %v2925, %v2466
    %v3031 = vmul.f32 %v2930, %v2467
    %v3032 = vadd.f32 %v3028, %v3030
    %v3033 = vadd.f32 %v3029, %v3031
    %v3034 = vmul.f32 %v123, %v3010
    %v3035 = vmul.f32 %v124, %v3015
    %v3036 = vadd.f32 %v3034, %v140
    %v3037 = vadd.f32 %v3035, %v141
    %v3038 = vmul.f32 %v131, %v3032
    %v3039 = vmul.f32 %v132, %v3033
    %v3040 = vadd.f32 %v3036, %v3038
    %v3041 = vadd.f32 %v3037, %v3039
    %3043 = vrot.lane.b32.xlu0 %v2647, 96
    %v3044 = vpop.permute.xlu0 %3043
    %s3046 = scalar_lea.vmem [#allocation9], 8
    %3047 = vst.msk [vmem:[%s3046] sm:$0x3] %vm750, %v3044
    %s3048 = scalar_lea.vmem %s0, 10
    %v3049 = vld [vmem:[%s3048] sm:$0x3]
    %v3051 = vsel %vm142, %v3049, 0
    %3053 = vmatprep.subr.mxu0 0.0
    %3054 = vmatpush1.msra.mxu0 0.0
    %3055 = vmatprep.subr.mxu0 0.0
    %3056 = vmatpush1.msra.mxu0 0.0
    %3057 = vmatprep.subr.mxu0 0.0
    %3058 = vmatpush1.msra.mxu0 0.0
    %3059 = vmatprep.subr.mxu0 0.0
    %3060 = vmatpush1.msra.mxu0 0.0
    %3061 = vmatprep.subr.mxu0 0.0
    %3062 = vmatpush1.msra.mxu0 0.0
    %3063 = vmatprep.subr.mxu0 0.0
    %3064 = vmatpush1.msra.mxu0 0.0
    %3065 = vmatprep.subr.mxu0 0.0
    %3066 = vmatpush1.msra.mxu0 0.0
    %3067 = vmatprep.subr.mxu0 0.0
    %3068 = vmatpush1.msra.mxu0 0.0
    %3069 = vmatprep.subr.mxu0 0.0
    %3070 = vmatpush1.msra.mxu0 0.0
    %3071 = vmatprep.subr.mxu0 0.0
    %3072 = vmatpush1.msra.mxu0 0.0
    %3073 = vmatprep.subr.mxu0 0.0
    %3074 = vmatpush1.msra.mxu0 0.0
    %3075 = vmatprep.subr.mxu0 0.0
    %3076 = vmatpush1.msra.mxu0 0.0
    %3077 = vmatprep.subr.mxu0 0.0
    %3078 = vmatpush1.msra.mxu0 %v81
    %3079 = vmatprep.subr.mxu0 0.0
    %3080 = vmatpush1.msra.mxu0 %v80
    %3081 = vmatprep.subr.mxu0 0.0
    %3082 = vmatpush1.msra.mxu0 %v79
    %3083 = vmatprep.subr.mxu0 0.0
    %3084 = vmatpush1.msra.mxu0 %v78
    %3085 = vmatprep.subr.mxu0 0.0
    %3086 = vmatpush2.msra.mxu0 0.0
    %3087 = vmatprep.subr.mxu0 0.0
    %3088 = vmatpush2.msra.mxu0 0.0
    %3089 = vmatprep.subr.mxu0 0.0
    %3090 = vmatpush2.msra.mxu0 0.0
    %3091 = vmatprep.subr.mxu0 0.0
    %3092 = vmatpush2.msra.mxu0 0.0
    %3093 = vmatprep.subr.mxu0 0.0
    %3094 = vmatpush2.msra.mxu0 0.0
    %3095 = vmatprep.subr.mxu0 0.0
    %3096 = vmatpush2.msra.mxu0 0.0
    %3097 = vmatprep.subr.mxu0 0.0
    %3098 = vmatpush2.msra.mxu0 0.0
    %3099 = vmatprep.subr.mxu0 0.0
    %3100 = vmatpush2.msra.mxu0 0.0
    %3101 = vmatprep.subr.mxu0 0.0
    %3102 = vmatpush2.msra.mxu0 0.0
    %3103 = vmatprep.subr.mxu0 0.0
    %3104 = vmatpush2.msra.mxu0 0.0
    %3105 = vmatprep.subr.mxu0 0.0
    %3106 = vmatpush2.msra.mxu0 0.0
    %3107 = vmatprep.subr.mxu0 0.0
    %3108 = vmatpush2.msra.mxu0 0.0
    %3109 = vmatprep.subr.mxu0 0.0
    %3110 = vmatpush2.msra.mxu0 0.0
    %3111 = vmatprep.subr.mxu0 0.0
    %3112 = vmatpush2.msra.mxu0 0.0
    %3113 = vmatprep.subr.mxu0 0.0
    %3114 = vmatpush2.msra.mxu0 0.0
    %3115 = vmatprep.subr.mxu0 0.0
    %3116 = vmatpush2.msra.mxu0 0.0
    %3117 = vmatprep.mubr.f32.mxu0 0.0
    %3118 = vmatmul.mubr.f32.gmra.mxu0 %v3051
    %v3119 = vpop.f32.mrf.mxu0
    %v3120 = vadd.f32 %v155, %v3119
    %v3121 = vpop.f32.mrf.mxu0
    %3122 = vdwg.mxu0
    %v3123 = vsel %vm142, %v3044, 0
    %3125 = vmatprep.subr.mxu0 0.0
    %3126 = vmatpush1.msra.mxu0 0.0
    %3127 = vmatprep.subr.mxu0 0.0
    %3128 = vmatpush1.msra.mxu0 0.0
    %3129 = vmatprep.subr.mxu0 0.0
    %3130 = vmatpush1.msra.mxu0 0.0
    %3131 = vmatprep.subr.mxu0 0.0
    %3132 = vmatpush1.msra.mxu0 0.0
    %3133 = vmatprep.subr.mxu0 0.0
    %3134 = vmatpush1.msra.mxu0 0.0
    %3135 = vmatprep.subr.mxu0 0.0
    %3136 = vmatpush1.msra.mxu0 0.0
    %3137 = vmatprep.subr.mxu0 0.0
    %3138 = vmatpush1.msra.mxu0 0.0
    %3139 = vmatprep.subr.mxu0 0.0
    %3140 = vmatpush1.msra.mxu0 0.0
    %3141 = vmatprep.subr.mxu0 0.0
    %3142 = vmatpush1.msra.mxu0 0.0
    %3143 = vmatprep.subr.mxu0 0.0
    %3144 = vmatpush1.msra.mxu0 0.0
    %3145 = vmatprep.subr.mxu0 0.0
    %3146 = vmatpush1.msra.mxu0 0.0
    %3147 = vmatprep.subr.mxu0 0.0
    %3148 = vmatpush1.msra.mxu0 0.0
    %3149 = vmatprep.subr.mxu0 %v90
    %3150 = vmatpush1.msra.mxu0 %v89
    %3151 = vmatprep.subr.mxu0 %v88
    %3152 = vmatpush1.msra.mxu0 %v87
    %3153 = vmatprep.subr.mxu0 %v86
    %3154 = vmatpush1.msra.mxu0 %v85
    %3155 = vmatprep.subr.mxu0 %v84
    %3156 = vmatpush1.msra.mxu0 %v83
    %3157 = vmatprep.subr.mxu0 0.0
    %3158 = vmatpush2.msra.mxu0 0.0
    %3159 = vmatprep.subr.mxu0 0.0
    %3160 = vmatpush2.msra.mxu0 0.0
    %3161 = vmatprep.subr.mxu0 0.0
    %3162 = vmatpush2.msra.mxu0 0.0
    %3163 = vmatprep.subr.mxu0 0.0
    %3164 = vmatpush2.msra.mxu0 0.0
    %3165 = vmatprep.subr.mxu0 0.0
    %3166 = vmatpush2.msra.mxu0 0.0
    %3167 = vmatprep.subr.mxu0 0.0
    %3168 = vmatpush2.msra.mxu0 0.0
    %3169 = vmatprep.subr.mxu0 0.0
    %3170 = vmatpush2.msra.mxu0 0.0
    %3171 = vmatprep.subr.mxu0 0.0
    %3172 = vmatpush2.msra.mxu0 0.0
    %3173 = vmatprep.subr.mxu0 0.0
    %3174 = vmatpush2.msra.mxu0 0.0
    %3175 = vmatprep.subr.mxu0 0.0
    %3176 = vmatpush2.msra.mxu0 0.0
    %3177 = vmatprep.subr.mxu0 0.0
    %3178 = vmatpush2.msra.mxu0 0.0
    %3179 = vmatprep.subr.mxu0 0.0
    %3180 = vmatpush2.msra.mxu0 0.0
    %3181 = vmatprep.subr.mxu0 0.0
    %3182 = vmatpush2.msra.mxu0 0.0
    %3183 = vmatprep.subr.mxu0 0.0
    %3184 = vmatpush2.msra.mxu0 0.0
    %3185 = vmatprep.subr.mxu0 0.0
    %3186 = vmatpush2.msra.mxu0 0.0
    %3187 = vmatprep.subr.mxu0 0.0
    %3188 = vmatpush2.msra.mxu0 0.0
    %3189 = vmatprep.mubr.f32.mxu0 0.0
    %3190 = vmatmul.mubr.f32.gmra.mxu0 %v3123
    %v3191 = vpop.f32.mrf.mxu0
    %v3192 = vadd.f32 %v234, %v3191
    %v3193 = vpop.f32.mrf.mxu0
    %v3194 = vadd.f32 %v238, %v3193
    %3195 = vdwg.mxu0
    %v3196 = vadd.f32 %v3120, %v3192
    %v3197 = vsub.f32 0.0, %v3196
    %v3198 = vmul.f32 %v3197, 1.442695
    %v3199 = vpow.pop %v3198
    %v3200 = vadd.f32 %v3199, 1.0
    %v3201 = vrcp.pop %v3200
    %v3202 = vmul.f32 1.0, %v3201
    %3204 = vrot.lane.b32.xlu0 %v3192, 64
    %v3205 = vpop.permute.xlu0 %3204
    %v3207 = vmul.f32 %v3202, %v3205
    %3209 = vrot.lane.b32.xlu0 %v3207, 64
    %v3210 = vpop.permute.xlu0 %3209
    %v3212 = vadd.f32 %v3120, %v3210
    %v3213 = vtanh.pop %v3212
    %v3214 = vsub.f32 1.0, %v3202
    %3216 = vrot.lane.b32.xlu0 %v3213, 96
    %v3217 = vpop.permute.xlu0 %3216
    %v3219 = vmul.f32 %v3214, %v3217
    %v3220 = vmul.f32 %v3202, %v2647
    %v3221 = vadd.f32 %v3219, %v3220
    %v3222 = vtanh.pop %v3194
    %3224 = vrot.lane.b32.xlu0 %v3194, 96
    %v3225 = vpop.permute.xlu0 %3224
    %v3227 = vmax.f32 %v3192, %v3225
    %3228 = vrot.lane.b32.xlu0 %v3194, 64
    %v3229 = vpop.permute.xlu0 %3228
    %v3231 = vmax.f32 %v3227, %v3229
    %v3232 = vsub.f32 %v3192, %v3231
    %v3233 = vmul.f32 %v3232, 1.442695
    %v3234 = vpow.pop %v3233
    %3236 = vrot.lane.b32.xlu0 %v3231, 32
    %v3237 = vpop.permute.xlu0 %3236
    %v3239 = vsub.f32 %v3194, %v3237
    %v3240 = vmul.f32 %v3239, 1.442695
    %v3241 = vpow.pop %v3240
    %3242 = vrot.lane.b32.xlu0 %v3231, 64
    %v3243 = vpop.permute.xlu0 %3242
    %v3245 = vsub.f32 %v3194, %v3243
    %v3246 = vmul.f32 %v3245, 1.442695
    %v3247 = vpow.pop %v3246
    %3249 = vrot.lane.b32.xlu0 %v3241, 96
    %v3250 = vpop.permute.xlu0 %3249
    %v3252 = vadd.f32 %v3234, %v3250
    %3254 = vrot.lane.b32.xlu0 %v3247, 64
    %v3255 = vpop.permute.xlu0 %3254
    %v3257 = vadd.f32 %v3252, %v3255
    %v3258 = vrcp.pop %v3257
    %v3259 = vmul.f32 %v3234, %v3258
    %3261 = vrot.lane.b32.xlu0 %v3258, 32
    %v3262 = vpop.permute.xlu0 %3261
    %v3264 = vmul.f32 %v3241, %v3262
    %3265 = vrot.lane.b32.xlu0 %v3258, 64
    %v3266 = vpop.permute.xlu0 %3265
    %v3268 = vmul.f32 %v3247, %v3266
    %3270 = vrot.lane.b32.xlu0 %v3259, 32
    %v3271 = vpop.permute.xlu0 %3270
    %v3272 = vsel %vm401, %v3271, 0
    %3274 = vmatprep.subr.mxu0 0.0
    %3275 = vmatpush1.msra.mxu0 0.0
    %3276 = vmatprep.subr.mxu0 0.0
    %3277 = vmatpush1.msra.mxu0 0.0
    %3278 = vmatprep.subr.mxu0 0.0
    %3279 = vmatpush1.msra.mxu0 0.0
    %3280 = vmatprep.subr.mxu0 0.0
    %3281 = vmatpush1.msra.mxu0 0.0
    %3282 = vmatprep.subr.mxu0 0.0
    %3283 = vmatpush1.msra.mxu0 0.0
    %3284 = vmatprep.subr.mxu0 0.0
    %3285 = vmatpush1.msra.mxu0 0.0
    %3286 = vmatprep.subr.mxu0 0.0
    %3287 = vmatpush1.msra.mxu0 0.0
    %3288 = vmatprep.subr.mxu0 0.0
    %3289 = vmatpush1.msra.mxu0 0.0
    %3290 = vmatprep.subr.mxu0 0.0
    %3291 = vmatpush1.msra.mxu0 0.0
    %3292 = vmatprep.subr.mxu0 0.0
    %3293 = vmatpush1.msra.mxu0 0.0
    %3294 = vmatprep.subr.mxu0 0.0
    %3295 = vmatpush1.msra.mxu0 0.0
    %3296 = vmatprep.subr.mxu0 0.0
    %3297 = vmatpush1.msra.mxu0 0.0
    %3298 = vmatprep.subr.mxu0 0.0
    %3299 = vmatpush1.msra.mxu0 0.0
    %3300 = vmatprep.subr.mxu0 0.0
    %3301 = vmatpush1.msra.mxu0 0.0
    %3302 = vmatprep.subr.mxu0 0.0
    %3303 = vmatpush1.msra.mxu0 0.0
    %3304 = vmatprep.subr.mxu0 0.0
    %3305 = vmatpush1.msra.mxu0 %v3272
    %3306 = vmatprep.subr.mxu0 0.0
    %3307 = vmatpush2.msra.mxu0 0.0
    %3308 = vmatprep.subr.mxu0 0.0
    %3309 = vmatpush2.msra.mxu0 0.0
    %3310 = vmatprep.subr.mxu0 0.0
    %3311 = vmatpush2.msra.mxu0 0.0
    %3312 = vmatprep.subr.mxu0 0.0
    %3313 = vmatpush2.msra.mxu0 0.0
    %3314 = vmatprep.subr.mxu0 0.0
    %3315 = vmatpush2.msra.mxu0 0.0
    %3316 = vmatprep.subr.mxu0 0.0
    %3317 = vmatpush2.msra.mxu0 0.0
    %3318 = vmatprep.subr.mxu0 0.0
    %3319 = vmatpush2.msra.mxu0 0.0
    %3320 = vmatprep.subr.mxu0 0.0
    %3321 = vmatpush2.msra.mxu0 0.0
    %3322 = vmatprep.subr.mxu0 0.0
    %3323 = vmatpush2.msra.mxu0 0.0
    %3324 = vmatprep.subr.mxu0 0.0
    %3325 = vmatpush2.msra.mxu0 0.0
    %3326 = vmatprep.subr.mxu0 0.0
    %3327 = vmatpush2.msra.mxu0 0.0
    %3328 = vmatprep.subr.mxu0 0.0
    %3329 = vmatpush2.msra.mxu0 0.0
    %3330 = vmatprep.subr.mxu0 0.0
    %3331 = vmatpush2.msra.mxu0 0.0
    %3332 = vmatprep.subr.mxu0 0.0
    %3333 = vmatpush2.msra.mxu0 0.0
    %3334 = vmatprep.subr.mxu0 0.0
    %3335 = vmatpush2.msra.mxu0 0.0
    %3336 = vmatprep.subr.mxu0 0.0
    %3337 = vmatpush2.msra.mxu0 0.0
    %3338 = vmatprep.mubr.f32.mxu0 0.0
    %3339 = vmatmul.mubr.f32.gmra.mxu0 %v396
    %v3340 = vpop.f32.mrf.mxu0
    %v3341 = vadd.f32 0.0, %v3340
    %v3342 = vpop.f32.mrf.mxu0
    %3343 = vmatprep.mubr.f32.mxu0 0.0
    %3344 = vmatmul.mubr.f32.gmra.mxu0 %v399
    %v3345 = vpop.f32.mrf.mxu0
    %v3346 = vadd.f32 0.0, %v3345
    %v3347 = vpop.f32.mrf.mxu0
    %3348 = vdwg.mxu0
    %v3350 = vsel %vm401, %v3264, 0
    %3352 = vmatprep.subr.mxu0 0.0
    %3353 = vmatpush1.msra.mxu0 0.0
    %3354 = vmatprep.subr.mxu0 0.0
    %3355 = vmatpush1.msra.mxu0 0.0
    %3356 = vmatprep.subr.mxu0 0.0
    %3357 = vmatpush1.msra.mxu0 0.0
    %3358 = vmatprep.subr.mxu0 0.0
    %3359 = vmatpush1.msra.mxu0 0.0
    %3360 = vmatprep.subr.mxu0 0.0
    %3361 = vmatpush1.msra.mxu0 0.0
    %3362 = vmatprep.subr.mxu0 0.0
    %3363 = vmatpush1.msra.mxu0 0.0
    %3364 = vmatprep.subr.mxu0 0.0
    %3365 = vmatpush1.msra.mxu0 0.0
    %3366 = vmatprep.subr.mxu0 0.0
    %3367 = vmatpush1.msra.mxu0 0.0
    %3368 = vmatprep.subr.mxu0 0.0
    %3369 = vmatpush1.msra.mxu0 0.0
    %3370 = vmatprep.subr.mxu0 0.0
    %3371 = vmatpush1.msra.mxu0 0.0
    %3372 = vmatprep.subr.mxu0 0.0
    %3373 = vmatpush1.msra.mxu0 0.0
    %3374 = vmatprep.subr.mxu0 0.0
    %3375 = vmatpush1.msra.mxu0 0.0
    %3376 = vmatprep.subr.mxu0 0.0
    %3377 = vmatpush1.msra.mxu0 0.0
    %3378 = vmatprep.subr.mxu0 0.0
    %3379 = vmatpush1.msra.mxu0 0.0
    %3380 = vmatprep.subr.mxu0 0.0
    %3381 = vmatpush1.msra.mxu0 0.0
    %3382 = vmatprep.subr.mxu0 0.0
    %3383 = vmatpush1.msra.mxu0 %v3350
    %3384 = vmatprep.subr.mxu0 0.0
    %3385 = vmatpush2.msra.mxu0 0.0
    %3386 = vmatprep.subr.mxu0 0.0
    %3387 = vmatpush2.msra.mxu0 0.0
    %3388 = vmatprep.subr.mxu0 0.0
    %3389 = vmatpush2.msra.mxu0 0.0
    %3390 = vmatprep.subr.mxu0 0.0
    %3391 = vmatpush2.msra.mxu0 0.0
    %3392 = vmatprep.subr.mxu0 0.0
    %3393 = vmatpush2.msra.mxu0 0.0
    %3394 = vmatprep.subr.mxu0 0.0
    %3395 = vmatpush2.msra.mxu0 0.0
    %3396 = vmatprep.subr.mxu0 0.0
    %3397 = vmatpush2.msra.mxu0 0.0
    %3398 = vmatprep.subr.mxu0 0.0
    %3399 = vmatpush2.msra.mxu0 0.0
    %3400 = vmatprep.subr.mxu0 0.0
    %3401 = vmatpush2.msra.mxu0 0.0
    %3402 = vmatprep.subr.mxu0 0.0
    %3403 = vmatpush2.msra.mxu0 0.0
    %3404 = vmatprep.subr.mxu0 0.0
    %3405 = vmatpush2.msra.mxu0 0.0
    %3406 = vmatprep.subr.mxu0 0.0
    %3407 = vmatpush2.msra.mxu0 0.0
    %3408 = vmatprep.subr.mxu0 0.0
    %3409 = vmatpush2.msra.mxu0 0.0
    %3410 = vmatprep.subr.mxu0 0.0
    %3411 = vmatpush2.msra.mxu0 0.0
    %3412 = vmatprep.subr.mxu0 0.0
    %3413 = vmatpush2.msra.mxu0 0.0
    %3414 = vmatprep.subr.mxu0 0.0
    %3415 = vmatpush2.msra.mxu0 0.0
    %3416 = vmatprep.mubr.f32.mxu0 0.0
    %3417 = vmatmul.mubr.f32.gmra.mxu0 %v396
    %v3418 = vpop.f32.mrf.mxu0
    %v3419 = vadd.f32 0.0, %v3418
    %v3420 = vpop.f32.mrf.mxu0
    %3421 = vmatprep.mubr.f32.mxu0 0.0
    %3422 = vmatmul.mubr.f32.gmra.mxu0 %v399
    %v3423 = vpop.f32.mrf.mxu0
    %v3424 = vadd.f32 0.0, %v3423
    %v3425 = vpop.f32.mrf.mxu0
    %3426 = vdwg.mxu0
    %3428 = vrot.lane.b32.xlu0 %v3268, 96
    %v3429 = vpop.permute.xlu0 %3428
    %v3430 = vsel %vm401, %v3429, 0
    %3432 = vmatprep.subr.mxu0 0.0
    %3433 = vmatpush1.msra.mxu0 0.0
    %3434 = vmatprep.subr.mxu0 0.0
    %3435 = vmatpush1.msra.mxu0 0.0
    %3436 = vmatprep.subr.mxu0 0.0
    %3437 = vmatpush1.msra.mxu0 0.0
    %3438 = vmatprep.subr.mxu0 0.0
    %3439 = vmatpush1.msra.mxu0 0.0
    %3440 = vmatprep.subr.mxu0 0.0
    %3441 = vmatpush1.msra.mxu0 0.0
    %3442 = vmatprep.subr.mxu0 0.0
    %3443 = vmatpush1.msra.mxu0 0.0
    %3444 = vmatprep.subr.mxu0 0.0
    %3445 = vmatpush1.msra.mxu0 0.0
    %3446 = vmatprep.subr.mxu0 0.0
    %3447 = vmatpush1.msra.mxu0 0.0
    %3448 = vmatprep.subr.mxu0 0.0
    %3449 = vmatpush1.msra.mxu0 0.0
    %3450 = vmatprep.subr.mxu0 0.0
    %3451 = vmatpush1.msra.mxu0 0.0
    %3452 = vmatprep.subr.mxu0 0.0
    %3453 = vmatpush1.msra.mxu0 0.0
    %3454 = vmatprep.subr.mxu0 0.0
    %3455 = vmatpush1.msra.mxu0 0.0
    %3456 = vmatprep.subr.mxu0 0.0
    %3457 = vmatpush1.msra.mxu0 0.0
    %3458 = vmatprep.subr.mxu0 0.0
    %3459 = vmatpush1.msra.mxu0 0.0
    %3460 = vmatprep.subr.mxu0 0.0
    %3461 = vmatpush1.msra.mxu0 0.0
    %3462 = vmatprep.subr.mxu0 0.0
    %3463 = vmatpush1.msra.mxu0 %v3430
    %3464 = vmatprep.subr.mxu0 0.0
    %3465 = vmatpush2.msra.mxu0 0.0
    %3466 = vmatprep.subr.mxu0 0.0
    %3467 = vmatpush2.msra.mxu0 0.0
    %3468 = vmatprep.subr.mxu0 0.0
    %3469 = vmatpush2.msra.mxu0 0.0
    %3470 = vmatprep.subr.mxu0 0.0
    %3471 = vmatpush2.msra.mxu0 0.0
    %3472 = vmatprep.subr.mxu0 0.0
    %3473 = vmatpush2.msra.mxu0 0.0
    %3474 = vmatprep.subr.mxu0 0.0
    %3475 = vmatpush2.msra.mxu0 0.0
    %3476 = vmatprep.subr.mxu0 0.0
    %3477 = vmatpush2.msra.mxu0 0.0
    %3478 = vmatprep.subr.mxu0 0.0
    %3479 = vmatpush2.msra.mxu0 0.0
    %3480 = vmatprep.subr.mxu0 0.0
    %3481 = vmatpush2.msra.mxu0 0.0
    %3482 = vmatprep.subr.mxu0 0.0
    %3483 = vmatpush2.msra.mxu0 0.0
    %3484 = vmatprep.subr.mxu0 0.0
    %3485 = vmatpush2.msra.mxu0 0.0
    %3486 = vmatprep.subr.mxu0 0.0
    %3487 = vmatpush2.msra.mxu0 0.0
    %3488 = vmatprep.subr.mxu0 0.0
    %3489 = vmatpush2.msra.mxu0 0.0
    %3490 = vmatprep.subr.mxu0 0.0
    %3491 = vmatpush2.msra.mxu0 0.0
    %3492 = vmatprep.subr.mxu0 0.0
    %3493 = vmatpush2.msra.mxu0 0.0
    %3494 = vmatprep.subr.mxu0 0.0
    %3495 = vmatpush2.msra.mxu0 0.0
    %3496 = vmatprep.mubr.f32.mxu0 0.0
    %3497 = vmatmul.mubr.f32.gmra.mxu0 %v396
    %v3498 = vpop.f32.mrf.mxu0
    %v3499 = vadd.f32 0.0, %v3498
    %v3500 = vpop.f32.mrf.mxu0
    %3501 = vmatprep.mubr.f32.mxu0 0.0
    %3502 = vmatmul.mubr.f32.gmra.mxu0 %v399
    %v3503 = vpop.f32.mrf.mxu0
    %v3504 = vadd.f32 0.0, %v3503
    %v3505 = vpop.f32.mrf.mxu0
    %3506 = vdwg.mxu0
    %3508 = vrot.lane.b32.xlu0 %v3222, 32
    %v3509 = vpop.permute.xlu0 %3508
    %v3511 = vmul.f32 %v3259, %v3509
    %3513 = vrot.lane.b32.xlu0 %v3511, 32
    %v3514 = vpop.permute.xlu0 %3513
    %v3515 = vsel %vm401, %v3514, 0
    %3517 = vmatprep.subr.mxu0 0.0
    %3518 = vmatpush1.msra.mxu0 0.0
    %3519 = vmatprep.subr.mxu0 0.0
    %3520 = vmatpush1.msra.mxu0 0.0
    %3521 = vmatprep.subr.mxu0 0.0
    %3522 = vmatpush1.msra.mxu0 0.0
    %3523 = vmatprep.subr.mxu0 0.0
    %3524 = vmatpush1.msra.mxu0 0.0
    %3525 = vmatprep.subr.mxu0 0.0
    %3526 = vmatpush1.msra.mxu0 0.0
    %3527 = vmatprep.subr.mxu0 0.0
    %3528 = vmatpush1.msra.mxu0 0.0
    %3529 = vmatprep.subr.mxu0 0.0
    %3530 = vmatpush1.msra.mxu0 0.0
    %3531 = vmatprep.subr.mxu0 0.0
    %3532 = vmatpush1.msra.mxu0 0.0
    %3533 = vmatprep.subr.mxu0 0.0
    %3534 = vmatpush1.msra.mxu0 0.0
    %3535 = vmatprep.subr.mxu0 0.0
    %3536 = vmatpush1.msra.mxu0 0.0
    %3537 = vmatprep.subr.mxu0 0.0
    %3538 = vmatpush1.msra.mxu0 0.0
    %3539 = vmatprep.subr.mxu0 0.0
    %3540 = vmatpush1.msra.mxu0 0.0
    %3541 = vmatprep.subr.mxu0 0.0
    %3542 = vmatpush1.msra.mxu0 0.0
    %3543 = vmatprep.subr.mxu0 0.0
    %3544 = vmatpush1.msra.mxu0 0.0
    %3545 = vmatprep.subr.mxu0 0.0
    %3546 = vmatpush1.msra.mxu0 0.0
    %3547 = vmatprep.subr.mxu0 0.0
    %3548 = vmatpush1.msra.mxu0 %v3515
    %3549 = vmatprep.subr.mxu0 0.0
    %3550 = vmatpush2.msra.mxu0 0.0
    %3551 = vmatprep.subr.mxu0 0.0
    %3552 = vmatpush2.msra.mxu0 0.0
    %3553 = vmatprep.subr.mxu0 0.0
    %3554 = vmatpush2.msra.mxu0 0.0
    %3555 = vmatprep.subr.mxu0 0.0
    %3556 = vmatpush2.msra.mxu0 0.0
    %3557 = vmatprep.subr.mxu0 0.0
    %3558 = vmatpush2.msra.mxu0 0.0
    %3559 = vmatprep.subr.mxu0 0.0
    %3560 = vmatpush2.msra.mxu0 0.0
    %3561 = vmatprep.subr.mxu0 0.0
    %3562 = vmatpush2.msra.mxu0 0.0
    %3563 = vmatprep.subr.mxu0 0.0
    %3564 = vmatpush2.msra.mxu0 0.0
    %3565 = vmatprep.subr.mxu0 0.0
    %3566 = vmatpush2.msra.mxu0 0.0
    %3567 = vmatprep.subr.mxu0 0.0
    %3568 = vmatpush2.msra.mxu0 0.0
    %3569 = vmatprep.subr.mxu0 0.0
    %3570 = vmatpush2.msra.mxu0 0.0
    %3571 = vmatprep.subr.mxu0 0.0
    %3572 = vmatpush2.msra.mxu0 0.0
    %3573 = vmatprep.subr.mxu0 0.0
    %3574 = vmatpush2.msra.mxu0 0.0
    %3575 = vmatprep.subr.mxu0 0.0
    %3576 = vmatpush2.msra.mxu0 0.0
    %3577 = vmatprep.subr.mxu0 0.0
    %3578 = vmatpush2.msra.mxu0 0.0
    %3579 = vmatprep.subr.mxu0 0.0
    %3580 = vmatpush2.msra.mxu0 0.0
    %3581 = vmatprep.mubr.f32.mxu0 0.0
    %3582 = vmatmul.mubr.f32.gmra.mxu0 %v396
    %v3583 = vpop.f32.mrf.mxu0
    %v3584 = vadd.f32 0.0, %v3583
    %v3585 = vpop.f32.mrf.mxu0
    %3586 = vmatprep.mubr.f32.mxu0 0.0
    %3587 = vmatmul.mubr.f32.gmra.mxu0 %v399
    %v3588 = vpop.f32.mrf.mxu0
    %v3589 = vadd.f32 0.0, %v3588
    %v3590 = vpop.f32.mrf.mxu0
    %3591 = vdwg.mxu0
    %3592 = vst.msk [vmem:[#allocation2 + $0x8] sm:$0xff] %vm142, %v3040
    %3593 = vst.msk [vmem:[#allocation2 + $0x10] sm:$0xff] %vm142, %v3041
    %v3594 = vld [vmem:[#allocation2 + $0x7] sm:$0xff]
    %v3595 = vld [vmem:[#allocation2 + $0xf] sm:$0xff]
    %v3596 = vld [vmem:[#allocation2 + $0x9] sm:$0xff]
    %v3597 = vld [vmem:[#allocation2 + $0x11] sm:$0xff]
    %v3598 = vmul.f32 %v3341, %v3594
    %v3599 = vmul.f32 %v3346, %v3595
    %v3600 = vmul.f32 %v3419, %v3596
    %v3601 = vmul.f32 %v3424, %v3597
    %v3602 = vadd.f32 %v3598, %v3600
    %v3603 = vadd.f32 %v3599, %v3601
    %v3604 = vmul.f32 %v3499, %v3040
    %v3605 = vmul.f32 %v3504, %v3041
    %v3606 = vadd.f32 %v3602, %v3604
    %v3607 = vadd.f32 %v3603, %v3605
    %v3608 = vmul.f32 %v123, %v3584
    %v3609 = vmul.f32 %v124, %v3589
    %v3610 = vadd.f32 %v3608, %v140
    %v3611 = vadd.f32 %v3609, %v141
    %v3612 = vmul.f32 %v131, %v3606
    %v3613 = vmul.f32 %v132, %v3607
    %v3614 = vadd.f32 %v3610, %v3612
    %v3615 = vadd.f32 %v3611, %v3613
    %3617 = vrot.lane.b32.xlu0 %v3221, 96
    %v3618 = vpop.permute.xlu0 %3617
    %s3620 = scalar_lea.vmem [#allocation9], 10
    %3621 = vst.msk [vmem:[%s3620] sm:$0x3] %vm750, %v3618
    %s3622 = scalar_lea.vmem %s0, 12
    %v3623 = vld [vmem:[%s3622] sm:$0x3]
    %v3625 = vsel %vm142, %v3623, 0
    %3627 = vmatprep.subr.mxu0 0.0
    %3628 = vmatpush1.msra.mxu0 0.0
    %3629 = vmatprep.subr.mxu0 0.0
    %3630 = vmatpush1.msra.mxu0 0.0
    %3631 = vmatprep.subr.mxu0 0.0
    %3632 = vmatpush1.msra.mxu0 0.0
    %3633 = vmatprep.subr.mxu0 0.0
    %3634 = vmatpush1.msra.mxu0 0.0
    %3635 = vmatprep.subr.mxu0 0.0
    %3636 = vmatpush1.msra.mxu0 0.0
    %3637 = vmatprep.subr.mxu0 0.0
    %3638 = vmatpush1.msra.mxu0 0.0
    %3639 = vmatprep.subr.mxu0 0.0
    %3640 = vmatpush1.msra.mxu0 0.0
    %3641 = vmatprep.subr.mxu0 0.0
    %3642 = vmatpush1.msra.mxu0 0.0
    %3643 = vmatprep.subr.mxu0 0.0
    %3644 = vmatpush1.msra.mxu0 0.0
    %3645 = vmatprep.subr.mxu0 0.0
    %3646 = vmatpush1.msra.mxu0 0.0
    %3647 = vmatprep.subr.mxu0 0.0
    %3648 = vmatpush1.msra.mxu0 0.0
    %3649 = vmatprep.subr.mxu0 0.0
    %3650 = vmatpush1.msra.mxu0 0.0
    %3651 = vmatprep.subr.mxu0 0.0
    %3652 = vmatpush1.msra.mxu0 %v81
    %3653 = vmatprep.subr.mxu0 0.0
    %3654 = vmatpush1.msra.mxu0 %v80
    %3655 = vmatprep.subr.mxu0 0.0
    %3656 = vmatpush1.msra.mxu0 %v79
    %3657 = vmatprep.subr.mxu0 0.0
    %3658 = vmatpush1.msra.mxu0 %v78
    %3659 = vmatprep.subr.mxu0 0.0
    %3660 = vmatpush2.msra.mxu0 0.0
    %3661 = vmatprep.subr.mxu0 0.0
    %3662 = vmatpush2.msra.mxu0 0.0
    %3663 = vmatprep.subr.mxu0 0.0
    %3664 = vmatpush2.msra.mxu0 0.0
    %3665 = vmatprep.subr.mxu0 0.0
    %3666 = vmatpush2.msra.mxu0 0.0
    %3667 = vmatprep.subr.mxu0 0.0
    %3668 = vmatpush2.msra.mxu0 0.0
    %3669 = vmatprep.subr.mxu0 0.0
    %3670 = vmatpush2.msra.mxu0 0.0
    %3671 = vmatprep.subr.mxu0 0.0
    %3672 = vmatpush2.msra.mxu0 0.0
    %3673 = vmatprep.subr.mxu0 0.0
    %3674 = vmatpush2.msra.mxu0 0.0
    %3675 = vmatprep.subr.mxu0 0.0
    %3676 = vmatpush2.msra.mxu0 0.0
    %3677 = vmatprep.subr.mxu0 0.0
    %3678 = vmatpush2.msra.mxu0 0.0
    %3679 = vmatprep.subr.mxu0 0.0
    %3680 = vmatpush2.msra.mxu0 0.0
    %3681 = vmatprep.subr.mxu0 0.0
    %3682 = vmatpush2.msra.mxu0 0.0
    %3683 = vmatprep.subr.mxu0 0.0
    %3684 = vmatpush2.msra.mxu0 0.0
    %3685 = vmatprep.subr.mxu0 0.0
    %3686 = vmatpush2.msra.mxu0 0.0
    %3687 = vmatprep.subr.mxu0 0.0
    %3688 = vmatpush2.msra.mxu0 0.0
    %3689 = vmatprep.subr.mxu0 0.0
    %3690 = vmatpush2.msra.mxu0 0.0
    %3691 = vmatprep.mubr.f32.mxu0 0.0
    %3692 = vmatmul.mubr.f32.gmra.mxu0 %v3625
    %v3693 = vpop.f32.mrf.mxu0
    %v3694 = vadd.f32 %v155, %v3693
    %v3695 = vpop.f32.mrf.mxu0
    %3696 = vdwg.mxu0
    %v3697 = vsel %vm142, %v3618, 0
    %3699 = vmatprep.subr.mxu0 0.0
    %3700 = vmatpush1.msra.mxu0 0.0
    %3701 = vmatprep.subr.mxu0 0.0
    %3702 = vmatpush1.msra.mxu0 0.0
    %3703 = vmatprep.subr.mxu0 0.0
    %3704 = vmatpush1.msra.mxu0 0.0
    %3705 = vmatprep.subr.mxu0 0.0
    %3706 = vmatpush1.msra.mxu0 0.0
    %3707 = vmatprep.subr.mxu0 0.0
    %3708 = vmatpush1.msra.mxu0 0.0
    %3709 = vmatprep.subr.mxu0 0.0
    %3710 = vmatpush1.msra.mxu0 0.0
    %3711 = vmatprep.subr.mxu0 0.0
    %3712 = vmatpush1.msra.mxu0 0.0
    %3713 = vmatprep.subr.mxu0 0.0
    %3714 = vmatpush1.msra.mxu0 0.0
    %3715 = vmatprep.subr.mxu0 0.0
    %3716 = vmatpush1.msra.mxu0 0.0
    %3717 = vmatprep.subr.mxu0 0.0
    %3718 = vmatpush1.msra.mxu0 0.0
    %3719 = vmatprep.subr.mxu0 0.0
    %3720 = vmatpush1.msra.mxu0 0.0
    %3721 = vmatprep.subr.mxu0 0.0
    %3722 = vmatpush1.msra.mxu0 0.0
    %3723 = vmatprep.subr.mxu0 %v90
    %3724 = vmatpush1.msra.mxu0 %v89
    %3725 = vmatprep.subr.mxu0 %v88
    %3726 = vmatpush1.msra.mxu0 %v87
    %3727 = vmatprep.subr.mxu0 %v86
    %3728 = vmatpush1.msra.mxu0 %v85
    %3729 = vmatprep.subr.mxu0 %v84
    %3730 = vmatpush1.msra.mxu0 %v83
    %3731 = vmatprep.subr.mxu0 0.0
    %3732 = vmatpush2.msra.mxu0 0.0
    %3733 = vmatprep.subr.mxu0 0.0
    %3734 = vmatpush2.msra.mxu0 0.0
    %3735 = vmatprep.subr.mxu0 0.0
    %3736 = vmatpush2.msra.mxu0 0.0
    %3737 = vmatprep.subr.mxu0 0.0
    %3738 = vmatpush2.msra.mxu0 0.0
    %3739 = vmatprep.subr.mxu0 0.0
    %3740 = vmatpush2.msra.mxu0 0.0
    %3741 = vmatprep.subr.mxu0 0.0
    %3742 = vmatpush2.msra.mxu0 0.0
    %3743 = vmatprep.subr.mxu0 0.0
    %3744 = vmatpush2.msra.mxu0 0.0
    %3745 = vmatprep.subr.mxu0 0.0
    %3746 = vmatpush2.msra.mxu0 0.0
    %3747 = vmatprep.subr.mxu0 0.0
    %3748 = vmatpush2.msra.mxu0 0.0
    %3749 = vmatprep.subr.mxu0 0.0
    %3750 = vmatpush2.msra.mxu0 0.0
    %3751 = vmatprep.subr.mxu0 0.0
    %3752 = vmatpush2.msra.mxu0 0.0
    %3753 = vmatprep.subr.mxu0 0.0
    %3754 = vmatpush2.msra.mxu0 0.0
    %3755 = vmatprep.subr.mxu0 0.0
    %3756 = vmatpush2.msra.mxu0 0.0
    %3757 = vmatprep.subr.mxu0 0.0
    %3758 = vmatpush2.msra.mxu0 0.0
    %3759 = vmatprep.subr.mxu0 0.0
    %3760 = vmatpush2.msra.mxu0 0.0
    %3761 = vmatprep.subr.mxu0 0.0
    %3762 = vmatpush2.msra.mxu0 0.0
    %3763 = vmatprep.mubr.f32.mxu0 0.0
    %3764 = vmatmul.mubr.f32.gmra.mxu0 %v3697
    %v3765 = vpop.f32.mrf.mxu0
    %v3766 = vadd.f32 %v234, %v3765
    %v3767 = vpop.f32.mrf.mxu0
    %v3768 = vadd.f32 %v238, %v3767
    %3769 = vdwg.mxu0
    %v3770 = vadd.f32 %v3694, %v3766
    %v3771 = vsub.f32 0.0, %v3770
    %v3772 = vmul.f32 %v3771, 1.442695
    %v3773 = vpow.pop %v3772
    %v3774 = vadd.f32 %v3773, 1.0
    %v3775 = vrcp.pop %v3774
    %v3776 = vmul.f32 1.0, %v3775
    %3778 = vrot.lane.b32.xlu0 %v3766, 64
    %v3779 = vpop.permute.xlu0 %3778
    %v3781 = vmul.f32 %v3776, %v3779
    %3783 = vrot.lane.b32.xlu0 %v3781, 64
    %v3784 = vpop.permute.xlu0 %3783
    %v3786 = vadd.f32 %v3694, %v3784
    %v3787 = vtanh.pop %v3786
    %v3788 = vsub.f32 1.0, %v3776
    %3790 = vrot.lane.b32.xlu0 %v3787, 96
    %v3791 = vpop.permute.xlu0 %3790
    %v3793 = vmul.f32 %v3788, %v3791
    %v3794 = vmul.f32 %v3776, %v3221
    %v3795 = vadd.f32 %v3793, %v3794
    %v3796 = vtanh.pop %v3768
    %3798 = vrot.lane.b32.xlu0 %v3768, 96
    %v3799 = vpop.permute.xlu0 %3798
    %v3801 = vmax.f32 %v3766, %v3799
    %3802 = vrot.lane.b32.xlu0 %v3768, 64
    %v3803 = vpop.permute.xlu0 %3802
    %v3805 = vmax.f32 %v3801, %v3803
    %v3806 = vsub.f32 %v3766, %v3805
    %v3807 = vmul.f32 %v3806, 1.442695
    %v3808 = vpow.pop %v3807
    %3810 = vrot.lane.b32.xlu0 %v3805, 32
    %v3811 = vpop.permute.xlu0 %3810
    %v3813 = vsub.f32 %v3768, %v3811
    %v3814 = vmul.f32 %v3813, 1.442695
    %v3815 = vpow.pop %v3814
    %3816 = vrot.lane.b32.xlu0 %v3805, 64
    %v3817 = vpop.permute.xlu0 %3816
    %v3819 = vsub.f32 %v3768, %v3817
    %v3820 = vmul.f32 %v3819, 1.442695
    %v3821 = vpow.pop %v3820
    %3823 = vrot.lane.b32.xlu0 %v3815, 96
    %v3824 = vpop.permute.xlu0 %3823
    %v3826 = vadd.f32 %v3808, %v3824
    %3828 = vrot.lane.b32.xlu0 %v3821, 64
    %v3829 = vpop.permute.xlu0 %3828
    %v3831 = vadd.f32 %v3826, %v3829
    %v3832 = vrcp.pop %v3831
    %v3833 = vmul.f32 %v3808, %v3832
    %3835 = vrot.lane.b32.xlu0 %v3832, 32
    %v3836 = vpop.permute.xlu0 %3835
    %v3838 = vmul.f32 %v3815, %v3836
    %3839 = vrot.lane.b32.xlu0 %v3832, 64
    %v3840 = vpop.permute.xlu0 %3839
    %v3842 = vmul.f32 %v3821, %v3840
    %3844 = vrot.lane.b32.xlu0 %v3833, 32
    %v3845 = vpop.permute.xlu0 %3844
    %v3846 = vsel %vm401, %v3845, 0
    %3848 = vmatprep.subr.mxu0 0.0
    %3849 = vmatpush1.msra.mxu0 0.0
    %3850 = vmatprep.subr.mxu0 0.0
    %3851 = vmatpush1.msra.mxu0 0.0
    %3852 = vmatprep.subr.mxu0 0.0
    %3853 = vmatpush1.msra.mxu0 0.0
    %3854 = vmatprep.subr.mxu0 0.0
    %3855 = vmatpush1.msra.mxu0 0.0
    %3856 = vmatprep.subr.mxu0 0.0
    %3857 = vmatpush1.msra.mxu0 0.0
    %3858 = vmatprep.subr.mxu0 0.0
    %3859 = vmatpush1.msra.mxu0 0.0
    %3860 = vmatprep.subr.mxu0 0.0
    %3861 = vmatpush1.msra.mxu0 0.0
    %3862 = vmatprep.subr.mxu0 0.0
    %3863 = vmatpush1.msra.mxu0 0.0
    %3864 = vmatprep.subr.mxu0 0.0
    %3865 = vmatpush1.msra.mxu0 0.0
    %3866 = vmatprep.subr.mxu0 0.0
    %3867 = vmatpush1.msra.mxu0 0.0
    %3868 = vmatprep.subr.mxu0 0.0
    %3869 = vmatpush1.msra.mxu0 0.0
    %3870 = vmatprep.subr.mxu0 0.0
    %3871 = vmatpush1.msra.mxu0 0.0
    %3872 = vmatprep.subr.mxu0 0.0
    %3873 = vmatpush1.msra.mxu0 0.0
    %3874 = vmatprep.subr.mxu0 0.0
    %3875 = vmatpush1.msra.mxu0 0.0
    %3876 = vmatprep.subr.mxu0 0.0
    %3877 = vmatpush1.msra.mxu0 0.0
    %3878 = vmatprep.subr.mxu0 0.0
    %3879 = vmatpush1.msra.mxu0 %v3846
    %3880 = vmatprep.subr.mxu0 0.0
    %3881 = vmatpush2.msra.mxu0 0.0
    %3882 = vmatprep.subr.mxu0 0.0
    %3883 = vmatpush2.msra.mxu0 0.0
    %3884 = vmatprep.subr.mxu0 0.0
    %3885 = vmatpush2.msra.mxu0 0.0
    %3886 = vmatprep.subr.mxu0 0.0
    %3887 = vmatpush2.msra.mxu0 0.0
    %3888 = vmatprep.subr.mxu0 0.0
    %3889 = vmatpush2.msra.mxu0 0.0
    %3890 = vmatprep.subr.mxu0 0.0
    %3891 = vmatpush2.msra.mxu0 0.0
    %3892 = vmatprep.subr.mxu0 0.0
    %3893 = vmatpush2.msra.mxu0 0.0
    %3894 = vmatprep.subr.mxu0 0.0
    %3895 = vmatpush2.msra.mxu0 0.0
    %3896 = vmatprep.subr.mxu0 0.0
    %3897 = vmatpush2.msra.mxu0 0.0
    %3898 = vmatprep.subr.mxu0 0.0
    %3899 = vmatpush2.msra.mxu0 0.0
    %3900 = vmatprep.subr.mxu0 0.0
    %3901 = vmatpush2.msra.mxu0 0.0
    %3902 = vmatprep.subr.mxu0 0.0
    %3903 = vmatpush2.msra.mxu0 0.0
    %3904 = vmatprep.subr.mxu0 0.0
    %3905 = vmatpush2.msra.mxu0 0.0
    %3906 = vmatprep.subr.mxu0 0.0
    %3907 = vmatpush2.msra.mxu0 0.0
    %3908 = vmatprep.subr.mxu0 0.0
    %3909 = vmatpush2.msra.mxu0 0.0
    %3910 = vmatprep.subr.mxu0 0.0
    %3911 = vmatpush2.msra.mxu0 0.0
    %3912 = vmatprep.mubr.f32.mxu0 0.0
    %3913 = vmatmul.mubr.f32.gmra.mxu0 %v396
    %v3914 = vpop.f32.mrf.mxu0
    %v3915 = vadd.f32 0.0, %v3914
    %v3916 = vpop.f32.mrf.mxu0
    %3917 = vmatprep.mubr.f32.mxu0 0.0
    %3918 = vmatmul.mubr.f32.gmra.mxu0 %v399
    %v3919 = vpop.f32.mrf.mxu0
    %v3920 = vadd.f32 0.0, %v3919
    %v3921 = vpop.f32.mrf.mxu0
    %3922 = vdwg.mxu0
    %v3924 = vsel %vm401, %v3838, 0
    %3926 = vmatprep.subr.mxu0 0.0
    %3927 = vmatpush1.msra.mxu0 0.0
    %3928 = vmatprep.subr.mxu0 0.0
    %3929 = vmatpush1.msra.mxu0 0.0
    %3930 = vmatprep.subr.mxu0 0.0
    %3931 = vmatpush1.msra.mxu0 0.0
    %3932 = vmatprep.subr.mxu0 0.0
    %3933 = vmatpush1.msra.mxu0 0.0
    %3934 = vmatprep.subr.mxu0 0.0
    %3935 = vmatpush1.msra.mxu0 0.0
    %3936 = vmatprep.subr.mxu0 0.0
    %3937 = vmatpush1.msra.mxu0 0.0
    %3938 = vmatprep.subr.mxu0 0.0
    %3939 = vmatpush1.msra.mxu0 0.0
    %3940 = vmatprep.subr.mxu0 0.0
    %3941 = vmatpush1.msra.mxu0 0.0
    %3942 = vmatprep.subr.mxu0 0.0
    %3943 = vmatpush1.msra.mxu0 0.0
    %3944 = vmatprep.subr.mxu0 0.0
    %3945 = vmatpush1.msra.mxu0 0.0
    %3946 = vmatprep.subr.mxu0 0.0
    %3947 = vmatpush1.msra.mxu0 0.0
    %3948 = vmatprep.subr.mxu0 0.0
    %3949 = vmatpush1.msra.mxu0 0.0
    %3950 = vmatprep.subr.mxu0 0.0
    %3951 = vmatpush1.msra.mxu0 0.0
    %3952 = vmatprep.subr.mxu0 0.0
    %3953 = vmatpush1.msra.mxu0 0.0
    %3954 = vmatprep.subr.mxu0 0.0
    %3955 = vmatpush1.msra.mxu0 0.0
    %3956 = vmatprep.subr.mxu0 0.0
    %3957 = vmatpush1.msra.mxu0 %v3924
    %3958 = vmatprep.subr.mxu0 0.0
    %3959 = vmatpush2.msra.mxu0 0.0
    %3960 = vmatprep.subr.mxu0 0.0
    %3961 = vmatpush2.msra.mxu0 0.0
    %3962 = vmatprep.subr.mxu0 0.0
    %3963 = vmatpush2.msra.mxu0 0.0
    %3964 = vmatprep.subr.mxu0 0.0
    %3965 = vmatpush2.msra.mxu0 0.0
    %3966 = vmatprep.subr.mxu0 0.0
    %3967 = vmatpush2.msra.mxu0 0.0
    %3968 = vmatprep.subr.mxu0 0.0
    %3969 = vmatpush2.msra.mxu0 0.0
    %3970 = vmatprep.subr.mxu0 0.0
    %3971 = vmatpush2.msra.mxu0 0.0
    %3972 = vmatprep.subr.mxu0 0.0
    %3973 = vmatpush2.msra.mxu0 0.0
    %3974 = vmatprep.subr.mxu0 0.0
    %3975 = vmatpush2.msra.mxu0 0.0
    %3976 = vmatprep.subr.mxu0 0.0
    %3977 = vmatpush2.msra.mxu0 0.0
    %3978 = vmatprep.subr.mxu0 0.0
    %3979 = vmatpush2.msra.mxu0 0.0
    %3980 = vmatprep.subr.mxu0 0.0
    %3981 = vmatpush2.msra.mxu0 0.0
    %3982 = vmatprep.subr.mxu0 0.0
    %3983 = vmatpush2.msra.mxu0 0.0
    %3984 = vmatprep.subr.mxu0 0.0
    %3985 = vmatpush2.msra.mxu0 0.0
    %3986 = vmatprep.subr.mxu0 0.0
    %3987 = vmatpush2.msra.mxu0 0.0
    %3988 = vmatprep.subr.mxu0 0.0
    %3989 = vmatpush2.msra.mxu0 0.0
    %3990 = vmatprep.mubr.f32.mxu0 0.0
    %3991 = vmatmul.mubr.f32.gmra.mxu0 %v396
    %v3992 = vpop.f32.mrf.mxu0
    %v3993 = vadd.f32 0.0, %v3992
    %v3994 = vpop.f32.mrf.mxu0
    %3995 = vmatprep.mubr.f32.mxu0 0.0
    %3996 = vmatmul.mubr.f32.gmra.mxu0 %v399
    %v3997 = vpop.f32.mrf.mxu0
    %v3998 = vadd.f32 0.0, %v3997
    %v3999 = vpop.f32.mrf.mxu0
    %4000 = vdwg.mxu0
    %4002 = vrot.lane.b32.xlu0 %v3842, 96
    %v4003 = vpop.permute.xlu0 %4002
    %v4004 = vsel %vm401, %v4003, 0
    %4006 = vmatprep.subr.mxu0 0.0
    %4007 = vmatpush1.msra.mxu0 0.0
    %4008 = vmatprep.subr.mxu0 0.0
    %4009 = vmatpush1.msra.mxu0 0.0
    %4010 = vmatprep.subr.mxu0 0.0
    %4011 = vmatpush1.msra.mxu0 0.0
    %4012 = vmatprep.subr.mxu0 0.0
    %4013 = vmatpush1.msra.mxu0 0.0
    %4014 = vmatprep.subr.mxu0 0.0
    %4015 = vmatpush1.msra.mxu0 0.0
    %4016 = vmatprep.subr.mxu0 0.0
    %4017 = vmatpush1.msra.mxu0 0.0
    %4018 = vmatprep.subr.mxu0 0.0
    %4019 = vmatpush1.msra.mxu0 0.0
    %4020 = vmatprep.subr.mxu0 0.0
    %4021 = vmatpush1.msra.mxu0 0.0
    %4022 = vmatprep.subr.mxu0 0.0
    %4023 = vmatpush1.msra.mxu0 0.0
    %4024 = vmatprep.subr.mxu0 0.0
    %4025 = vmatpush1.msra.mxu0 0.0
    %4026 = vmatprep.subr.mxu0 0.0
    %4027 = vmatpush1.msra.mxu0 0.0
    %4028 = vmatprep.subr.mxu0 0.0
    %4029 = vmatpush1.msra.mxu0 0.0
    %4030 = vmatprep.subr.mxu0 0.0
    %4031 = vmatpush1.msra.mxu0 0.0
    %4032 = vmatprep.subr.mxu0 0.0
    %4033 = vmatpush1.msra.mxu0 0.0
    %4034 = vmatprep.subr.mxu0 0.0
    %4035 = vmatpush1.msra.mxu0 0.0
    %4036 = vmatprep.subr.mxu0 0.0
    %4037 = vmatpush1.msra.mxu0 %v4004
    %4038 = vmatprep.subr.mxu0 0.0
    %4039 = vmatpush2.msra.mxu0 0.0
    %4040 = vmatprep.subr.mxu0 0.0
    %4041 = vmatpush2.msra.mxu0 0.0
    %4042 = vmatprep.subr.mxu0 0.0
    %4043 = vmatpush2.msra.mxu0 0.0
    %4044 = vmatprep.subr.mxu0 0.0
    %4045 = vmatpush2.msra.mxu0 0.0
    %4046 = vmatprep.subr.mxu0 0.0
    %4047 = vmatpush2.msra.mxu0 0.0
    %4048 = vmatprep.subr.mxu0 0.0
    %4049 = vmatpush2.msra.mxu0 0.0
    %4050 = vmatprep.subr.mxu0 0.0
    %4051 = vmatpush2.msra.mxu0 0.0
    %4052 = vmatprep.subr.mxu0 0.0
    %4053 = vmatpush2.msra.mxu0 0.0
    %4054 = vmatprep.subr.mxu0 0.0
    %4055 = vmatpush2.msra.mxu0 0.0
    %4056 = vmatprep.subr.mxu0 0.0
    %4057 = vmatpush2.msra.mxu0 0.0
    %4058 = vmatprep.subr.mxu0 0.0
    %4059 = vmatpush2.msra.mxu0 0.0
    %4060 = vmatprep.subr.mxu0 0.0
    %4061 = vmatpush2.msra.mxu0 0.0
    %4062 = vmatprep.subr.mxu0 0.0
    %4063 = vmatpush2.msra.mxu0 0.0
    %4064 = vmatprep.subr.mxu0 0.0
    %4065 = vmatpush2.msra.mxu0 0.0
    %4066 = vmatprep.subr.mxu0 0.0
    %4067 = vmatpush2.msra.mxu0 0.0
    %4068 = vmatprep.subr.mxu0 0.0
    %4069 = vmatpush2.msra.mxu0 0.0
    %4070 = vmatprep.mubr.f32.mxu0 0.0
    %4071 = vmatmul.mubr.f32.gmra.mxu0 %v396
    %v4072 = vpop.f32.mrf.mxu0
    %v4073 = vadd.f32 0.0, %v4072
    %v4074 = vpop.f32.mrf.mxu0
    %4075 = vmatprep.mubr.f32.mxu0 0.0
    %4076 = vmatmul.mubr.f32.gmra.mxu0 %v399
    %v4077 = vpop.f32.mrf.mxu0
    %v4078 = vadd.f32 0.0, %v4077
    %v4079 = vpop.f32.mrf.mxu0
    %4080 = vdwg.mxu0
    %4082 = vrot.lane.b32.xlu0 %v3796, 32
    %v4083 = vpop.permute.xlu0 %4082
    %v4085 = vmul.f32 %v3833, %v4083
    %4087 = vrot.lane.b32.xlu0 %v4085, 32
    %v4088 = vpop.permute.xlu0 %4087
    %v4089 = vsel %vm401, %v4088, 0
    %4091 = vmatprep.subr.mxu0 0.0
    %4092 = vmatpush1.msra.mxu0 0.0
    %4093 = vmatprep.subr.mxu0 0.0
    %4094 = vmatpush1.msra.mxu0 0.0
    %4095 = vmatprep.subr.mxu0 0.0
    %4096 = vmatpush1.msra.mxu0 0.0
    %4097 = vmatprep.subr.mxu0 0.0
    %4098 = vmatpush1.msra.mxu0 0.0
    %4099 = vmatprep.subr.mxu0 0.0
    %4100 = vmatpush1.msra.mxu0 0.0
    %4101 = vmatprep.subr.mxu0 0.0
    %4102 = vmatpush1.msra.mxu0 0.0
    %4103 = vmatprep.subr.mxu0 0.0
    %4104 = vmatpush1.msra.mxu0 0.0
    %4105 = vmatprep.subr.mxu0 0.0
    %4106 = vmatpush1.msra.mxu0 0.0
    %4107 = vmatprep.subr.mxu0 0.0
    %4108 = vmatpush1.msra.mxu0 0.0
    %4109 = vmatprep.subr.mxu0 0.0
    %4110 = vmatpush1.msra.mxu0 0.0
    %4111 = vmatprep.subr.mxu0 0.0
    %4112 = vmatpush1.msra.mxu0 0.0
    %4113 = vmatprep.subr.mxu0 0.0
    %4114 = vmatpush1.msra.mxu0 0.0
    %4115 = vmatprep.subr.mxu0 0.0
    %4116 = vmatpush1.msra.mxu0 0.0
    %4117 = vmatprep.subr.mxu0 0.0
    %4118 = vmatpush1.msra.mxu0 0.0
    %4119 = vmatprep.subr.mxu0 0.0
    %4120 = vmatpush1.msra.mxu0 0.0
    %4121 = vmatprep.subr.mxu0 0.0
    %4122 = vmatpush1.msra.mxu0 %v4089
    %4123 = vmatprep.subr.mxu0 0.0
    %4124 = vmatpush2.msra.mxu0 0.0
    %4125 = vmatprep.subr.mxu0 0.0
    %4126 = vmatpush2.msra.mxu0 0.0
    %4127 = vmatprep.subr.mxu0 0.0
    %4128 = vmatpush2.msra.mxu0 0.0
    %4129 = vmatprep.subr.mxu0 0.0
    %4130 = vmatpush2.msra.mxu0 0.0
    %4131 = vmatprep.subr.mxu0 0.0
    %4132 = vmatpush2.msra.mxu0 0.0
    %4133 = vmatprep.subr.mxu0 0.0
    %4134 = vmatpush2.msra.mxu0 0.0
    %4135 = vmatprep.subr.mxu0 0.0
    %4136 = vmatpush2.msra.mxu0 0.0
    %4137 = vmatprep.subr.mxu0 0.0
    %4138 = vmatpush2.msra.mxu0 0.0
    %4139 = vmatprep.subr.mxu0 0.0
    %4140 = vmatpush2.msra.mxu0 0.0
    %4141 = vmatprep.subr.mxu0 0.0
    %4142 = vmatpush2.msra.mxu0 0.0
    %4143 = vmatprep.subr.mxu0 0.0
    %4144 = vmatpush2.msra.mxu0 0.0
    %4145 = vmatprep.subr.mxu0 0.0
    %4146 = vmatpush2.msra.mxu0 0.0
    %4147 = vmatprep.subr.mxu0 0.0
    %4148 = vmatpush2.msra.mxu0 0.0
    %4149 = vmatprep.subr.mxu0 0.0
    %4150 = vmatpush2.msra.mxu0 0.0
    %4151 = vmatprep.subr.mxu0 0.0
    %4152 = vmatpush2.msra.mxu0 0.0
    %4153 = vmatprep.subr.mxu0 0.0
    %4154 = vmatpush2.msra.mxu0 0.0
    %4155 = vmatprep.mubr.f32.mxu0 0.0
    %4156 = vmatmul.mubr.f32.gmra.mxu0 %v396
    %v4157 = vpop.f32.mrf.mxu0
    %v4158 = vadd.f32 0.0, %v4157
    %v4159 = vpop.f32.mrf.mxu0
    %4160 = vmatprep.mubr.f32.mxu0 0.0
    %4161 = vmatmul.mubr.f32.gmra.mxu0 %v399
    %v4162 = vpop.f32.mrf.mxu0
    %v4163 = vadd.f32 0.0, %v4162
    %v4164 = vpop.f32.mrf.mxu0
    %4165 = vdwg.mxu0
    %4166 = vst.msk [vmem:[#allocation2 + $0x8] sm:$0xff] %vm142, %v3614
    %4167 = vst.msk [vmem:[#allocation2 + $0x10] sm:$0xff] %vm142, %v3615
    %v4168 = vld [vmem:[#allocation2 + $0x7] sm:$0xff]
    %v4169 = vld [vmem:[#allocation2 + $0xf] sm:$0xff]
    %v4170 = vld [vmem:[#allocation2 + $0x9] sm:$0xff]
    %v4171 = vld [vmem:[#allocation2 + $0x11] sm:$0xff]
    %v4172 = vmul.f32 %v3915, %v4168
    %v4173 = vmul.f32 %v3920, %v4169
    %v4174 = vmul.f32 %v3993, %v4170
    %v4175 = vmul.f32 %v3998, %v4171
    %v4176 = vadd.f32 %v4172, %v4174
    %v4177 = vadd.f32 %v4173, %v4175
    %v4178 = vmul.f32 %v4073, %v3614
    %v4179 = vmul.f32 %v4078, %v3615
    %v4180 = vadd.f32 %v4176, %v4178
    %v4181 = vadd.f32 %v4177, %v4179
    %v4182 = vmul.f32 %v123, %v4158
    %v4183 = vmul.f32 %v124, %v4163
    %v4184 = vadd.f32 %v4182, %v140
    %v4185 = vadd.f32 %v4183, %v141
    %v4186 = vmul.f32 %v131, %v4180
    %v4187 = vmul.f32 %v132, %v4181
    %v4188 = vadd.f32 %v4184, %v4186
    %v4189 = vadd.f32 %v4185, %v4187
    %4191 = vrot.lane.b32.xlu0 %v3795, 96
    %v4192 = vpop.permute.xlu0 %4191
    %s4194 = scalar_lea.vmem [#allocation9], 12
    %4195 = vst.msk [vmem:[%s4194] sm:$0x3] %vm750, %v4192
    %s4196 = scalar_lea.vmem %s0, 14
    %v4197 = vld [vmem:[%s4196] sm:$0x3]
    %v4199 = vsel %vm142, %v4197, 0
    %4201 = vmatprep.subr.mxu0 0.0
    %4202 = vmatpush1.msra.mxu0 0.0
    %4203 = vmatprep.subr.mxu0 0.0
    %4204 = vmatpush1.msra.mxu0 0.0
    %4205 = vmatprep.subr.mxu0 0.0
    %4206 = vmatpush1.msra.mxu0 0.0
    %4207 = vmatprep.subr.mxu0 0.0
    %4208 = vmatpush1.msra.mxu0 0.0
    %4209 = vmatprep.subr.mxu0 0.0
    %4210 = vmatpush1.msra.mxu0 0.0
    %4211 = vmatprep.subr.mxu0 0.0
    %4212 = vmatpush1.msra.mxu0 0.0
    %4213 = vmatprep.subr.mxu0 0.0
    %4214 = vmatpush1.msra.mxu0 0.0
    %4215 = vmatprep.subr.mxu0 0.0
    %4216 = vmatpush1.msra.mxu0 0.0
    %4217 = vmatprep.subr.mxu0 0.0
    %4218 = vmatpush1.msra.mxu0 0.0
    %4219 = vmatprep.subr.mxu0 0.0
    %4220 = vmatpush1.msra.mxu0 0.0
    %4221 = vmatprep.subr.mxu0 0.0
    %4222 = vmatpush1.msra.mxu0 0.0
    %4223 = vmatprep.subr.mxu0 0.0
    %4224 = vmatpush1.msra.mxu0 0.0
    %4225 = vmatprep.subr.mxu0 0.0
    %4226 = vmatpush1.msra.mxu0 %v81
    %4227 = vmatprep.subr.mxu0 0.0
    %4228 = vmatpush1.msra.mxu0 %v80
    %4229 = vmatprep.subr.mxu0 0.0
    %4230 = vmatpush1.msra.mxu0 %v79
    %4231 = vmatprep.subr.mxu0 0.0
    %4232 = vmatpush1.msra.mxu0 %v78
    %4233 = vmatprep.subr.mxu0 0.0
    %4234 = vmatpush2.msra.mxu0 0.0
    %4235 = vmatprep.subr.mxu0 0.0
    %4236 = vmatpush2.msra.mxu0 0.0
    %4237 = vmatprep.subr.mxu0 0.0
    %4238 = vmatpush2.msra.mxu0 0.0
    %4239 = vmatprep.subr.mxu0 0.0
    %4240 = vmatpush2.msra.mxu0 0.0
    %4241 = vmatprep.subr.mxu0 0.0
    %4242 = vmatpush2.msra.mxu0 0.0
    %4243 = vmatprep.subr.mxu0 0.0
    %4244 = vmatpush2.msra.mxu0 0.0
    %4245 = vmatprep.subr.mxu0 0.0
    %4246 = vmatpush2.msra.mxu0 0.0
    %4247 = vmatprep.subr.mxu0 0.0
    %4248 = vmatpush2.msra.mxu0 0.0
    %4249 = vmatprep.subr.mxu0 0.0
    %4250 = vmatpush2.msra.mxu0 0.0
    %4251 = vmatprep.subr.mxu0 0.0
    %4252 = vmatpush2.msra.mxu0 0.0
    %4253 = vmatprep.subr.mxu0 0.0
    %4254 = vmatpush2.msra.mxu0 0.0
    %4255 = vmatprep.subr.mxu0 0.0
    %4256 = vmatpush2.msra.mxu0 0.0
    %4257 = vmatprep.subr.mxu0 0.0
    %4258 = vmatpush2.msra.mxu0 0.0
    %4259 = vmatprep.subr.mxu0 0.0
    %4260 = vmatpush2.msra.mxu0 0.0
    %4261 = vmatprep.subr.mxu0 0.0
    %4262 = vmatpush2.msra.mxu0 0.0
    %4263 = vmatprep.subr.mxu0 0.0
    %4264 = vmatpush2.msra.mxu0 0.0
    %4265 = vmatprep.mubr.f32.mxu0 0.0
    %4266 = vmatmul.mubr.f32.gmra.mxu0 %v4199
    %v4267 = vpop.f32.mrf.mxu0
    %v4268 = vadd.f32 %v155, %v4267
    %v4269 = vpop.f32.mrf.mxu0
    %4270 = vdwg.mxu0
    %v4271 = vsel %vm142, %v4192, 0
    %4273 = vmatprep.subr.mxu0 0.0
    %4274 = vmatpush1.msra.mxu0 0.0
    %4275 = vmatprep.subr.mxu0 0.0
    %4276 = vmatpush1.msra.mxu0 0.0
    %4277 = vmatprep.subr.mxu0 0.0
    %4278 = vmatpush1.msra.mxu0 0.0
    %4279 = vmatprep.subr.mxu0 0.0
    %4280 = vmatpush1.msra.mxu0 0.0
    %4281 = vmatprep.subr.mxu0 0.0
    %4282 = vmatpush1.msra.mxu0 0.0
    %4283 = vmatprep.subr.mxu0 0.0
    %4284 = vmatpush1.msra.mxu0 0.0
    %4285 = vmatprep.subr.mxu0 0.0
    %4286 = vmatpush1.msra.mxu0 0.0
    %4287 = vmatprep.subr.mxu0 0.0
    %4288 = vmatpush1.msra.mxu0 0.0
    %4289 = vmatprep.subr.mxu0 0.0
    %4290 = vmatpush1.msra.mxu0 0.0
    %4291 = vmatprep.subr.mxu0 0.0
    %4292 = vmatpush1.msra.mxu0 0.0
    %4293 = vmatprep.subr.mxu0 0.0
    %4294 = vmatpush1.msra.mxu0 0.0
    %4295 = vmatprep.subr.mxu0 0.0
    %4296 = vmatpush1.msra.mxu0 0.0
    %4297 = vmatprep.subr.mxu0 %v90
    %4298 = vmatpush1.msra.mxu0 %v89
    %4299 = vmatprep.subr.mxu0 %v88
    %4300 = vmatpush1.msra.mxu0 %v87
    %4301 = vmatprep.subr.mxu0 %v86
    %4302 = vmatpush1.msra.mxu0 %v85
    %4303 = vmatprep.subr.mxu0 %v84
    %4304 = vmatpush1.msra.mxu0 %v83
    %4305 = vmatprep.subr.mxu0 0.0
    %4306 = vmatpush2.msra.mxu0 0.0
    %4307 = vmatprep.subr.mxu0 0.0
    %4308 = vmatpush2.msra.mxu0 0.0
    %4309 = vmatprep.subr.mxu0 0.0
    %4310 = vmatpush2.msra.mxu0 0.0
    %4311 = vmatprep.subr.mxu0 0.0
    %4312 = vmatpush2.msra.mxu0 0.0
    %4313 = vmatprep.subr.mxu0 0.0
    %4314 = vmatpush2.msra.mxu0 0.0
    %4315 = vmatprep.subr.mxu0 0.0
    %4316 = vmatpush2.msra.mxu0 0.0
    %4317 = vmatprep.subr.mxu0 0.0
    %4318 = vmatpush2.msra.mxu0 0.0
    %4319 = vmatprep.subr.mxu0 0.0
    %4320 = vmatpush2.msra.mxu0 0.0
    %4321 = vmatprep.subr.mxu0 0.0
    %4322 = vmatpush2.msra.mxu0 0.0
    %4323 = vmatprep.subr.mxu0 0.0
    %4324 = vmatpush2.msra.mxu0 0.0
    %4325 = vmatprep.subr.mxu0 0.0
    %4326 = vmatpush2.msra.mxu0 0.0
    %4327 = vmatprep.subr.mxu0 0.0
    %4328 = vmatpush2.msra.mxu0 0.0
    %4329 = vmatprep.subr.mxu0 0.0
    %4330 = vmatpush2.msra.mxu0 0.0
    %4331 = vmatprep.subr.mxu0 0.0
    %4332 = vmatpush2.msra.mxu0 0.0
    %4333 = vmatprep.subr.mxu0 0.0
    %4334 = vmatpush2.msra.mxu0 0.0
    %4335 = vmatprep.subr.mxu0 0.0
    %4336 = vmatpush2.msra.mxu0 0.0
    %4337 = vmatprep.mubr.f32.mxu0 0.0
    %4338 = vmatmul.mubr.f32.gmra.mxu0 %v4271
    %v4339 = vpop.f32.mrf.mxu0
    %v4340 = vadd.f32 %v234, %v4339
    %v4341 = vpop.f32.mrf.mxu0
    %v4342 = vadd.f32 %v238, %v4341
    %4343 = vdwg.mxu0
    %v4344 = vadd.f32 %v4268, %v4340
    %v4345 = vsub.f32 0.0, %v4344
    %v4346 = vmul.f32 %v4345, 1.442695
    %v4347 = vpow.pop %v4346
    %v4348 = vadd.f32 %v4347, 1.0
    %v4349 = vrcp.pop %v4348
    %v4350 = vmul.f32 1.0, %v4349
    %4352 = vrot.lane.b32.xlu0 %v4340, 64
    %v4353 = vpop.permute.xlu0 %4352
    %v4355 = vmul.f32 %v4350, %v4353
    %4357 = vrot.lane.b32.xlu0 %v4355, 64
    %v4358 = vpop.permute.xlu0 %4357
    %v4360 = vadd.f32 %v4268, %v4358
    %v4361 = vtanh.pop %v4360
    %v4362 = vsub.f32 1.0, %v4350
    %4364 = vrot.lane.b32.xlu0 %v4361, 96
    %v4365 = vpop.permute.xlu0 %4364
    %v4367 = vmul.f32 %v4362, %v4365
    %v4368 = vmul.f32 %v4350, %v3795
    %v4369 = vadd.f32 %v4367, %v4368
    %v4370 = vtanh.pop %v4342
    %4372 = vrot.lane.b32.xlu0 %v4342, 96
    %v4373 = vpop.permute.xlu0 %4372
    %v4375 = vmax.f32 %v4340, %v4373
    %4376 = vrot.lane.b32.xlu0 %v4342, 64
    %v4377 = vpop.permute.xlu0 %4376
    %v4379 = vmax.f32 %v4375, %v4377
    %v4380 = vsub.f32 %v4340, %v4379
    %v4381 = vmul.f32 %v4380, 1.442695
    %v4382 = vpow.pop %v4381
    %4384 = vrot.lane.b32.xlu0 %v4379, 32
    %v4385 = vpop.permute.xlu0 %4384
    %v4387 = vsub.f32 %v4342, %v4385
    %v4388 = vmul.f32 %v4387, 1.442695
    %v4389 = vpow.pop %v4388
    %4390 = vrot.lane.b32.xlu0 %v4379, 64
    %v4391 = vpop.permute.xlu0 %4390
    %v4393 = vsub.f32 %v4342, %v4391
    %v4394 = vmul.f32 %v4393, 1.442695
    %v4395 = vpow.pop %v4394
    %4397 = vrot.lane.b32.xlu0 %v4389, 96
    %v4398 = vpop.permute.xlu0 %4397
    %v4400 = vadd.f32 %v4382, %v4398
    %4402 = vrot.lane.b32.xlu0 %v4395, 64
    %v4403 = vpop.permute.xlu0 %4402
    %v4405 = vadd.f32 %v4400, %v4403
    %v4406 = vrcp.pop %v4405
    %v4407 = vmul.f32 %v4382, %v4406
    %4409 = vrot.lane.b32.xlu0 %v4406, 32
    %v4410 = vpop.permute.xlu0 %4409
    %v4412 = vmul.f32 %v4389, %v4410
    %4413 = vrot.lane.b32.xlu0 %v4406, 64
    %v4414 = vpop.permute.xlu0 %4413
    %v4416 = vmul.f32 %v4395, %v4414
    %4418 = vrot.lane.b32.xlu0 %v4407, 32
    %v4419 = vpop.permute.xlu0 %4418
    %v4420 = vsel %vm401, %v4419, 0
    %4422 = vmatprep.subr.mxu0 0.0
    %4423 = vmatpush1.msra.mxu0 0.0
    %4424 = vmatprep.subr.mxu0 0.0
    %4425 = vmatpush1.msra.mxu0 0.0
    %4426 = vmatprep.subr.mxu0 0.0
    %4427 = vmatpush1.msra.mxu0 0.0
    %4428 = vmatprep.subr.mxu0 0.0
    %4429 = vmatpush1.msra.mxu0 0.0
    %4430 = vmatprep.subr.mxu0 0.0
    %4431 = vmatpush1.msra.mxu0 0.0
    %4432 = vmatprep.subr.mxu0 0.0
    %4433 = vmatpush1.msra.mxu0 0.0
    %4434 = vmatprep.subr.mxu0 0.0
    %4435 = vmatpush1.msra.mxu0 0.0
    %4436 = vmatprep.subr.mxu0 0.0
    %4437 = vmatpush1.msra.mxu0 0.0
    %4438 = vmatprep.subr.mxu0 0.0
    %4439 = vmatpush1.msra.mxu0 0.0
    %4440 = vmatprep.subr.mxu0 0.0
    %4441 = vmatpush1.msra.mxu0 0.0
    %4442 = vmatprep.subr.mxu0 0.0
    %4443 = vmatpush1.msra.mxu0 0.0
    %4444 = vmatprep.subr.mxu0 0.0
    %4445 = vmatpush1.msra.mxu0 0.0
    %4446 = vmatprep.subr.mxu0 0.0
    %4447 = vmatpush1.msra.mxu0 0.0
    %4448 = vmatprep.subr.mxu0 0.0
    %4449 = vmatpush1.msra.mxu0 0.0
    %4450 = vmatprep.subr.mxu0 0.0
    %4451 = vmatpush1.msra.mxu0 0.0
    %4452 = vmatprep.subr.mxu0 0.0
    %4453 = vmatpush1.msra.mxu0 %v4420
    %4454 = vmatprep.subr.mxu0 0.0
    %4455 = vmatpush2.msra.mxu0 0.0
    %4456 = vmatprep.subr.mxu0 0.0
    %4457 = vmatpush2.msra.mxu0 0.0
    %4458 = vmatprep.subr.mxu0 0.0
    %4459 = vmatpush2.msra.mxu0 0.0
    %4460 = vmatprep.subr.mxu0 0.0
    %4461 = vmatpush2.msra.mxu0 0.0
    %4462 = vmatprep.subr.mxu0 0.0
    %4463 = vmatpush2.msra.mxu0 0.0
    %4464 = vmatprep.subr.mxu0 0.0
    %4465 = vmatpush2.msra.mxu0 0.0
    %4466 = vmatprep.subr.mxu0 0.0
    %4467 = vmatpush2.msra.mxu0 0.0
    %4468 = vmatprep.subr.mxu0 0.0
    %4469 = vmatpush2.msra.mxu0 0.0
    %4470 = vmatprep.subr.mxu0 0.0
    %4471 = vmatpush2.msra.mxu0 0.0
    %4472 = vmatprep.subr.mxu0 0.0
    %4473 = vmatpush2.msra.mxu0 0.0
    %4474 = vmatprep.subr.mxu0 0.0
    %4475 = vmatpush2.msra.mxu0 0.0
    %4476 = vmatprep.subr.mxu0 0.0
    %4477 = vmatpush2.msra.mxu0 0.0
    %4478 = vmatprep.subr.mxu0 0.0
    %4479 = vmatpush2.msra.mxu0 0.0
    %4480 = vmatprep.subr.mxu0 0.0
    %4481 = vmatpush2.msra.mxu0 0.0
    %4482 = vmatprep.subr.mxu0 0.0
    %4483 = vmatpush2.msra.mxu0 0.0
    %4484 = vmatprep.subr.mxu0 0.0
    %4485 = vmatpush2.msra.mxu0 0.0
    %4486 = vmatprep.mubr.f32.mxu0 0.0
    %4487 = vmatmul.mubr.f32.gmra.mxu0 %v396
    %v4488 = vpop.f32.mrf.mxu0
    %v4489 = vadd.f32 0.0, %v4488
    %v4490 = vpop.f32.mrf.mxu0
    %4491 = vmatprep.mubr.f32.mxu0 0.0
    %4492 = vmatmul.mubr.f32.gmra.mxu0 %v399
    %v4493 = vpop.f32.mrf.mxu0
    %v4494 = vadd.f32 0.0, %v4493
    %v4495 = vpop.f32.mrf.mxu0
    %4496 = vdwg.mxu0
    %v4498 = vsel %vm401, %v4412, 0
    %4500 = vmatprep.subr.mxu0 0.0
    %4501 = vmatpush1.msra.mxu0 0.0
    %4502 = vmatprep.subr.mxu0 0.0
    %4503 = vmatpush1.msra.mxu0 0.0
    %4504 = vmatprep.subr.mxu0 0.0
    %4505 = vmatpush1.msra.mxu0 0.0
    %4506 = vmatprep.subr.mxu0 0.0
    %4507 = vmatpush1.msra.mxu0 0.0
    %4508 = vmatprep.subr.mxu0 0.0
    %4509 = vmatpush1.msra.mxu0 0.0
    %4510 = vmatprep.subr.mxu0 0.0
    %4511 = vmatpush1.msra.mxu0 0.0
    %4512 = vmatprep.subr.mxu0 0.0
    %4513 = vmatpush1.msra.mxu0 0.0
    %4514 = vmatprep.subr.mxu0 0.0
    %4515 = vmatpush1.msra.mxu0 0.0
    %4516 = vmatprep.subr.mxu0 0.0
    %4517 = vmatpush1.msra.mxu0 0.0
    %4518 = vmatprep.subr.mxu0 0.0
    %4519 = vmatpush1.msra.mxu0 0.0
    %4520 = vmatprep.subr.mxu0 0.0
    %4521 = vmatpush1.msra.mxu0 0.0
    %4522 = vmatprep.subr.mxu0 0.0
    %4523 = vmatpush1.msra.mxu0 0.0
    %4524 = vmatprep.subr.mxu0 0.0
    %4525 = vmatpush1.msra.mxu0 0.0
    %4526 = vmatprep.subr.mxu0 0.0
    %4527 = vmatpush1.msra.mxu0 0.0
    %4528 = vmatprep.subr.mxu0 0.0
    %4529 = vmatpush1.msra.mxu0 0.0
    %4530 = vmatprep.subr.mxu0 0.0
    %4531 = vmatpush1.msra.mxu0 %v4498
    %4532 = vmatprep.subr.mxu0 0.0
    %4533 = vmatpush2.msra.mxu0 0.0
    %4534 = vmatprep.subr.mxu0 0.0
    %4535 = vmatpush2.msra.mxu0 0.0
    %4536 = vmatprep.subr.mxu0 0.0
    %4537 = vmatpush2.msra.mxu0 0.0
    %4538 = vmatprep.subr.mxu0 0.0
    %4539 = vmatpush2.msra.mxu0 0.0
    %4540 = vmatprep.subr.mxu0 0.0
    %4541 = vmatpush2.msra.mxu0 0.0
    %4542 = vmatprep.subr.mxu0 0.0
    %4543 = vmatpush2.msra.mxu0 0.0
    %4544 = vmatprep.subr.mxu0 0.0
    %4545 = vmatpush2.msra.mxu0 0.0
    %4546 = vmatprep.subr.mxu0 0.0
    %4547 = vmatpush2.msra.mxu0 0.0
    %4548 = vmatprep.subr.mxu0 0.0
    %4549 = vmatpush2.msra.mxu0 0.0
    %4550 = vmatprep.subr.mxu0 0.0
    %4551 = vmatpush2.msra.mxu0 0.0
    %4552 = vmatprep.subr.mxu0 0.0
    %4553 = vmatpush2.msra.mxu0 0.0
    %4554 = vmatprep.subr.mxu0 0.0
    %4555 = vmatpush2.msra.mxu0 0.0
    %4556 = vmatprep.subr.mxu0 0.0
    %4557 = vmatpush2.msra.mxu0 0.0
    %4558 = vmatprep.subr.mxu0 0.0
    %4559 = vmatpush2.msra.mxu0 0.0
    %4560 = vmatprep.subr.mxu0 0.0
    %4561 = vmatpush2.msra.mxu0 0.0
    %4562 = vmatprep.subr.mxu0 0.0
    %4563 = vmatpush2.msra.mxu0 0.0
    %4564 = vmatprep.mubr.f32.mxu0 0.0
    %4565 = vmatmul.mubr.f32.gmra.mxu0 %v396
    %v4566 = vpop.f32.mrf.mxu0
    %v4567 = vadd.f32 0.0, %v4566
    %v4568 = vpop.f32.mrf.mxu0
    %4569 = vmatprep.mubr.f32.mxu0 0.0
    %4570 = vmatmul.mubr.f32.gmra.mxu0 %v399
    %v4571 = vpop.f32.mrf.mxu0
    %v4572 = vadd.f32 0.0, %v4571
    %v4573 = vpop.f32.mrf.mxu0
    %4574 = vdwg.mxu0
    %4576 = vrot.lane.b32.xlu0 %v4416, 96
    %v4577 = vpop.permute.xlu0 %4576
    %v4578 = vsel %vm401, %v4577, 0
    %4580 = vmatprep.subr.mxu0 0.0
    %4581 = vmatpush1.msra.mxu0 0.0
    %4582 = vmatprep.subr.mxu0 0.0
    %4583 = vmatpush1.msra.mxu0 0.0
    %4584 = vmatprep.subr.mxu0 0.0
    %4585 = vmatpush1.msra.mxu0 0.0
    %4586 = vmatprep.subr.mxu0 0.0
    %4587 = vmatpush1.msra.mxu0 0.0
    %4588 = vmatprep.subr.mxu0 0.0
    %4589 = vmatpush1.msra.mxu0 0.0
    %4590 = vmatprep.subr.mxu0 0.0
    %4591 = vmatpush1.msra.mxu0 0.0
    %4592 = vmatprep.subr.mxu0 0.0
    %4593 = vmatpush1.msra.mxu0 0.0
    %4594 = vmatprep.subr.mxu0 0.0
    %4595 = vmatpush1.msra.mxu0 0.0
    %4596 = vmatprep.subr.mxu0 0.0
    %4597 = vmatpush1.msra.mxu0 0.0
    %4598 = vmatprep.subr.mxu0 0.0
    %4599 = vmatpush1.msra.mxu0 0.0
    %4600 = vmatprep.subr.mxu0 0.0
    %4601 = vmatpush1.msra.mxu0 0.0
    %4602 = vmatprep.subr.mxu0 0.0
    %4603 = vmatpush1.msra.mxu0 0.0
    %4604 = vmatprep.subr.mxu0 0.0
    %4605 = vmatpush1.msra.mxu0 0.0
    %4606 = vmatprep.subr.mxu0 0.0
    %4607 = vmatpush1.msra.mxu0 0.0
    %4608 = vmatprep.subr.mxu0 0.0
    %4609 = vmatpush1.msra.mxu0 0.0
    %4610 = vmatprep.subr.mxu0 0.0
    %4611 = vmatpush1.msra.mxu0 %v4578
    %4612 = vmatprep.subr.mxu0 0.0
    %4613 = vmatpush2.msra.mxu0 0.0
    %4614 = vmatprep.subr.mxu0 0.0
    %4615 = vmatpush2.msra.mxu0 0.0
    %4616 = vmatprep.subr.mxu0 0.0
    %4617 = vmatpush2.msra.mxu0 0.0
    %4618 = vmatprep.subr.mxu0 0.0
    %4619 = vmatpush2.msra.mxu0 0.0
    %4620 = vmatprep.subr.mxu0 0.0
    %4621 = vmatpush2.msra.mxu0 0.0
    %4622 = vmatprep.subr.mxu0 0.0
    %4623 = vmatpush2.msra.mxu0 0.0
    %4624 = vmatprep.subr.mxu0 0.0
    %4625 = vmatpush2.msra.mxu0 0.0
    %4626 = vmatprep.subr.mxu0 0.0
    %4627 = vmatpush2.msra.mxu0 0.0
    %4628 = vmatprep.subr.mxu0 0.0
    %4629 = vmatpush2.msra.mxu0 0.0
    %4630 = vmatprep.subr.mxu0 0.0
    %4631 = vmatpush2.msra.mxu0 0.0
    %4632 = vmatprep.subr.mxu0 0.0
    %4633 = vmatpush2.msra.mxu0 0.0
    %4634 = vmatprep.subr.mxu0 0.0
    %4635 = vmatpush2.msra.mxu0 0.0
    %4636 = vmatprep.subr.mxu0 0.0
    %4637 = vmatpush2.msra.mxu0 0.0
    %4638 = vmatprep.subr.mxu0 0.0
    %4639 = vmatpush2.msra.mxu0 0.0
    %4640 = vmatprep.subr.mxu0 0.0
    %4641 = vmatpush2.msra.mxu0 0.0
    %4642 = vmatprep.subr.mxu0 0.0
    %4643 = vmatpush2.msra.mxu0 0.0
    %4644 = vmatprep.mubr.f32.mxu0 0.0
    %4645 = vmatmul.mubr.f32.gmra.mxu0 %v396
    %v4646 = vpop.f32.mrf.mxu0
    %v4647 = vadd.f32 0.0, %v4646
    %v4648 = vpop.f32.mrf.mxu0
    %4649 = vmatprep.mubr.f32.mxu0 0.0
    %4650 = vmatmul.mubr.f32.gmra.mxu0 %v399
    %v4651 = vpop.f32.mrf.mxu0
    %v4652 = vadd.f32 0.0, %v4651
    %v4653 = vpop.f32.mrf.mxu0
    %4654 = vdwg.mxu0
    %4656 = vrot.lane.b32.xlu0 %v4370, 32
    %v4657 = vpop.permute.xlu0 %4656
    %v4659 = vmul.f32 %v4407, %v4657
    %4661 = vrot.lane.b32.xlu0 %v4659, 32
    %v4662 = vpop.permute.xlu0 %4661
    %v4663 = vsel %vm401, %v4662, 0
    %4665 = vmatprep.subr.mxu0 0.0
    %4666 = vmatpush1.msra.mxu0 0.0
    %4667 = vmatprep.subr.mxu0 0.0
    %4668 = vmatpush1.msra.mxu0 0.0
    %4669 = vmatprep.subr.mxu0 0.0
    %4670 = vmatpush1.msra.mxu0 0.0
    %4671 = vmatprep.subr.mxu0 0.0
    %4672 = vmatpush1.msra.mxu0 0.0
    %4673 = vmatprep.subr.mxu0 0.0
    %4674 = vmatpush1.msra.mxu0 0.0
    %4675 = vmatprep.subr.mxu0 0.0
    %4676 = vmatpush1.msra.mxu0 0.0
    %4677 = vmatprep.subr.mxu0 0.0
    %4678 = vmatpush1.msra.mxu0 0.0
    %4679 = vmatprep.subr.mxu0 0.0
    %4680 = vmatpush1.msra.mxu0 0.0
    %4681 = vmatprep.subr.mxu0 0.0
    %4682 = vmatpush1.msra.mxu0 0.0
    %4683 = vmatprep.subr.mxu0 0.0
    %4684 = vmatpush1.msra.mxu0 0.0
    %4685 = vmatprep.subr.mxu0 0.0
    %4686 = vmatpush1.msra.mxu0 0.0
    %4687 = vmatprep.subr.mxu0 0.0
    %4688 = vmatpush1.msra.mxu0 0.0
    %4689 = vmatprep.subr.mxu0 0.0
    %4690 = vmatpush1.msra.mxu0 0.0
    %4691 = vmatprep.subr.mxu0 0.0
    %4692 = vmatpush1.msra.mxu0 0.0
    %4693 = vmatprep.subr.mxu0 0.0
    %4694 = vmatpush1.msra.mxu0 0.0
    %4695 = vmatprep.subr.mxu0 0.0
    %4696 = vmatpush1.msra.mxu0 %v4663
    %4697 = vmatprep.subr.mxu0 0.0
    %4698 = vmatpush2.msra.mxu0 0.0
    %4699 = vmatprep.subr.mxu0 0.0
    %4700 = vmatpush2.msra.mxu0 0.0
    %4701 = vmatprep.subr.mxu0 0.0
    %4702 = vmatpush2.msra.mxu0 0.0
    %4703 = vmatprep.subr.mxu0 0.0
    %4704 = vmatpush2.msra.mxu0 0.0
    %4705 = vmatprep.subr.mxu0 0.0
    %4706 = vmatpush2.msra.mxu0 0.0
    %4707 = vmatprep.subr.mxu0 0.0
    %4708 = vmatpush2.msra.mxu0 0.0
    %4709 = vmatprep.subr.mxu0 0.0
    %4710 = vmatpush2.msra.mxu0 0.0
    %4711 = vmatprep.subr.mxu0 0.0
    %4712 = vmatpush2.msra.mxu0 0.0
    %4713 = vmatprep.subr.mxu0 0.0
    %4714 = vmatpush2.msra.mxu0 0.0
    %4715 = vmatprep.subr.mxu0 0.0
    %4716 = vmatpush2.msra.mxu0 0.0
    %4717 = vmatprep.subr.mxu0 0.0
    %4718 = vmatpush2.msra.mxu0 0.0
    %4719 = vmatprep.subr.mxu0 0.0
    %4720 = vmatpush2.msra.mxu0 0.0
    %4721 = vmatprep.subr.mxu0 0.0
    %4722 = vmatpush2.msra.mxu0 0.0
    %4723 = vmatprep.subr.mxu0 0.0
    %4724 = vmatpush2.msra.mxu0 0.0
    %4725 = vmatprep.subr.mxu0 0.0
    %4726 = vmatpush2.msra.mxu0 0.0
    %4727 = vmatprep.subr.mxu0 0.0
    %4728 = vmatpush2.msra.mxu0 0.0
    %4729 = vmatprep.mubr.f32.mxu0 0.0
    %4730 = vmatmul.mubr.f32.gmra.mxu0 %v396
    %v4731 = vpop.f32.mrf.mxu0
    %v4732 = vadd.f32 0.0, %v4731
    %v4733 = vpop.f32.mrf.mxu0
    %4734 = vmatprep.mubr.f32.mxu0 0.0
    %4735 = vmatmul.mubr.f32.gmra.mxu0 %v399
    %v4736 = vpop.f32.mrf.mxu0
    %v4737 = vadd.f32 0.0, %v4736
    %v4738 = vpop.f32.mrf.mxu0
    %4739 = vdwg.mxu0
    %4740 = vst.msk [vmem:[#allocation2 + $0x8] sm:$0xff] %vm142, %v4188
    %4741 = vst.msk [vmem:[#allocation2 + $0x10] sm:$0xff] %vm142, %v4189
    %v4742 = vld [vmem:[#allocation2 + $0x7] sm:$0xff]
    %v4743 = vld [vmem:[#allocation2 + $0xf] sm:$0xff]
    %v4744 = vld [vmem:[#allocation2 + $0x9] sm:$0xff]
    %v4745 = vld [vmem:[#allocation2 + $0x11] sm:$0xff]
    %v4746 = vmul.f32 %v4489, %v4742
    %v4747 = vmul.f32 %v4494, %v4743
    %v4748 = vmul.f32 %v4567, %v4744
    %v4749 = vmul.f32 %v4572, %v4745
    %v4750 = vadd.f32 %v4746, %v4748
    %v4751 = vadd.f32 %v4747, %v4749
    %v4752 = vmul.f32 %v4647, %v4188
    %v4753 = vmul.f32 %v4652, %v4189
    %v4754 = vadd.f32 %v4750, %v4752
    %v4755 = vadd.f32 %v4751, %v4753
    %v4756 = vmul.f32 %v123, %v4732
    %v4757 = vmul.f32 %v124, %v4737
    %v4758 = vadd.f32 %v4756, %v140
    %v4759 = vadd.f32 %v4757, %v141
    %v4760 = vmul.f32 %v131, %v4754
    %v4761 = vmul.f32 %v132, %v4755
    %v4762 = vadd.f32 %v4758, %v4760
    %v4763 = vadd.f32 %v4759, %v4761
    %4765 = vrot.lane.b32.xlu0 %v4369, 96
    %v4766 = vpop.permute.xlu0 %4765
    %s4768 = scalar_lea.vmem [#allocation9], 14
    %4769 = vst.msk [vmem:[%s4768] sm:$0x3] %vm750, %v4766
    %4770 = vst.msk [vmem:[#allocation10] sm:$0x3] %vm750, %v4766
    %4771 = vst.msk [vmem:[#allocation12] sm:$0xff] %vm142, %v4762
    %4772 = vst.msk [vmem:[#allocation12 + $0x8] sm:$0xff] %vm142, %v4763
    // Predicated region
    $region50: #{tpu_custom_call.1} parent=1 // pred_check
      _
    $region51: #{tpu_custom_call.1} parent=1 // pred_check_branch
      %4774 = sbr.rel (0) target = $region53
    $region52: #{tpu_custom_call.1} parent=1 // pred_region
      %s4776 = ssub.s32 256, 256
      %4777 = vsyncadd [#allocation5], %s4776
      %s4778 = sshll.u32 [#allocation9], 4
      %s4779 = int_to_ptr.vmem [resolvable:$true] %s4778
      %4784 = dma.vmem_to_hbm [thread:$0]  %s4779, 256, %s9, [#allocation5], 32, 32, 2
    $region53: #{tpu_custom_call.1} parent=1 // pred_fallthru
      _
    // Predicated region
    $region54: #{tpu_custom_call.1} parent=1 // pred_check
      _
    $region55: #{tpu_custom_call.1} parent=1 // pred_check_branch
      %4786 = sbr.rel (0) target = $region57
    $region56: #{tpu_custom_call.1} parent=1 // pred_region
      %s4788 = ssub.s32 32, 32
      %4789 = vsyncadd [#allocation11], %s4788
      %s4791 = sshll.u32 [#allocation10], 4
      %s4792 = int_to_ptr.vmem [resolvable:$true] %s4791
      %4794 = dma.vmem_to_hbm [thread:$0]  %s4792, 32, %s10, [#allocation11]
    $region57: #{tpu_custom_call.1} parent=1 // pred_fallthru
      _
    // Predicated region
    $region58: #{tpu_custom_call.1} parent=1 // pred_check
      _
    $region59: #{tpu_custom_call.1} parent=1 // pred_check_branch
      %4796 = sbr.rel (0) target = $region61
    $region60: #{tpu_custom_call.1} parent=1 // pred_region
      %s4798 = ssub.s32 256, 256
      %4799 = vsyncadd [#allocation11], %s4798
      %s4800 = sshll.u32 [#allocation12], 4
      %s4801 = int_to_ptr.vmem [resolvable:$true] %s4800
      %4806 = dma.vmem_to_hbm [thread:$0]  %s4801, 256, %s11, [#allocation11], 128, 128, 8
    $region61: #{tpu_custom_call.1} parent=1 // pred_fallthru
      _
    // Predicated region
    $region62: #{tpu_custom_call.1} parent=1 // pred_check
      _
    $region63: #{tpu_custom_call.1} parent=1 // pred_check_branch
      %4808 = sbr.rel (0) target = $region65
    $region64: #{tpu_custom_call.1} parent=1 // pred_region
      %4809 = dma.done [#allocation5], 256
    $region65: #{tpu_custom_call.1} parent=1 // pred_fallthru
      _
    // Predicated region
    $region66: #{tpu_custom_call.1} parent=1 // pred_check
      _
    $region67: #{tpu_custom_call.1} parent=1 // pred_check_branch
      %4811 = sbr.rel (0) target = $region69
    $region68: #{tpu_custom_call.1} parent=1 // pred_region
      %4812 = dma.done [#allocation11], 32
    $region69: #{tpu_custom_call.1} parent=1 // pred_fallthru
      _
    // Predicated region
    $region70: #{tpu_custom_call.1} parent=1 // pred_check
      _
    $region71: #{tpu_custom_call.1} parent=1 // pred_check_branch
      %4814 = sbr.rel (0) target = $region73
    $region72: #{tpu_custom_call.1} parent=1 // pred_region
      %4815 = dma.done [#allocation11], 256
    $region73: #{tpu_custom_call.1} parent=1 // pred_fallthru
      _
    %4816 = vsyncpa [#allocation4], 1
    %4817 = vsyncpa [#allocation7], 1
    %4818 = vsyncpa [#allocation5], 1
    %4819 = vsyncpa [#allocation11], 1

</llo_original>
